<compile_context>
chip_gen: v7x
topology: tpu7x:2x2x1
jax: 0.10.0
libtpu: 0.0.40
codegen_flags: <defaults>
</compile_context>

<pallas_src>
import functools

import jax
import jax.numpy as jnp
from jax.experimental import pallas as pl
from jax.experimental.pallas import tpu as pltpu


def _cdiv(a, b):
    return -(-a // b)


def _round_up(x, m):
    return _cdiv(x, m) * m


def _param_offsets(h_dim, z_dim, hidden_dim, n_hidden, pack):
    """Row offsets of each segment in the packed [R, pack*hidden_dim] buffer.

    Every segment starts at a multiple of 8 rows (sublane-aligned) so the
    in-kernel static slices never straddle (8, 128) tile boundaries.
    """
    r8 = lambda v: _round_up(v, 8)
    wp = pack * hidden_dim
    layer_stride = r8(wp)
    offs = {"w1h": 0}
    offs["w1z"] = r8(pack * h_dim)
    offs["b1"] = offs["w1z"] + r8(pack * z_dim)
    offs["wh"] = offs["b1"] + 8
    offs["wh_stride"] = layer_stride
    offs["bh"] = offs["wh"] + n_hidden * layer_stride
    offs["wo"] = offs["bh"] + 8 * n_hidden
    offs["bo"] = offs["wo"] + layer_stride
    offs["total"] = offs["bo"] + 8
    return offs


def pack_params(params_tree, *, h_dim, pack, dtype=jnp.float32):
    """Pack all MLP parameters into one [R, pack*hidden] buffer (single DMA).

    Weights are replicated block-diagonally `pack` times so `pack` batch rows
    share one lane-dense vreg row (full lane / MXU utilization when
    hidden_dim < 128).  Use dtype=jnp.bfloat16 on v5e/v6e/v7x for the native
    bf16 MXU path (the kernel keeps weights in this dtype, accumulates in f32),
    but note the tight f32 numerics check in __main__ then needs loosening.
    """
    w1, b1, wh, bh, wo, bo = params_tree
    hidden = w1.shape[1]
    z_dim = w1.shape[0] - h_dim
    n_hidden = wh.shape[0]
    wp = pack * hidden
    offs = _param_offsets(h_dim, z_dim, hidden, n_hidden, pack)
    eye = jnp.eye(pack, dtype=jnp.float32)

    buf = jnp.zeros((offs["total"], wp), jnp.float32)
    # First Linear, split into h / z blocks (removes wrapper-side concat).
    buf = buf.at[offs["w1h"]:offs["w1h"] + pack * h_dim, :].set(
        jnp.kron(eye, w1[:h_dim].astype(jnp.float32)))
    buf = buf.at[offs["w1z"]:offs["w1z"] + pack * z_dim, :].set(
        jnp.kron(eye, w1[h_dim:].astype(jnp.float32)))
    buf = buf.at[offs["b1"]:offs["b1"] + 1, :].set(
        jnp.tile(b1.reshape(1, hidden).astype(jnp.float32), (1, pack)))
    # Hidden stack.
    for i in range(n_hidden):
        r = offs["wh"] + i * offs["wh_stride"]
        buf = buf.at[r:r + wp, :].set(jnp.kron(eye, wh[i].astype(jnp.float32)))
        rb = offs["bh"] + 8 * i
        buf = buf.at[rb:rb + 1, :].set(
            jnp.tile(bh[i].reshape(1, hidden).astype(jnp.float32), (1, pack)))
    # Output projection: block-diagonal [wp, pack], zero-padded to wp columns.
    buf = buf.at[offs["wo"]:offs["wo"] + wp, :pack].set(
        jnp.kron(eye, wo.reshape(hidden, 1).astype(jnp.float32)))
    buf = buf.at[offs["bo"]:offs["bo"] + 1, :].set(
        jnp.broadcast_to(bo.reshape(1, 1).astype(jnp.float32), (1, wp)))
    return buf.astype(dtype)


def _mlp_kernel(h_ref, z_ref, p_ref, out_ref, *, pack, h_dim, z_dim,
                hidden_dim, n_hidden, offs):
    """One batch tile of the lane-packed FeedForwardNet.

    h_ref  : [TB, pack*h_dim]    pack batch rows packed along lanes per row
    z_ref  : [TB, pack*z_dim]
    p_ref  : [R, pack*hidden]    packed / block-diagonal params (VMEM-resident)
    out_ref: [TB, pack]          mu_reward for the pack members of each group
    """
    f32 = jnp.float32
    wdt = p_ref.dtype               # bf16 packing -> native bf16 MXU path
    wp = pack * hidden_dim

    # ---- to_hidden: split first Linear (no wrapper-side concat) + ReLU ------
    w1h = p_ref[offs["w1h"]:offs["w1h"] + pack * h_dim, :]
    w1z = p_ref[offs["w1z"]:offs["w1z"] + pack * z_dim, :]
    b1 = p_ref[offs["b1"]:offs["b1"] + 1, :].astype(f32)
    h = (jnp.dot(h_ref[...].astype(wdt), w1h, preferred_element_type=f32) +
         jnp.dot(z_ref[...].astype(wdt), w1z, preferred_element_type=f32))
    h = jnp.maximum(h + b1, 0.0)

    # ---- hidden stack: (n_ff_layers - 1) x (Linear + ReLU) ------------------
    for i in range(n_hidden):
        r = offs["wh"] + i * offs["wh_stride"]
        wi = p_ref[r:r + wp, :]
        bi = p_ref[offs["bh"] + 8 * i:offs["bh"] + 8 * i + 1, :].astype(f32)
        h = jnp.maximum(
            jnp.dot(h.astype(wdt), wi, preferred_element_type=f32) + bi, 0.0)

    # ---- from_hidden: block-diagonal [wp, pack] projection -------------------
    wo = p_ref[offs["wo"]:offs["wo"] + wp, :]
    bo = p_ref[offs["bo"]:offs["bo"] + 1, :].astype(f32)
    mu = jnp.dot(h.astype(wdt), wo, preferred_element_type=f32)[:, :pack]
    out_ref[...] = (mu + bo[:, :pack]).astype(out_ref.dtype)


def reward_model_forward(h_state, z_state, packed_params, *, h_dim, z_dim,
                         hidden_dim, n_hidden, pack, block_rows=2048):
    """Returns mu_reward (= loc of Independent(Normal(mu, 1.0), 1))."""
    B = h_state.shape[0]
    wp = pack * hidden_dim
    n_rows = packed_params.shape[0]
    offs = _param_offsets(h_dim, z_dim, hidden_dim, n_hidden, pack)
    assert n_rows == offs["total"], "packed_params built with different dims/pack"

    # --- batch tiling in packed-row space -------------------------------------
    g_raw = _cdiv(B, pack)                       # packed rows before padding
    # At large batch force >= 2 grid steps so v7x megacore uses both TCs.
    min_steps = 2 if g_raw >= 128 else 1
    tb = max(8, min(block_rows, _round_up(_cdiv(g_raw, min_steps), 8)))
    g = _round_up(g_raw, tb)
    pad = g * pack - B
    if pad:
        h_state = jnp.pad(h_state, ((0, pad), (0, 0)))
        z_state = jnp.pad(z_state, ((0, pad), (0, 0)))
    # Row-major lane-packing reshape (free in HBM): pack rows share a vreg row.
    hp = h_state.reshape(g, pack * h_dim)
    zp = z_state.reshape(g, pack * z_dim)

    kernel = functools.partial(_mlp_kernel, pack=pack, h_dim=h_dim, z_dim=z_dim,
                               hidden_dim=hidden_dim, n_hidden=n_hidden,
                               offs=offs)

    # Double-buffered activation tiles + resident weights; only raise the scoped
    # VMEM limit if a huge tile would exceed the v5e 16 MiB default.
    in_itemsize = jnp.dtype(h_state.dtype).itemsize
    w_itemsize = jnp.dtype(packed_params.dtype).itemsize
    est = (2 * tb * (pack * h_dim + pack * z_dim) * in_itemsize
           + n_rows * wp * w_itemsize + 2 * tb * pack * 4)
    vmem_limit = None if est < (12 << 20) else int(min(2 * est, 100 << 20))

    mu = pl.pallas_call(
        kernel,
        out_shape=jax.ShapeDtypeStruct((g, pack), jnp.float32),
        grid_spec=pltpu.PrefetchScalarGridSpec(
            num_scalar_prefetch=0,
            grid=(g // tb,),
            in_specs=[
                pl.BlockSpec((tb, pack * h_dim), lambda i: (i, 0)),
                pl.BlockSpec((tb, pack * z_dim), lambda i: (i, 0)),
                # Same block for every batch tile -> weights are DMA'd once and
                # stay VMEM-resident across the grid.
                pl.BlockSpec((n_rows, wp), lambda i: (0, 0)),
            ],
            out_specs=pl.BlockSpec((tb, pack), lambda i: (i, 0)),
        ),
        compiler_params=pltpu.CompilerParams(
            dimension_semantics=("parallel",),
            vmem_limit_bytes=vmem_limit),
    )(hp, zp, packed_params)
    # Undo the lane-packing: (g, pack) row-major == (g*pack, 1) original rows.
    return mu.reshape(g * pack, 1)[:B]


def init_params(key, h_dim, z_dim, n_ff_layers):
    """Deterministic PyTorch-Linear-style init (uniform +-1/sqrt(fan_in)).

    Weights are stored [in_features, out_features] (PyTorch W transposed) so
    the kernel does plain x @ W + b.
    """
    input_dim = h_dim + z_dim
    n_hidden = n_ff_layers - 1
    keys = jax.random.split(key, 6)

    def lin(k, fan_in, shape):
        bound = 1.0 / jnp.sqrt(jnp.float32(fan_in))
        return jax.random.uniform(k, shape, jnp.float32, -bound, bound)

    w1 = lin(keys[0], input_dim, (input_dim, h_dim))
    b1 = lin(keys[1], input_dim, (1, h_dim))
    wh = lin(keys[2], h_dim, (n_hidden, h_dim, h_dim))
    bh = lin(keys[3], h_dim, (n_hidden, 1, h_dim))
    wo = lin(keys[4], h_dim, (h_dim, 1))
    bo = lin(keys[5], h_dim, (1, 1))
    return (w1, b1, wh, bh, wo, bo)


def _reference_forward(h_state, z_state, params_tree):
    w1, b1, wh, bh, wo, bo = params_tree
    x = jnp.concatenate([h_state, z_state], axis=-1)
    h = jnp.maximum(x @ w1 + b1, 0.0)
    for i in range(wh.shape[0]):
        h = jnp.maximum(h @ wh[i] + bh[i], 0.0)
    return h @ wo + bo


if __name__ == "__main__":
    # High-precision matmuls so the pure-JAX reference and the kernel agree.
    jax.config.update("jax_default_matmul_precision", "highest")

    # Small shapes implied by the module: h_dim, z_dim features, small batch.
    B, H_DIM, Z_DIM, N_FF_LAYERS = 8, 32, 16, 3
    N_HIDDEN = N_FF_LAYERS - 1
    PACK = max(1, 128 // H_DIM)           # 4 x 32 = 128 lanes -> full vreg width

    key = jax.random.PRNGKey(0)
    k_h, k_z, k_p = jax.random.split(key, 3)

    h_state = jax.random.normal(k_h, (B, H_DIM), jnp.float32)
    z_state = jax.random.normal(k_z, (B, Z_DIM), jnp.float32)
    params = init_params(k_p, H_DIM, Z_DIM, N_FF_LAYERS)

    # One packed buffer -> one weight DMA (dtype=jnp.bfloat16 for native MXU).
    packed = pack_params(params, h_dim=H_DIM, pack=PACK, dtype=jnp.float32)

    mu_reward = reward_model_forward(
        h_state, z_state, packed, h_dim=H_DIM, z_dim=Z_DIM,
        hidden_dim=H_DIM, n_hidden=N_HIDDEN, pack=PACK)
    jax.block_until_ready(mu_reward)

    # Correctness check against the pure-JAX reference.
    ref = _reference_forward(h_state, z_state, params)
    assert mu_reward.shape == (B, 1)
    err = float(jnp.max(jnp.abs(mu_reward - ref)))
    assert err < 1e-4, f"max abs error {err}"

    # dist_reward = Independent(Normal(loc=mu_reward, scale=1.0), 1)
    # -> fully determined by mu_reward; no additional tensor compute needed.
    print("KERNEL_OK")
</pallas_src>

<mosaic_0001>
module attributes {stable_mosaic.version = 11 : i64} {
  func.func @_mlp_kernel(%arg0: i32, %arg1: memref<8x128xf32, #tpu.memory_space<vmem>>, %arg2: memref<8x64xf32, #tpu.memory_space<vmem>>, %arg3: memref<608x128xf32, #tpu.memory_space<vmem>>, %arg4: memref<8x4xf32, #tpu.memory_space<vmem>>) attributes {dimension_semantics = [#tpu.dimension_semantics<parallel>], iteration_bounds = array<i64: 1>, scalar_prefetch = 0 : i64, scratch_operands = 0 : i64, tpu.core_type = #tpu.core_type<tc>, window_params = [{transform_indices = @transform_0, window_bounds = array<i64: 8, 128>}, {transform_indices = @transform_1, window_bounds = array<i64: 8, 64>}, {pipeline_mode = #tpu.pipeline_mode<synchronous>, transform_indices = @transform_2, window_bounds = array<i64: 608, 128>}, {transform_indices = @transform_3, window_bounds = array<i64: 8, 4>}]} {
    %c0 = arith.constant 0 : index
    %c0_0 = arith.constant 0 : index
    %0 = vector.load %arg3[%c0, %c0_0] : memref<608x128xf32, #tpu.memory_space<vmem>>, vector<128x128xf32>
    %c128 = arith.constant 128 : index
    %c0_1 = arith.constant 0 : index
    %1 = vector.load %arg3[%c128, %c0_1] : memref<608x128xf32, #tpu.memory_space<vmem>>, vector<64x128xf32>
    %c192 = arith.constant 192 : index
    %c0_2 = arith.constant 0 : index
    %2 = vector.load %arg3[%c192, %c0_2] : memref<608x128xf32, #tpu.memory_space<vmem>>, vector<1x128xf32>
    %c0_3 = arith.constant 0 : index
    %c0_4 = arith.constant 0 : index
    %3 = vector.load %arg1[%c0_3, %c0_4] : memref<8x128xf32, #tpu.memory_space<vmem>>, vector<8x128xf32>
    %cst = arith.constant dense<0.000000e+00> : vector<8x128xf32>
    %4 = tpu.matmul %3, %0, %cst {dimension_numbers = #tpu.dot_dimension_numbers<[1], [0], [0], [1], [0, 0, 1, 1], [], []>, precision = #tpu.contract_precision<fp32>} : vector<8x128xf32>, vector<128x128xf32>, vector<8x128xf32> -> vector<8x128xf32>
    %c0_5 = arith.constant 0 : index
    %c0_6 = arith.constant 0 : index
    %5 = vector.load %arg2[%c0_5, %c0_6] : memref<8x64xf32, #tpu.memory_space<vmem>>, vector<8x64xf32>
    %cst_7 = arith.constant dense<0.000000e+00> : vector<8x128xf32>
    %6 = tpu.matmul %5, %1, %cst_7 {dimension_numbers = #tpu.dot_dimension_numbers<[1], [0], [0], [1], [0, 0, 1, 1], [], []>, precision = #tpu.contract_precision<fp32>} : vector<8x64xf32>, vector<64x128xf32>, vector<8x128xf32> -> vector<8x128xf32>
    %7 = arith.addf %4, %6 : vector<8x128xf32>
    %8 = vector.broadcast %2 : vector<1x128xf32> to vector<8x128xf32>
    %9 = arith.addf %7, %8 : vector<8x128xf32>
    %cst_8 = arith.constant 0.000000e+00 : f32
    %10 = vector.broadcast %cst_8 : f32 to vector<8x128xf32>
    %11 = arith.maximumf %9, %10 : vector<8x128xf32>
    %c200 = arith.constant 200 : index
    %c0_9 = arith.constant 0 : index
    %12 = vector.load %arg3[%c200, %c0_9] : memref<608x128xf32, #tpu.memory_space<vmem>>, vector<128x128xf32>
    %c456 = arith.constant 456 : index
    %c0_10 = arith.constant 0 : index
    %13 = vector.load %arg3[%c456, %c0_10] : memref<608x128xf32, #tpu.memory_space<vmem>>, vector<1x128xf32>
    %cst_11 = arith.constant dense<0.000000e+00> : vector<8x128xf32>
    %14 = tpu.matmul %11, %12, %cst_11 {dimension_numbers = #tpu.dot_dimension_numbers<[1], [0], [0], [1], [0, 0, 1, 1], [], []>, precision = #tpu.contract_precision<fp32>} : vector<8x128xf32>, vector<128x128xf32>, vector<8x128xf32> -> vector<8x128xf32>
    %15 = vector.broadcast %13 : vector<1x128xf32> to vector<8x128xf32>
    %16 = arith.addf %14, %15 : vector<8x128xf32>
    %cst_12 = arith.constant 0.000000e+00 : f32
    %17 = vector.broadcast %cst_12 : f32 to vector<8x128xf32>
    %18 = arith.maximumf %16, %17 : vector<8x128xf32>
    %c328 = arith.constant 328 : index
    %c0_13 = arith.constant 0 : index
    %19 = vector.load %arg3[%c328, %c0_13] : memref<608x128xf32, #tpu.memory_space<vmem>>, vector<128x128xf32>
    %c464 = arith.constant 464 : index
    %c0_14 = arith.constant 0 : index
    %20 = vector.load %arg3[%c464, %c0_14] : memref<608x128xf32, #tpu.memory_space<vmem>>, vector<1x128xf32>
    %cst_15 = arith.constant dense<0.000000e+00> : vector<8x128xf32>
    %21 = tpu.matmul %18, %19, %cst_15 {dimension_numbers = #tpu.dot_dimension_numbers<[1], [0], [0], [1], [0, 0, 1, 1], [], []>, precision = #tpu.contract_precision<fp32>} : vector<8x128xf32>, vector<128x128xf32>, vector<8x128xf32> -> vector<8x128xf32>
    %22 = vector.broadcast %20 : vector<1x128xf32> to vector<8x128xf32>
    %23 = arith.addf %21, %22 : vector<8x128xf32>
    %cst_16 = arith.constant 0.000000e+00 : f32
    %24 = vector.broadcast %cst_16 : f32 to vector<8x128xf32>
    %25 = arith.maximumf %23, %24 : vector<8x128xf32>
    %c472 = arith.constant 472 : index
    %c0_17 = arith.constant 0 : index
    %26 = vector.load %arg3[%c472, %c0_17] : memref<608x128xf32, #tpu.memory_space<vmem>>, vector<128x128xf32>
    %c600 = arith.constant 600 : index
    %c0_18 = arith.constant 0 : index
    %27 = vector.load %arg3[%c600, %c0_18] : memref<608x128xf32, #tpu.memory_space<vmem>>, vector<1x128xf32>
    %cst_19 = arith.constant dense<0.000000e+00> : vector<8x128xf32>
    %28 = tpu.matmul %25, %26, %cst_19 {dimension_numbers = #tpu.dot_dimension_numbers<[1], [0], [0], [1], [0, 0, 1, 1], [], []>, precision = #tpu.contract_precision<fp32>} : vector<8x128xf32>, vector<128x128xf32>, vector<8x128xf32> -> vector<8x128xf32>
    %29 = vector.extract_strided_slice %28 {offsets = [0, 0], sizes = [8, 4], strides = [1, 1]} : vector<8x128xf32> to vector<8x4xf32>
    %30 = vector.extract_strided_slice %27 {offsets = [0, 0], sizes = [1, 4], strides = [1, 1]} : vector<1x128xf32> to vector<1x4xf32>
    %31 = vector.broadcast %30 : vector<1x4xf32> to vector<8x4xf32>
    %32 = arith.addf %29, %31 : vector<8x4xf32>
    %c0_20 = arith.constant 0 : index
    %c0_21 = arith.constant 0 : index
    %33 = vector.load %arg4[%c0_20, %c0_21] : memref<8x4xf32, #tpu.memory_space<vmem>>, vector<8x4xf32>
    tpu.vector_store %arg4[%c0_20, %c0_21], %32 {strides = array<i32>} : memref<8x4xf32, #tpu.memory_space<vmem>>, vector<8x4xf32>,
    return
  }
  func.func @transform_0(%arg0: i32) -> (i32, i32) {
    %c0_i32 = arith.constant 0 : i32
    %c0_i32_0 = arith.constant 0 : i32
    return %arg0, %c0_i32 : i32, i32
  }
  func.func @transform_1(%arg0: i32) -> (i32, i32) {
    %c0_i32 = arith.constant 0 : i32
    %c0_i32_0 = arith.constant 0 : i32
    return %arg0, %c0_i32 : i32, i32
  }
  func.func @transform_2(%arg0: i32) -> (i32, i32) {
    %c0_i32 = arith.constant 0 : i32
    %c0_i32_0 = arith.constant 0 : i32
    %c0_i32_1 = arith.constant 0 : i32
    return %c0_i32, %c0_i32_0 : i32, i32
  }
  func.func @transform_3(%arg0: i32) -> (i32, i32) {
    %c0_i32 = arith.constant 0 : i32
    %c0_i32_0 = arith.constant 0 : i32
    return %arg0, %c0_i32 : i32, i32
  }
}

</mosaic_0001>

<llo_original>
// kernel: tpu_custom_call.1
$region0: #{tpu_custom_call.1}
  #allocation0 [shape = 'u32[]', space=smem, size = 0x4, offset = 0x4, fixed_abs, tag = 'smem constant byte address 0x4 - core index']
  #allocation1 [shape = 'u32[144,128]{1,0:T(1,128)}', space=vmem, size = 0x12000, scoped, tag = 'internal scratch']
  %s0 = inlined_call_operand.hbm [shape: f32[8,128], index: 0, kind: input, shape index: {}]
  %s1 = inlined_call_operand.hbm [shape: f32[8,64], index: 1, kind: input, shape index: {}]
  %s2 = inlined_call_operand.hbm [shape: f32[608,128], index: 2, kind: input, shape index: {}]
  %s3 = inlined_call_operand.vmem [shape: f32[8,4], index: 3, kind: output, shape index: {}]
  %s4 = sld [smem:[#allocation0]]
  $region34: #{tpu_custom_call.1} parent=0
    _
  %s6 = ssub.s32 1, %s4
  %s7 = scalar_select 0, %s6, %s4
  $region1: #{tpu_custom_call.1} parent=0
    #allocation2 [shape = 'u8[4096]{0}', space=vmem, size = 0x1000, scoped, tag = 'input window, operand 0, single buffered']
    #allocation3 [shape = 's32[1]{0}', space=sflag, size = 0x4, scoped, tag = 'scoped memory for tpu_custom_call.1']
    #allocation4 [shape = 'u8[4096]{0}', space=vmem, size = 0x1000, scoped, tag = 'input window, operand 1, single buffered']
    #allocation5 [shape = 's32[1]{0}', space=sflag, size = 0x4, scoped, tag = 'scoped memory for tpu_custom_call.1']
    #allocation6 [shape = 'u8[311296]{0}', space=vmem, size = 0x4c000, scoped, tag = 'input window, operand 2, single buffered']
    %8 = vsyncpa [#allocation3], 0
    %9 = vsyncpa [#allocation5], 0
    // Predicated region
    $region2: #{tpu_custom_call.1} parent=1 // pred_check
      _
    $region3: #{tpu_custom_call.1} parent=1 // pred_check_branch
      %11 = sbr.rel (0) target = $region5
    $region4: #{tpu_custom_call.1} parent=1 // pred_region
      %s13 = ssub.s32 128, 128
      %14 = vsyncadd [#allocation3], %s13
      %s16 = sshll.u32 [#allocation2], 4
      %s17 = int_to_ptr.vmem [resolvable:$true] %s16
      %19 = dma.hbm_to_vmem [thread:$0]  %s0, 128, %s17, [#allocation3]
    $region5: #{tpu_custom_call.1} parent=1 // pred_fallthru
      _
    // Predicated region
    $region6: #{tpu_custom_call.1} parent=1 // pred_check
      _
    $region7: #{tpu_custom_call.1} parent=1 // pred_check_branch
      %21 = sbr.rel (0) target = $region9
    $region8: #{tpu_custom_call.1} parent=1 // pred_region
      %s23 = ssub.s32 128, 128
      %24 = vsyncadd [#allocation5], %s23
      %s26 = sshll.u32 [#allocation4], 4
      %s27 = int_to_ptr.vmem [resolvable:$true] %s26
      %29 = dma.hbm_to_vmem [thread:$0]  %s1, 128, %s27, [#allocation5]
    $region9: #{tpu_custom_call.1} parent=1 // pred_fallthru
      _
    // Predicated region
    $region10: #{tpu_custom_call.1} parent=1 // pred_check
      _
    $region11: #{tpu_custom_call.1} parent=1 // pred_check_branch
      %31 = sbr.rel (0) target = $region13
    $region12: #{tpu_custom_call.1} parent=1 // pred_region
      %s33 = ssub.s32 9728, 9728
      %34 = vsyncadd [#allocation5], %s33
      %s35 = sshll.u32 [#allocation6], 4
      %s36 = int_to_ptr.vmem [resolvable:$true] %s35
      %41 = dma.hbm_to_vmem [thread:$0]  %s2, 9728, %s36, [#allocation5], 128, 128, 8
    $region13: #{tpu_custom_call.1} parent=1 // pred_fallthru
      _
    // Predicated region
    $region14: #{tpu_custom_call.1} parent=1 // pred_check
      _
    $region15: #{tpu_custom_call.1} parent=1 // pred_check_branch
      %43 = sbr.rel (0) target = $region17
    $region16: #{tpu_custom_call.1} parent=1 // pred_region
      %44 = dma.done [#allocation3], 128
    $region17: #{tpu_custom_call.1} parent=1 // pred_fallthru
      _
    // Predicated region
    $region18: #{tpu_custom_call.1} parent=1 // pred_check
      _
    $region19: #{tpu_custom_call.1} parent=1 // pred_check_branch
      %46 = sbr.rel (0) target = $region21
    $region20: #{tpu_custom_call.1} parent=1 // pred_region
      %47 = dma.done [#allocation5], 128
    $region21: #{tpu_custom_call.1} parent=1 // pred_fallthru
      _
    // Predicated region
    $region22: #{tpu_custom_call.1} parent=1 // pred_check
      _
    $region23: #{tpu_custom_call.1} parent=1 // pred_check_branch
      %49 = sbr.rel (0) target = $region25
    $region24: #{tpu_custom_call.1} parent=1 // pred_region
      %50 = dma.done [#allocation5], 9728
    $region25: #{tpu_custom_call.1} parent=1 // pred_fallthru
      _
    %v51 = vld [vmem:[#allocation6] sm:$0xff]
    %v52 = vld [vmem:[#allocation6 + $0x8] sm:$0xff]
    %v53 = vld [vmem:[#allocation6 + $0x10] sm:$0xff]
    %v54 = vld [vmem:[#allocation6 + $0x18] sm:$0xff]
    %v55 = vld [vmem:[#allocation6 + $0x20] sm:$0xff]
    %v56 = vld [vmem:[#allocation6 + $0x28] sm:$0xff]
    %v57 = vld [vmem:[#allocation6 + $0x30] sm:$0xff]
    %v58 = vld [vmem:[#allocation6 + $0x38] sm:$0xff]
    %v59 = vld [vmem:[#allocation6 + $0x40] sm:$0xff]
    %v60 = vld [vmem:[#allocation6 + $0x48] sm:$0xff]
    %v61 = vld [vmem:[#allocation6 + $0x50] sm:$0xff]
    %v62 = vld [vmem:[#allocation6 + $0x58] sm:$0xff]
    %v63 = vld [vmem:[#allocation6 + $0x60] sm:$0xff]
    %v64 = vld [vmem:[#allocation6 + $0x68] sm:$0xff]
    %v65 = vld [vmem:[#allocation6 + $0x70] sm:$0xff]
    %v66 = vld [vmem:[#allocation6 + $0x78] sm:$0xff]
    %v67 = vld [vmem:[#allocation6 + $0x80] sm:$0xff]
    %v68 = vld [vmem:[#allocation6 + $0x88] sm:$0xff]
    %v69 = vld [vmem:[#allocation6 + $0x90] sm:$0xff]
    %v70 = vld [vmem:[#allocation6 + $0x98] sm:$0xff]
    %v71 = vld [vmem:[#allocation6 + $0xa0] sm:$0xff]
    %v72 = vld [vmem:[#allocation6 + $0xa8] sm:$0xff]
    %v73 = vld [vmem:[#allocation6 + $0xb0] sm:$0xff]
    %v74 = vld [vmem:[#allocation6 + $0xb8] sm:$0xff]
    %v75 = vld [vmem:[#allocation6 + $0xc0] sm:$0x1]
    %v76 = vld [vmem:[#allocation2] sm:$0xff]
    %v77 = vld [vmem:[#allocation4] sm:$0xff]
    %vm78 = vcmask 523264
    %v80 = vsel %vm78, %v77, 0
    %82 = vmatprep.subr.mxu0 0.0
    %v83 = vand.u32 %v67, 4294901760
    %84 = vmatpush1.msra.mxu0 %v83
    %85 = vmatprep.subr.mxu0 0.0
    %v86 = vand.u32 %v68, 4294901760
    %87 = vmatpush1.msra.mxu0 %v86
    %88 = vmatprep.subr.mxu0 0.0
    %v89 = vand.u32 %v69, 4294901760
    %90 = vmatpush1.msra.mxu0 %v89
    %91 = vmatprep.subr.mxu0 0.0
    %v92 = vand.u32 %v70, 4294901760
    %93 = vmatpush1.msra.mxu0 %v92
    %94 = vmatprep.subr.mxu0 0.0
    %v95 = vand.u32 %v71, 4294901760
    %96 = vmatpush1.msra.mxu0 %v95
    %97 = vmatprep.subr.mxu0 0.0
    %v98 = vand.u32 %v72, 4294901760
    %99 = vmatpush1.msra.mxu0 %v98
    %100 = vmatprep.subr.mxu0 0.0
    %v101 = vand.u32 %v73, 4294901760
    %102 = vmatpush1.msra.mxu0 %v101
    %103 = vmatprep.subr.mxu0 0.0
    %v104 = vand.u32 %v74, 4294901760
    %105 = vmatpush1.msra.mxu0 %v104
    %106 = vmatprep.subr.mxu0 0.0
    %107 = vmatpush1.msra.mxu0 0.0
    %108 = vmatprep.subr.mxu0 0.0
    %109 = vmatpush1.msra.mxu0 0.0
    %110 = vmatprep.subr.mxu0 0.0
    %111 = vmatpush1.msra.mxu0 0.0
    %112 = vmatprep.subr.mxu0 0.0
    %113 = vmatpush1.msra.mxu0 0.0
    %114 = vmatprep.subr.mxu0 0.0
    %115 = vmatpush1.msra.mxu0 0.0
    %116 = vmatprep.subr.mxu0 0.0
    %117 = vmatpush1.msra.mxu0 0.0
    %118 = vmatprep.subr.mxu0 0.0
    %119 = vmatpush1.msra.mxu0 0.0
    %120 = vmatprep.subr.mxu0 0.0
    %121 = vmatpush1.msra.mxu0 0.0
    %122 = vmatprep.subr.mxu0 0.0
    %123 = vmatpush1.msra.mxu0 0.0
    %124 = vmatprep.subr.mxu0 0.0
    %125 = vmatpush1.msra.mxu0 0.0
    %126 = vmatprep.subr.mxu0 0.0
    %127 = vmatpush1.msra.mxu0 0.0
    %128 = vmatprep.subr.mxu0 0.0
    %129 = vmatpush1.msra.mxu0 0.0
    %130 = vmatprep.subr.mxu0 0.0
    %131 = vmatpush1.msra.mxu0 0.0
    %132 = vmatprep.subr.mxu0 0.0
    %133 = vmatpush1.msra.mxu0 0.0
    %134 = vmatprep.subr.mxu0 0.0
    %135 = vmatpush1.msra.mxu0 0.0
    %136 = vmatprep.subr.mxu0 0.0
    %137 = vmatpush1.msra.mxu0 0.0
    %138 = vmatprep.subr.mxu0 0.0
    %139 = vmatpush1.msra.mxu0 0.0
    %140 = vmatprep.subr.mxu0 0.0
    %141 = vmatpush1.msra.mxu0 0.0
    %142 = vmatprep.subr.mxu0 0.0
    %143 = vmatpush1.msra.mxu0 0.0
    %144 = vmatprep.subr.mxu0 0.0
    %145 = vmatpush1.msra.mxu0 0.0
    %146 = vmatprep.subr.mxu0 0.0
    %147 = vmatpush1.msra.mxu0 0.0
    %148 = vmatprep.subr.mxu0 0.0
    %149 = vmatpush1.msra.mxu0 0.0
    %150 = vmatprep.subr.mxu0 0.0
    %151 = vmatpush1.msra.mxu0 0.0
    %152 = vmatprep.subr.mxu0 0.0
    %153 = vmatpush1.msra.mxu0 0.0
    %154 = vmatprep.mubr.f32.mxu0 0.0
    %v155 = vand.u32 %v80, 4294901760
    %v156 = vsub.f32 %v80, %v155
    %v157 = vand.u32 %v156, 4294901760
    %v158 = vsub.f32 %v156, %v157
    %v159 = vand.u32 %v158, 4294901760
    %160 = vmatmul.mubr.f32.gmra.mrb[0].mxu0 %v159
    %v161 = vpop.f32.mrb[0].mxu0
    %v162 = vadd.f32 0.0, %v161
    %v163 = vpop.f32.mrb[0].mxu0
    %164 = vdwg.mxu0
    %165 = vmatprep.subr.mxu0 0.0
    %v166 = vand.u32 %v67, 4294901760
    %v167 = vsub.f32 %v67, %v166
    %v168 = vand.u32 %v167, 4294901760
    %v169 = vsub.f32 %v167, %v168
    %v170 = vand.u32 %v169, 4294901760
    %171 = vmatpush1.msra.mxu0 %v170
    %172 = vmatprep.subr.mxu0 0.0
    %v173 = vand.u32 %v68, 4294901760
    %v174 = vsub.f32 %v68, %v173
    %v175 = vand.u32 %v174, 4294901760
    %v176 = vsub.f32 %v174, %v175
    %v177 = vand.u32 %v176, 4294901760
    %178 = vmatpush1.msra.mxu0 %v177
    %179 = vmatprep.subr.mxu0 0.0
    %v180 = vand.u32 %v69, 4294901760
    %v181 = vsub.f32 %v69, %v180
    %v182 = vand.u32 %v181, 4294901760
    %v183 = vsub.f32 %v181, %v182
    %v184 = vand.u32 %v183, 4294901760
    %185 = vmatpush1.msra.mxu0 %v184
    %186 = vmatprep.subr.mxu0 0.0
    %v187 = vand.u32 %v70, 4294901760
    %v188 = vsub.f32 %v70, %v187
    %v189 = vand.u32 %v188, 4294901760
    %v190 = vsub.f32 %v188, %v189
    %v191 = vand.u32 %v190, 4294901760
    %192 = vmatpush1.msra.mxu0 %v191
    %193 = vmatprep.subr.mxu0 0.0
    %v194 = vand.u32 %v71, 4294901760
    %v195 = vsub.f32 %v71, %v194
    %v196 = vand.u32 %v195, 4294901760
    %v197 = vsub.f32 %v195, %v196
    %v198 = vand.u32 %v197, 4294901760
    %199 = vmatpush1.msra.mxu0 %v198
    %200 = vmatprep.subr.mxu0 0.0
    %v201 = vand.u32 %v72, 4294901760
    %v202 = vsub.f32 %v72, %v201
    %v203 = vand.u32 %v202, 4294901760
    %v204 = vsub.f32 %v202, %v203
    %v205 = vand.u32 %v204, 4294901760
    %206 = vmatpush1.msra.mxu0 %v205
    %207 = vmatprep.subr.mxu0 0.0
    %v208 = vand.u32 %v73, 4294901760
    %v209 = vsub.f32 %v73, %v208
    %v210 = vand.u32 %v209, 4294901760
    %v211 = vsub.f32 %v209, %v210
    %v212 = vand.u32 %v211, 4294901760
    %213 = vmatpush1.msra.mxu0 %v212
    %214 = vmatprep.subr.mxu0 0.0
    %v215 = vand.u32 %v74, 4294901760
    %v216 = vsub.f32 %v74, %v215
    %v217 = vand.u32 %v216, 4294901760
    %v218 = vsub.f32 %v216, %v217
    %v219 = vand.u32 %v218, 4294901760
    %220 = vmatpush1.msra.mxu0 %v219
    %221 = vmatprep.subr.mxu0 0.0
    %222 = vmatpush1.msra.mxu0 0.0
    %223 = vmatprep.subr.mxu0 0.0
    %224 = vmatpush1.msra.mxu0 0.0
    %225 = vmatprep.subr.mxu0 0.0
    %226 = vmatpush1.msra.mxu0 0.0
    %227 = vmatprep.subr.mxu0 0.0
    %228 = vmatpush1.msra.mxu0 0.0
    %229 = vmatprep.subr.mxu0 0.0
    %230 = vmatpush1.msra.mxu0 0.0
    %231 = vmatprep.subr.mxu0 0.0
    %232 = vmatpush1.msra.mxu0 0.0
    %233 = vmatprep.subr.mxu0 0.0
    %234 = vmatpush1.msra.mxu0 0.0
    %235 = vmatprep.subr.mxu0 0.0
    %236 = vmatpush1.msra.mxu0 0.0
    %237 = vmatprep.subr.mxu0 0.0
    %238 = vmatpush1.msra.mxu0 0.0
    %239 = vmatprep.subr.mxu0 0.0
    %240 = vmatpush1.msra.mxu0 0.0
    %241 = vmatprep.subr.mxu0 0.0
    %242 = vmatpush1.msra.mxu0 0.0
    %243 = vmatprep.subr.mxu0 0.0
    %244 = vmatpush1.msra.mxu0 0.0
    %245 = vmatprep.subr.mxu0 0.0
    %246 = vmatpush1.msra.mxu0 0.0
    %247 = vmatprep.subr.mxu0 0.0
    %248 = vmatpush1.msra.mxu0 0.0
    %249 = vmatprep.subr.mxu0 0.0
    %250 = vmatpush1.msra.mxu0 0.0
    %251 = vmatprep.subr.mxu0 0.0
    %252 = vmatpush1.msra.mxu0 0.0
    %253 = vmatprep.subr.mxu0 0.0
    %254 = vmatpush1.msra.mxu0 0.0
    %255 = vmatprep.subr.mxu0 0.0
    %256 = vmatpush1.msra.mxu0 0.0
    %257 = vmatprep.subr.mxu0 0.0
    %258 = vmatpush1.msra.mxu0 0.0
    %259 = vmatprep.subr.mxu0 0.0
    %260 = vmatpush1.msra.mxu0 0.0
    %261 = vmatprep.subr.mxu0 0.0
    %262 = vmatpush1.msra.mxu0 0.0
    %263 = vmatprep.subr.mxu0 0.0
    %264 = vmatpush1.msra.mxu0 0.0
    %265 = vmatprep.subr.mxu0 0.0
    %266 = vmatpush1.msra.mxu0 0.0
    %267 = vmatprep.subr.mxu0 0.0
    %268 = vmatpush1.msra.mxu0 0.0
    %269 = vmatprep.mubr.f32.mxu0 0.0
    %v270 = vand.u32 %v80, 4294901760
    %271 = vmatmul.mubr.f32.gmra.mrb[0].mxu0 %v270
    %v272 = vpop.f32.mrb[0].mxu0
    %v273 = vadd.f32 %v162, %v272
    %v274 = vpop.f32.mrb[0].mxu0
    %275 = vdwg.mxu0
    %276 = vmatprep.subr.mxu0 0.0
    %v277 = vand.u32 %v67, 4294901760
    %v278 = vsub.f32 %v67, %v277
    %279 = vmatpush1.msra.mxu0 %v278
    %280 = vmatprep.subr.mxu0 0.0
    %v281 = vand.u32 %v68, 4294901760
    %v282 = vsub.f32 %v68, %v281
    %283 = vmatpush1.msra.mxu0 %v282
    %284 = vmatprep.subr.mxu0 0.0
    %v285 = vand.u32 %v69, 4294901760
    %v286 = vsub.f32 %v69, %v285
    %287 = vmatpush1.msra.mxu0 %v286
    %288 = vmatprep.subr.mxu0 0.0
    %v289 = vand.u32 %v70, 4294901760
    %v290 = vsub.f32 %v70, %v289
    %291 = vmatpush1.msra.mxu0 %v290
    %292 = vmatprep.subr.mxu0 0.0
    %v293 = vand.u32 %v71, 4294901760
    %v294 = vsub.f32 %v71, %v293
    %295 = vmatpush1.msra.mxu0 %v294
    %296 = vmatprep.subr.mxu0 0.0
    %v297 = vand.u32 %v72, 4294901760
    %v298 = vsub.f32 %v72, %v297
    %299 = vmatpush1.msra.mxu0 %v298
    %300 = vmatprep.subr.mxu0 0.0
    %v301 = vand.u32 %v73, 4294901760
    %v302 = vsub.f32 %v73, %v301
    %303 = vmatpush1.msra.mxu0 %v302
    %304 = vmatprep.subr.mxu0 0.0
    %v305 = vand.u32 %v74, 4294901760
    %v306 = vsub.f32 %v74, %v305
    %307 = vmatpush1.msra.mxu0 %v306
    %308 = vmatprep.subr.mxu0 0.0
    %309 = vmatpush1.msra.mxu0 0.0
    %310 = vmatprep.subr.mxu0 0.0
    %311 = vmatpush1.msra.mxu0 0.0
    %312 = vmatprep.subr.mxu0 0.0
    %313 = vmatpush1.msra.mxu0 0.0
    %314 = vmatprep.subr.mxu0 0.0
    %315 = vmatpush1.msra.mxu0 0.0
    %316 = vmatprep.subr.mxu0 0.0
    %317 = vmatpush1.msra.mxu0 0.0
    %318 = vmatprep.subr.mxu0 0.0
    %319 = vmatpush1.msra.mxu0 0.0
    %320 = vmatprep.subr.mxu0 0.0
    %321 = vmatpush1.msra.mxu0 0.0
    %322 = vmatprep.subr.mxu0 0.0
    %323 = vmatpush1.msra.mxu0 0.0
    %324 = vmatprep.subr.mxu0 0.0
    %325 = vmatpush1.msra.mxu0 0.0
    %326 = vmatprep.subr.mxu0 0.0
    %327 = vmatpush1.msra.mxu0 0.0
    %328 = vmatprep.subr.mxu0 0.0
    %329 = vmatpush1.msra.mxu0 0.0
    %330 = vmatprep.subr.mxu0 0.0
    %331 = vmatpush1.msra.mxu0 0.0
    %332 = vmatprep.subr.mxu0 0.0
    %333 = vmatpush1.msra.mxu0 0.0
    %334 = vmatprep.subr.mxu0 0.0
    %335 = vmatpush1.msra.mxu0 0.0
    %336 = vmatprep.subr.mxu0 0.0
    %337 = vmatpush1.msra.mxu0 0.0
    %338 = vmatprep.subr.mxu0 0.0
    %339 = vmatpush1.msra.mxu0 0.0
    %340 = vmatprep.subr.mxu0 0.0
    %341 = vmatpush1.msra.mxu0 0.0
    %342 = vmatprep.subr.mxu0 0.0
    %343 = vmatpush1.msra.mxu0 0.0
    %344 = vmatprep.subr.mxu0 0.0
    %345 = vmatpush1.msra.mxu0 0.0
    %346 = vmatprep.subr.mxu0 0.0
    %347 = vmatpush1.msra.mxu0 0.0
    %348 = vmatprep.subr.mxu0 0.0
    %349 = vmatpush1.msra.mxu0 0.0
    %350 = vmatprep.subr.mxu0 0.0
    %351 = vmatpush1.msra.mxu0 0.0
    %352 = vmatprep.subr.mxu0 0.0
    %353 = vmatpush1.msra.mxu0 0.0
    %354 = vmatprep.subr.mxu0 0.0
    %355 = vmatpush1.msra.mxu0 0.0
    %356 = vmatprep.mubr.f32.mxu0 0.0
    %v357 = vand.u32 %v80, 4294901760
    %v358 = vsub.f32 %v80, %v357
    %359 = vmatmul.mubr.f32.gmra.mrb[0].mxu0 %v358
    %v360 = vpop.f32.mrb[0].mxu0
    %v361 = vadd.f32 %v273, %v360
    %v362 = vpop.f32.mrb[0].mxu0
    %363 = vdwg.mxu0
    %364 = vmatprep.subr.mxu0 0.0
    %v365 = vand.u32 %v67, 4294901760
    %366 = vmatpush1.msra.mxu0 %v365
    %367 = vmatprep.subr.mxu0 0.0
    %v368 = vand.u32 %v68, 4294901760
    %369 = vmatpush1.msra.mxu0 %v368
    %370 = vmatprep.subr.mxu0 0.0
    %v371 = vand.u32 %v69, 4294901760
    %372 = vmatpush1.msra.mxu0 %v371
    %373 = vmatprep.subr.mxu0 0.0
    %v374 = vand.u32 %v70, 4294901760
    %375 = vmatpush1.msra.mxu0 %v374
    %376 = vmatprep.subr.mxu0 0.0
    %v377 = vand.u32 %v71, 4294901760
    %378 = vmatpush1.msra.mxu0 %v377
    %379 = vmatprep.subr.mxu0 0.0
    %v380 = vand.u32 %v72, 4294901760
    %381 = vmatpush1.msra.mxu0 %v380
    %382 = vmatprep.subr.mxu0 0.0
    %v383 = vand.u32 %v73, 4294901760
    %384 = vmatpush1.msra.mxu0 %v383
    %385 = vmatprep.subr.mxu0 0.0
    %v386 = vand.u32 %v74, 4294901760
    %387 = vmatpush1.msra.mxu0 %v386
    %388 = vmatprep.subr.mxu0 0.0
    %389 = vmatpush1.msra.mxu0 0.0
    %390 = vmatprep.subr.mxu0 0.0
    %391 = vmatpush1.msra.mxu0 0.0
    %392 = vmatprep.subr.mxu0 0.0
    %393 = vmatpush1.msra.mxu0 0.0
    %394 = vmatprep.subr.mxu0 0.0
    %395 = vmatpush1.msra.mxu0 0.0
    %396 = vmatprep.subr.mxu0 0.0
    %397 = vmatpush1.msra.mxu0 0.0
    %398 = vmatprep.subr.mxu0 0.0
    %399 = vmatpush1.msra.mxu0 0.0
    %400 = vmatprep.subr.mxu0 0.0
    %401 = vmatpush1.msra.mxu0 0.0
    %402 = vmatprep.subr.mxu0 0.0
    %403 = vmatpush1.msra.mxu0 0.0
    %404 = vmatprep.subr.mxu0 0.0
    %405 = vmatpush1.msra.mxu0 0.0
    %406 = vmatprep.subr.mxu0 0.0
    %407 = vmatpush1.msra.mxu0 0.0
    %408 = vmatprep.subr.mxu0 0.0
    %409 = vmatpush1.msra.mxu0 0.0
    %410 = vmatprep.subr.mxu0 0.0
    %411 = vmatpush1.msra.mxu0 0.0
    %412 = vmatprep.subr.mxu0 0.0
    %413 = vmatpush1.msra.mxu0 0.0
    %414 = vmatprep.subr.mxu0 0.0
    %415 = vmatpush1.msra.mxu0 0.0
    %416 = vmatprep.subr.mxu0 0.0
    %417 = vmatpush1.msra.mxu0 0.0
    %418 = vmatprep.subr.mxu0 0.0
    %419 = vmatpush1.msra.mxu0 0.0
    %420 = vmatprep.subr.mxu0 0.0
    %421 = vmatpush1.msra.mxu0 0.0
    %422 = vmatprep.subr.mxu0 0.0
    %423 = vmatpush1.msra.mxu0 0.0
    %424 = vmatprep.subr.mxu0 0.0
    %425 = vmatpush1.msra.mxu0 0.0
    %426 = vmatprep.subr.mxu0 0.0
    %427 = vmatpush1.msra.mxu0 0.0
    %428 = vmatprep.subr.mxu0 0.0
    %429 = vmatpush1.msra.mxu0 0.0
    %430 = vmatprep.subr.mxu0 0.0
    %431 = vmatpush1.msra.mxu0 0.0
    %432 = vmatprep.subr.mxu0 0.0
    %433 = vmatpush1.msra.mxu0 0.0
    %434 = vmatprep.subr.mxu0 0.0
    %435 = vmatpush1.msra.mxu0 0.0
    %436 = vmatprep.mubr.f32.mxu0 0.0
    %v437 = vand.u32 %v80, 4294901760
    %v438 = vsub.f32 %v80, %v437
    %v439 = vand.u32 %v438, 4294901760
    %440 = vmatmul.mubr.f32.gmra.mrb[0].mxu0 %v439
    %v441 = vpop.f32.mrb[0].mxu0
    %v442 = vadd.f32 %v361, %v441
    %v443 = vpop.f32.mrb[0].mxu0
    %444 = vdwg.mxu0
    %445 = vmatprep.subr.mxu0 0.0
    %v446 = vand.u32 %v67, 4294901760
    %v447 = vsub.f32 %v67, %v446
    %v448 = vand.u32 %v447, 4294901760
    %449 = vmatpush1.msra.mxu0 %v448
    %450 = vmatprep.subr.mxu0 0.0
    %v451 = vand.u32 %v68, 4294901760
    %v452 = vsub.f32 %v68, %v451
    %v453 = vand.u32 %v452, 4294901760
    %454 = vmatpush1.msra.mxu0 %v453
    %455 = vmatprep.subr.mxu0 0.0
    %v456 = vand.u32 %v69, 4294901760
    %v457 = vsub.f32 %v69, %v456
    %v458 = vand.u32 %v457, 4294901760
    %459 = vmatpush1.msra.mxu0 %v458
    %460 = vmatprep.subr.mxu0 0.0
    %v461 = vand.u32 %v70, 4294901760
    %v462 = vsub.f32 %v70, %v461
    %v463 = vand.u32 %v462, 4294901760
    %464 = vmatpush1.msra.mxu0 %v463
    %465 = vmatprep.subr.mxu0 0.0
    %v466 = vand.u32 %v71, 4294901760
    %v467 = vsub.f32 %v71, %v466
    %v468 = vand.u32 %v467, 4294901760
    %469 = vmatpush1.msra.mxu0 %v468
    %470 = vmatprep.subr.mxu0 0.0
    %v471 = vand.u32 %v72, 4294901760
    %v472 = vsub.f32 %v72, %v471
    %v473 = vand.u32 %v472, 4294901760
    %474 = vmatpush1.msra.mxu0 %v473
    %475 = vmatprep.subr.mxu0 0.0
    %v476 = vand.u32 %v73, 4294901760
    %v477 = vsub.f32 %v73, %v476
    %v478 = vand.u32 %v477, 4294901760
    %479 = vmatpush1.msra.mxu0 %v478
    %480 = vmatprep.subr.mxu0 0.0
    %v481 = vand.u32 %v74, 4294901760
    %v482 = vsub.f32 %v74, %v481
    %v483 = vand.u32 %v482, 4294901760
    %484 = vmatpush1.msra.mxu0 %v483
    %485 = vmatprep.subr.mxu0 0.0
    %486 = vmatpush1.msra.mxu0 0.0
    %487 = vmatprep.subr.mxu0 0.0
    %488 = vmatpush1.msra.mxu0 0.0
    %489 = vmatprep.subr.mxu0 0.0
    %490 = vmatpush1.msra.mxu0 0.0
    %491 = vmatprep.subr.mxu0 0.0
    %492 = vmatpush1.msra.mxu0 0.0
    %493 = vmatprep.subr.mxu0 0.0
    %494 = vmatpush1.msra.mxu0 0.0
    %495 = vmatprep.subr.mxu0 0.0
    %496 = vmatpush1.msra.mxu0 0.0
    %497 = vmatprep.subr.mxu0 0.0
    %498 = vmatpush1.msra.mxu0 0.0
    %499 = vmatprep.subr.mxu0 0.0
    %500 = vmatpush1.msra.mxu0 0.0
    %501 = vmatprep.subr.mxu0 0.0
    %502 = vmatpush1.msra.mxu0 0.0
    %503 = vmatprep.subr.mxu0 0.0
    %504 = vmatpush1.msra.mxu0 0.0
    %505 = vmatprep.subr.mxu0 0.0
    %506 = vmatpush1.msra.mxu0 0.0
    %507 = vmatprep.subr.mxu0 0.0
    %508 = vmatpush1.msra.mxu0 0.0
    %509 = vmatprep.subr.mxu0 0.0
    %510 = vmatpush1.msra.mxu0 0.0
    %511 = vmatprep.subr.mxu0 0.0
    %512 = vmatpush1.msra.mxu0 0.0
    %513 = vmatprep.subr.mxu0 0.0
    %514 = vmatpush1.msra.mxu0 0.0
    %515 = vmatprep.subr.mxu0 0.0
    %516 = vmatpush1.msra.mxu0 0.0
    %517 = vmatprep.subr.mxu0 0.0
    %518 = vmatpush1.msra.mxu0 0.0
    %519 = vmatprep.subr.mxu0 0.0
    %520 = vmatpush1.msra.mxu0 0.0
    %521 = vmatprep.subr.mxu0 0.0
    %522 = vmatpush1.msra.mxu0 0.0
    %523 = vmatprep.subr.mxu0 0.0
    %524 = vmatpush1.msra.mxu0 0.0
    %525 = vmatprep.subr.mxu0 0.0
    %526 = vmatpush1.msra.mxu0 0.0
    %527 = vmatprep.subr.mxu0 0.0
    %528 = vmatpush1.msra.mxu0 0.0
    %529 = vmatprep.subr.mxu0 0.0
    %530 = vmatpush1.msra.mxu0 0.0
    %531 = vmatprep.subr.mxu0 0.0
    %532 = vmatpush1.msra.mxu0 0.0
    %533 = vmatprep.mubr.f32.mxu0 0.0
    %v534 = vand.u32 %v80, 4294901760
    %535 = vmatmul.mubr.f32.gmra.mrb[0].mxu0 %v534
    %v536 = vpop.f32.mrb[0].mxu0
    %v537 = vadd.f32 %v442, %v536
    %v538 = vpop.f32.mrb[0].mxu0
    %539 = vdwg.mxu0
    %540 = vmatprep.subr.mxu0 0.0
    %v541 = vand.u32 %v67, 4294901760
    %542 = vmatpush1.msra.mxu0 %v541
    %543 = vmatprep.subr.mxu0 0.0
    %v544 = vand.u32 %v68, 4294901760
    %545 = vmatpush1.msra.mxu0 %v544
    %546 = vmatprep.subr.mxu0 0.0
    %v547 = vand.u32 %v69, 4294901760
    %548 = vmatpush1.msra.mxu0 %v547
    %549 = vmatprep.subr.mxu0 0.0
    %v550 = vand.u32 %v70, 4294901760
    %551 = vmatpush1.msra.mxu0 %v550
    %552 = vmatprep.subr.mxu0 0.0
    %v553 = vand.u32 %v71, 4294901760
    %554 = vmatpush1.msra.mxu0 %v553
    %555 = vmatprep.subr.mxu0 0.0
    %v556 = vand.u32 %v72, 4294901760
    %557 = vmatpush1.msra.mxu0 %v556
    %558 = vmatprep.subr.mxu0 0.0
    %v559 = vand.u32 %v73, 4294901760
    %560 = vmatpush1.msra.mxu0 %v559
    %561 = vmatprep.subr.mxu0 0.0
    %v562 = vand.u32 %v74, 4294901760
    %563 = vmatpush1.msra.mxu0 %v562
    %564 = vmatprep.subr.mxu0 0.0
    %565 = vmatpush1.msra.mxu0 0.0
    %566 = vmatprep.subr.mxu0 0.0
    %567 = vmatpush1.msra.mxu0 0.0
    %568 = vmatprep.subr.mxu0 0.0
    %569 = vmatpush1.msra.mxu0 0.0
    %570 = vmatprep.subr.mxu0 0.0
    %571 = vmatpush1.msra.mxu0 0.0
    %572 = vmatprep.subr.mxu0 0.0
    %573 = vmatpush1.msra.mxu0 0.0
    %574 = vmatprep.subr.mxu0 0.0
    %575 = vmatpush1.msra.mxu0 0.0
    %576 = vmatprep.subr.mxu0 0.0
    %577 = vmatpush1.msra.mxu0 0.0
    %578 = vmatprep.subr.mxu0 0.0
    %579 = vmatpush1.msra.mxu0 0.0
    %580 = vmatprep.subr.mxu0 0.0
    %581 = vmatpush1.msra.mxu0 0.0
    %582 = vmatprep.subr.mxu0 0.0
    %583 = vmatpush1.msra.mxu0 0.0
    %584 = vmatprep.subr.mxu0 0.0
    %585 = vmatpush1.msra.mxu0 0.0
    %586 = vmatprep.subr.mxu0 0.0
    %587 = vmatpush1.msra.mxu0 0.0
    %588 = vmatprep.subr.mxu0 0.0
    %589 = vmatpush1.msra.mxu0 0.0
    %590 = vmatprep.subr.mxu0 0.0
    %591 = vmatpush1.msra.mxu0 0.0
    %592 = vmatprep.subr.mxu0 0.0
    %593 = vmatpush1.msra.mxu0 0.0
    %594 = vmatprep.subr.mxu0 0.0
    %595 = vmatpush1.msra.mxu0 0.0
    %596 = vmatprep.subr.mxu0 0.0
    %597 = vmatpush1.msra.mxu0 0.0
    %598 = vmatprep.subr.mxu0 0.0
    %599 = vmatpush1.msra.mxu0 0.0
    %600 = vmatprep.subr.mxu0 0.0
    %601 = vmatpush1.msra.mxu0 0.0
    %602 = vmatprep.subr.mxu0 0.0
    %603 = vmatpush1.msra.mxu0 0.0
    %604 = vmatprep.subr.mxu0 0.0
    %605 = vmatpush1.msra.mxu0 0.0
    %606 = vmatprep.subr.mxu0 0.0
    %607 = vmatpush1.msra.mxu0 0.0
    %608 = vmatprep.subr.mxu0 0.0
    %609 = vmatpush1.msra.mxu0 0.0
    %610 = vmatprep.subr.mxu0 0.0
    %611 = vmatpush1.msra.mxu0 0.0
    %612 = vmatprep.mubr.f32.mxu0 0.0
    %v613 = vand.u32 %v80, 4294901760
    %614 = vmatmul.mubr.f32.gmra.mrb[0].mxu0 %v613
    %v615 = vpop.f32.mrb[0].mxu0
    %v616 = vadd.f32 %v537, %v615
    %v617 = vpop.f32.mrb[0].mxu0
    %618 = vdwg.mxu0
    %619 = vmatprep.subr.mxu0 0.0
    %v620 = vand.u32 %v51, 4294901760
    %621 = vmatpush1.msra.mxu0 %v620
    %622 = vmatprep.subr.mxu0 0.0
    %v623 = vand.u32 %v52, 4294901760
    %624 = vmatpush1.msra.mxu0 %v623
    %625 = vmatprep.subr.mxu0 0.0
    %v626 = vand.u32 %v53, 4294901760
    %627 = vmatpush1.msra.mxu0 %v626
    %628 = vmatprep.subr.mxu0 0.0
    %v629 = vand.u32 %v54, 4294901760
    %630 = vmatpush1.msra.mxu0 %v629
    %631 = vmatprep.subr.mxu0 0.0
    %v632 = vand.u32 %v55, 4294901760
    %633 = vmatpush1.msra.mxu0 %v632
    %634 = vmatprep.subr.mxu0 0.0
    %v635 = vand.u32 %v56, 4294901760
    %636 = vmatpush1.msra.mxu0 %v635
    %637 = vmatprep.subr.mxu0 0.0
    %v638 = vand.u32 %v57, 4294901760
    %639 = vmatpush1.msra.mxu0 %v638
    %640 = vmatprep.subr.mxu0 0.0
    %v641 = vand.u32 %v58, 4294901760
    %642 = vmatpush1.msra.mxu0 %v641
    %643 = vmatprep.subr.mxu0 0.0
    %v644 = vand.u32 %v59, 4294901760
    %645 = vmatpush1.msra.mxu0 %v644
    %646 = vmatprep.subr.mxu0 0.0
    %v647 = vand.u32 %v60, 4294901760
    %648 = vmatpush1.msra.mxu0 %v647
    %649 = vmatprep.subr.mxu0 0.0
    %v650 = vand.u32 %v61, 4294901760
    %651 = vmatpush1.msra.mxu0 %v650
    %652 = vmatprep.subr.mxu0 0.0
    %v653 = vand.u32 %v62, 4294901760
    %654 = vmatpush1.msra.mxu0 %v653
    %655 = vmatprep.subr.mxu0 0.0
    %v656 = vand.u32 %v63, 4294901760
    %657 = vmatpush1.msra.mxu0 %v656
    %658 = vmatprep.subr.mxu0 0.0
    %v659 = vand.u32 %v64, 4294901760
    %660 = vmatpush1.msra.mxu0 %v659
    %661 = vmatprep.subr.mxu0 0.0
    %v662 = vand.u32 %v65, 4294901760
    %663 = vmatpush1.msra.mxu0 %v662
    %664 = vmatprep.subr.mxu0 0.0
    %v665 = vand.u32 %v66, 4294901760
    %666 = vmatpush1.msra.mxu0 %v665
    %667 = vmatprep.subr.mxu0 0.0
    %668 = vmatpush1.msra.mxu0 0.0
    %669 = vmatprep.subr.mxu0 0.0
    %670 = vmatpush1.msra.mxu0 0.0
    %671 = vmatprep.subr.mxu0 0.0
    %672 = vmatpush1.msra.mxu0 0.0
    %673 = vmatprep.subr.mxu0 0.0
    %674 = vmatpush1.msra.mxu0 0.0
    %675 = vmatprep.subr.mxu0 0.0
    %676 = vmatpush1.msra.mxu0 0.0
    %677 = vmatprep.subr.mxu0 0.0
    %678 = vmatpush1.msra.mxu0 0.0
    %679 = vmatprep.subr.mxu0 0.0
    %680 = vmatpush1.msra.mxu0 0.0
    %681 = vmatprep.subr.mxu0 0.0
    %682 = vmatpush1.msra.mxu0 0.0
    %683 = vmatprep.subr.mxu0 0.0
    %684 = vmatpush1.msra.mxu0 0.0
    %685 = vmatprep.subr.mxu0 0.0
    %686 = vmatpush1.msra.mxu0 0.0
    %687 = vmatprep.subr.mxu0 0.0
    %688 = vmatpush1.msra.mxu0 0.0
    %689 = vmatprep.subr.mxu0 0.0
    %690 = vmatpush1.msra.mxu0 0.0
    %691 = vmatprep.subr.mxu0 0.0
    %692 = vmatpush1.msra.mxu0 0.0
    %693 = vmatprep.subr.mxu0 0.0
    %694 = vmatpush1.msra.mxu0 0.0
    %695 = vmatprep.subr.mxu0 0.0
    %696 = vmatpush1.msra.mxu0 0.0
    %697 = vmatprep.subr.mxu0 0.0
    %698 = vmatpush1.msra.mxu0 0.0
    %699 = vmatprep.mubr.f32.mxu0 0.0
    %v700 = vand.u32 %v76, 4294901760
    %v701 = vsub.f32 %v76, %v700
    %v702 = vand.u32 %v701, 4294901760
    %v703 = vsub.f32 %v701, %v702
    %v704 = vand.u32 %v703, 4294901760
    %705 = vmatmul.mubr.f32.gmra.mrb[0].mxu0 %v704
    %v706 = vpop.f32.mrb[0].mxu0
    %v707 = vadd.f32 %v616, %v706
    %v708 = vpop.f32.mrb[0].mxu0
    %709 = vdwg.mxu0
    %710 = vmatprep.subr.mxu0 0.0
    %v711 = vand.u32 %v51, 4294901760
    %v712 = vsub.f32 %v51, %v711
    %v713 = vand.u32 %v712, 4294901760
    %v714 = vsub.f32 %v712, %v713
    %v715 = vand.u32 %v714, 4294901760
    %716 = vmatpush1.msra.mxu0 %v715
    %717 = vmatprep.subr.mxu0 0.0
    %v718 = vand.u32 %v52, 4294901760
    %v719 = vsub.f32 %v52, %v718
    %v720 = vand.u32 %v719, 4294901760
    %v721 = vsub.f32 %v719, %v720
    %v722 = vand.u32 %v721, 4294901760
    %723 = vmatpush1.msra.mxu0 %v722
    %724 = vmatprep.subr.mxu0 0.0
    %v725 = vand.u32 %v53, 4294901760
    %v726 = vsub.f32 %v53, %v725
    %v727 = vand.u32 %v726, 4294901760
    %v728 = vsub.f32 %v726, %v727
    %v729 = vand.u32 %v728, 4294901760
    %730 = vmatpush1.msra.mxu0 %v729
    %731 = vmatprep.subr.mxu0 0.0
    %v732 = vand.u32 %v54, 4294901760
    %v733 = vsub.f32 %v54, %v732
    %v734 = vand.u32 %v733, 4294901760
    %v735 = vsub.f32 %v733, %v734
    %v736 = vand.u32 %v735, 4294901760
    %737 = vmatpush1.msra.mxu0 %v736
    %738 = vmatprep.subr.mxu0 0.0
    %v739 = vand.u32 %v55, 4294901760
    %v740 = vsub.f32 %v55, %v739
    %v741 = vand.u32 %v740, 4294901760
    %v742 = vsub.f32 %v740, %v741
    %v743 = vand.u32 %v742, 4294901760
    %744 = vmatpush1.msra.mxu0 %v743
    %745 = vmatprep.subr.mxu0 0.0
    %v746 = vand.u32 %v56, 4294901760
    %v747 = vsub.f32 %v56, %v746
    %v748 = vand.u32 %v747, 4294901760
    %v749 = vsub.f32 %v747, %v748
    %v750 = vand.u32 %v749, 4294901760
    %751 = vmatpush1.msra.mxu0 %v750
    %752 = vmatprep.subr.mxu0 0.0
    %v753 = vand.u32 %v57, 4294901760
    %v754 = vsub.f32 %v57, %v753
    %v755 = vand.u32 %v754, 4294901760
    %v756 = vsub.f32 %v754, %v755
    %v757 = vand.u32 %v756, 4294901760
    %758 = vmatpush1.msra.mxu0 %v757
    %759 = vmatprep.subr.mxu0 0.0
    %v760 = vand.u32 %v58, 4294901760
    %v761 = vsub.f32 %v58, %v760
    %v762 = vand.u32 %v761, 4294901760
    %v763 = vsub.f32 %v761, %v762
    %v764 = vand.u32 %v763, 4294901760
    %765 = vmatpush1.msra.mxu0 %v764
    %766 = vmatprep.subr.mxu0 0.0
    %v767 = vand.u32 %v59, 4294901760
    %v768 = vsub.f32 %v59, %v767
    %v769 = vand.u32 %v768, 4294901760
    %v770 = vsub.f32 %v768, %v769
    %v771 = vand.u32 %v770, 4294901760
    %772 = vmatpush1.msra.mxu0 %v771
    %773 = vmatprep.subr.mxu0 0.0
    %v774 = vand.u32 %v60, 4294901760
    %v775 = vsub.f32 %v60, %v774
    %v776 = vand.u32 %v775, 4294901760
    %v777 = vsub.f32 %v775, %v776
    %v778 = vand.u32 %v777, 4294901760
    %779 = vmatpush1.msra.mxu0 %v778
    %780 = vmatprep.subr.mxu0 0.0
    %v781 = vand.u32 %v61, 4294901760
    %v782 = vsub.f32 %v61, %v781
    %v783 = vand.u32 %v782, 4294901760
    %v784 = vsub.f32 %v782, %v783
    %v785 = vand.u32 %v784, 4294901760
    %786 = vmatpush1.msra.mxu0 %v785
    %787 = vmatprep.subr.mxu0 0.0
    %v788 = vand.u32 %v62, 4294901760
    %v789 = vsub.f32 %v62, %v788
    %v790 = vand.u32 %v789, 4294901760
    %v791 = vsub.f32 %v789, %v790
    %v792 = vand.u32 %v791, 4294901760
    %793 = vmatpush1.msra.mxu0 %v792
    %794 = vmatprep.subr.mxu0 0.0
    %v795 = vand.u32 %v63, 4294901760
    %v796 = vsub.f32 %v63, %v795
    %v797 = vand.u32 %v796, 4294901760
    %v798 = vsub.f32 %v796, %v797
    %v799 = vand.u32 %v798, 4294901760
    %800 = vmatpush1.msra.mxu0 %v799
    %801 = vmatprep.subr.mxu0 0.0
    %v802 = vand.u32 %v64, 4294901760
    %v803 = vsub.f32 %v64, %v802
    %v804 = vand.u32 %v803, 4294901760
    %v805 = vsub.f32 %v803, %v804
    %v806 = vand.u32 %v805, 4294901760
    %807 = vmatpush1.msra.mxu0 %v806
    %808 = vmatprep.subr.mxu0 0.0
    %v809 = vand.u32 %v65, 4294901760
    %v810 = vsub.f32 %v65, %v809
    %v811 = vand.u32 %v810, 4294901760
    %v812 = vsub.f32 %v810, %v811
    %v813 = vand.u32 %v812, 4294901760
    %814 = vmatpush1.msra.mxu0 %v813
    %815 = vmatprep.subr.mxu0 0.0
    %v816 = vand.u32 %v66, 4294901760
    %v817 = vsub.f32 %v66, %v816
    %v818 = vand.u32 %v817, 4294901760
    %v819 = vsub.f32 %v817, %v818
    %v820 = vand.u32 %v819, 4294901760
    %821 = vmatpush1.msra.mxu0 %v820
    %822 = vmatprep.subr.mxu0 0.0
    %823 = vmatpush1.msra.mxu0 0.0
    %824 = vmatprep.subr.mxu0 0.0
    %825 = vmatpush1.msra.mxu0 0.0
    %826 = vmatprep.subr.mxu0 0.0
    %827 = vmatpush1.msra.mxu0 0.0
    %828 = vmatprep.subr.mxu0 0.0
    %829 = vmatpush1.msra.mxu0 0.0
    %830 = vmatprep.subr.mxu0 0.0
    %831 = vmatpush1.msra.mxu0 0.0
    %832 = vmatprep.subr.mxu0 0.0
    %833 = vmatpush1.msra.mxu0 0.0
    %834 = vmatprep.subr.mxu0 0.0
    %835 = vmatpush1.msra.mxu0 0.0
    %836 = vmatprep.subr.mxu0 0.0
    %837 = vmatpush1.msra.mxu0 0.0
    %838 = vmatprep.subr.mxu0 0.0
    %839 = vmatpush1.msra.mxu0 0.0
    %840 = vmatprep.subr.mxu0 0.0
    %841 = vmatpush1.msra.mxu0 0.0
    %842 = vmatprep.subr.mxu0 0.0
    %843 = vmatpush1.msra.mxu0 0.0
    %844 = vmatprep.subr.mxu0 0.0
    %845 = vmatpush1.msra.mxu0 0.0
    %846 = vmatprep.subr.mxu0 0.0
    %847 = vmatpush1.msra.mxu0 0.0
    %848 = vmatprep.subr.mxu0 0.0
    %849 = vmatpush1.msra.mxu0 0.0
    %850 = vmatprep.subr.mxu0 0.0
    %851 = vmatpush1.msra.mxu0 0.0
    %852 = vmatprep.subr.mxu0 0.0
    %853 = vmatpush1.msra.mxu0 0.0
    %854 = vmatprep.mubr.f32.mxu0 0.0
    %v855 = vand.u32 %v76, 4294901760
    %856 = vmatmul.mubr.f32.gmra.mrb[0].mxu0 %v855
    %v857 = vpop.f32.mrb[0].mxu0
    %v858 = vadd.f32 %v707, %v857
    %v859 = vpop.f32.mrb[0].mxu0
    %860 = vdwg.mxu0
    %861 = vmatprep.subr.mxu0 0.0
    %v862 = vand.u32 %v51, 4294901760
    %v863 = vsub.f32 %v51, %v862
    %864 = vmatpush1.msra.mxu0 %v863
    %865 = vmatprep.subr.mxu0 0.0
    %v866 = vand.u32 %v52, 4294901760
    %v867 = vsub.f32 %v52, %v866
    %868 = vmatpush1.msra.mxu0 %v867
    %869 = vmatprep.subr.mxu0 0.0
    %v870 = vand.u32 %v53, 4294901760
    %v871 = vsub.f32 %v53, %v870
    %872 = vmatpush1.msra.mxu0 %v871
    %873 = vmatprep.subr.mxu0 0.0
    %v874 = vand.u32 %v54, 4294901760
    %v875 = vsub.f32 %v54, %v874
    %876 = vmatpush1.msra.mxu0 %v875
    %877 = vmatprep.subr.mxu0 0.0
    %v878 = vand.u32 %v55, 4294901760
    %v879 = vsub.f32 %v55, %v878
    %880 = vmatpush1.msra.mxu0 %v879
    %881 = vmatprep.subr.mxu0 0.0
    %v882 = vand.u32 %v56, 4294901760
    %v883 = vsub.f32 %v56, %v882
    %884 = vmatpush1.msra.mxu0 %v883
    %885 = vmatprep.subr.mxu0 0.0
    %v886 = vand.u32 %v57, 4294901760
    %v887 = vsub.f32 %v57, %v886
    %888 = vmatpush1.msra.mxu0 %v887
    %889 = vmatprep.subr.mxu0 0.0
    %v890 = vand.u32 %v58, 4294901760
    %v891 = vsub.f32 %v58, %v890
    %892 = vmatpush1.msra.mxu0 %v891
    %893 = vmatprep.subr.mxu0 0.0
    %v894 = vand.u32 %v59, 4294901760
    %v895 = vsub.f32 %v59, %v894
    %896 = vmatpush1.msra.mxu0 %v895
    %897 = vmatprep.subr.mxu0 0.0
    %v898 = vand.u32 %v60, 4294901760
    %v899 = vsub.f32 %v60, %v898
    %900 = vmatpush1.msra.mxu0 %v899
    %901 = vmatprep.subr.mxu0 0.0
    %v902 = vand.u32 %v61, 4294901760
    %v903 = vsub.f32 %v61, %v902
    %904 = vmatpush1.msra.mxu0 %v903
    %905 = vmatprep.subr.mxu0 0.0
    %v906 = vand.u32 %v62, 4294901760
    %v907 = vsub.f32 %v62, %v906
    %908 = vmatpush1.msra.mxu0 %v907
    %909 = vmatprep.subr.mxu0 0.0
    %v910 = vand.u32 %v63, 4294901760
    %v911 = vsub.f32 %v63, %v910
    %912 = vmatpush1.msra.mxu0 %v911
    %913 = vmatprep.subr.mxu0 0.0
    %v914 = vand.u32 %v64, 4294901760
    %v915 = vsub.f32 %v64, %v914
    %916 = vmatpush1.msra.mxu0 %v915
    %917 = vmatprep.subr.mxu0 0.0
    %v918 = vand.u32 %v65, 4294901760
    %v919 = vsub.f32 %v65, %v918
    %920 = vmatpush1.msra.mxu0 %v919
    %921 = vmatprep.subr.mxu0 0.0
    %v922 = vand.u32 %v66, 4294901760
    %v923 = vsub.f32 %v66, %v922
    %924 = vmatpush1.msra.mxu0 %v923
    %925 = vmatprep.subr.mxu0 0.0
    %926 = vmatpush1.msra.mxu0 0.0
    %927 = vmatprep.subr.mxu0 0.0
    %928 = vmatpush1.msra.mxu0 0.0
    %929 = vmatprep.subr.mxu0 0.0
    %930 = vmatpush1.msra.mxu0 0.0
    %931 = vmatprep.subr.mxu0 0.0
    %932 = vmatpush1.msra.mxu0 0.0
    %933 = vmatprep.subr.mxu0 0.0
    %934 = vmatpush1.msra.mxu0 0.0
    %935 = vmatprep.subr.mxu0 0.0
    %936 = vmatpush1.msra.mxu0 0.0
    %937 = vmatprep.subr.mxu0 0.0
    %938 = vmatpush1.msra.mxu0 0.0
    %939 = vmatprep.subr.mxu0 0.0
    %940 = vmatpush1.msra.mxu0 0.0
    %941 = vmatprep.subr.mxu0 0.0
    %942 = vmatpush1.msra.mxu0 0.0
    %943 = vmatprep.subr.mxu0 0.0
    %944 = vmatpush1.msra.mxu0 0.0
    %945 = vmatprep.subr.mxu0 0.0
    %946 = vmatpush1.msra.mxu0 0.0
    %947 = vmatprep.subr.mxu0 0.0
    %948 = vmatpush1.msra.mxu0 0.0
    %949 = vmatprep.subr.mxu0 0.0
    %950 = vmatpush1.msra.mxu0 0.0
    %951 = vmatprep.subr.mxu0 0.0
    %952 = vmatpush1.msra.mxu0 0.0
    %953 = vmatprep.subr.mxu0 0.0
    %954 = vmatpush1.msra.mxu0 0.0
    %955 = vmatprep.subr.mxu0 0.0
    %956 = vmatpush1.msra.mxu0 0.0
    %957 = vmatprep.mubr.f32.mxu0 0.0
    %v958 = vand.u32 %v76, 4294901760
    %v959 = vsub.f32 %v76, %v958
    %960 = vmatmul.mubr.f32.gmra.mrb[0].mxu0 %v959
    %v961 = vpop.f32.mrb[0].mxu0
    %v962 = vadd.f32 %v858, %v961
    %v963 = vpop.f32.mrb[0].mxu0
    %964 = vdwg.mxu0
    %965 = vmatprep.subr.mxu0 0.0
    %v966 = vand.u32 %v51, 4294901760
    %967 = vmatpush1.msra.mxu0 %v966
    %968 = vmatprep.subr.mxu0 0.0
    %v969 = vand.u32 %v52, 4294901760
    %970 = vmatpush1.msra.mxu0 %v969
    %971 = vmatprep.subr.mxu0 0.0
    %v972 = vand.u32 %v53, 4294901760
    %973 = vmatpush1.msra.mxu0 %v972
    %974 = vmatprep.subr.mxu0 0.0
    %v975 = vand.u32 %v54, 4294901760
    %976 = vmatpush1.msra.mxu0 %v975
    %977 = vmatprep.subr.mxu0 0.0
    %v978 = vand.u32 %v55, 4294901760
    %979 = vmatpush1.msra.mxu0 %v978
    %980 = vmatprep.subr.mxu0 0.0
    %v981 = vand.u32 %v56, 4294901760
    %982 = vmatpush1.msra.mxu0 %v981
    %983 = vmatprep.subr.mxu0 0.0
    %v984 = vand.u32 %v57, 4294901760
    %985 = vmatpush1.msra.mxu0 %v984
    %986 = vmatprep.subr.mxu0 0.0
    %v987 = vand.u32 %v58, 4294901760
    %988 = vmatpush1.msra.mxu0 %v987
    %989 = vmatprep.subr.mxu0 0.0
    %v990 = vand.u32 %v59, 4294901760
    %991 = vmatpush1.msra.mxu0 %v990
    %992 = vmatprep.subr.mxu0 0.0
    %v993 = vand.u32 %v60, 4294901760
    %994 = vmatpush1.msra.mxu0 %v993
    %995 = vmatprep.subr.mxu0 0.0
    %v996 = vand.u32 %v61, 4294901760
    %997 = vmatpush1.msra.mxu0 %v996
    %998 = vmatprep.subr.mxu0 0.0
    %v999 = vand.u32 %v62, 4294901760
    %1000 = vmatpush1.msra.mxu0 %v999
    %1001 = vmatprep.subr.mxu0 0.0
    %v1002 = vand.u32 %v63, 4294901760
    %1003 = vmatpush1.msra.mxu0 %v1002
    %1004 = vmatprep.subr.mxu0 0.0
    %v1005 = vand.u32 %v64, 4294901760
    %1006 = vmatpush1.msra.mxu0 %v1005
    %1007 = vmatprep.subr.mxu0 0.0
    %v1008 = vand.u32 %v65, 4294901760
    %1009 = vmatpush1.msra.mxu0 %v1008
    %1010 = vmatprep.subr.mxu0 0.0
    %v1011 = vand.u32 %v66, 4294901760
    %1012 = vmatpush1.msra.mxu0 %v1011
    %1013 = vmatprep.subr.mxu0 0.0
    %1014 = vmatpush1.msra.mxu0 0.0
    %1015 = vmatprep.subr.mxu0 0.0
    %1016 = vmatpush1.msra.mxu0 0.0
    %1017 = vmatprep.subr.mxu0 0.0
    %1018 = vmatpush1.msra.mxu0 0.0
    %1019 = vmatprep.subr.mxu0 0.0
    %1020 = vmatpush1.msra.mxu0 0.0
    %1021 = vmatprep.subr.mxu0 0.0
    %1022 = vmatpush1.msra.mxu0 0.0
    %1023 = vmatprep.subr.mxu0 0.0
    %1024 = vmatpush1.msra.mxu0 0.0
    %1025 = vmatprep.subr.mxu0 0.0
    %1026 = vmatpush1.msra.mxu0 0.0
    %1027 = vmatprep.subr.mxu0 0.0
    %1028 = vmatpush1.msra.mxu0 0.0
    %1029 = vmatprep.subr.mxu0 0.0
    %1030 = vmatpush1.msra.mxu0 0.0
    %1031 = vmatprep.subr.mxu0 0.0
    %1032 = vmatpush1.msra.mxu0 0.0
    %1033 = vmatprep.subr.mxu0 0.0
    %1034 = vmatpush1.msra.mxu0 0.0
    %1035 = vmatprep.subr.mxu0 0.0
    %1036 = vmatpush1.msra.mxu0 0.0
    %1037 = vmatprep.subr.mxu0 0.0
    %1038 = vmatpush1.msra.mxu0 0.0
    %1039 = vmatprep.subr.mxu0 0.0
    %1040 = vmatpush1.msra.mxu0 0.0
    %1041 = vmatprep.subr.mxu0 0.0
    %1042 = vmatpush1.msra.mxu0 0.0
    %1043 = vmatprep.subr.mxu0 0.0
    %1044 = vmatpush1.msra.mxu0 0.0
    %1045 = vmatprep.mubr.f32.mxu0 0.0
    %v1046 = vand.u32 %v76, 4294901760
    %v1047 = vsub.f32 %v76, %v1046
    %v1048 = vand.u32 %v1047, 4294901760
    %1049 = vmatmul.mubr.f32.gmra.mrb[0].mxu0 %v1048
    %v1050 = vpop.f32.mrb[0].mxu0
    %v1051 = vadd.f32 %v962, %v1050
    %v1052 = vpop.f32.mrb[0].mxu0
    %1053 = vdwg.mxu0
    %1054 = vmatprep.subr.mxu0 0.0
    %v1055 = vand.u32 %v51, 4294901760
    %v1056 = vsub.f32 %v51, %v1055
    %v1057 = vand.u32 %v1056, 4294901760
    %1058 = vmatpush1.msra.mxu0 %v1057
    %1059 = vmatprep.subr.mxu0 0.0
    %v1060 = vand.u32 %v52, 4294901760
    %v1061 = vsub.f32 %v52, %v1060
    %v1062 = vand.u32 %v1061, 4294901760
    %1063 = vmatpush1.msra.mxu0 %v1062
    %1064 = vmatprep.subr.mxu0 0.0
    %v1065 = vand.u32 %v53, 4294901760
    %v1066 = vsub.f32 %v53, %v1065
    %v1067 = vand.u32 %v1066, 4294901760
    %1068 = vmatpush1.msra.mxu0 %v1067
    %1069 = vmatprep.subr.mxu0 0.0
    %v1070 = vand.u32 %v54, 4294901760
    %v1071 = vsub.f32 %v54, %v1070
    %v1072 = vand.u32 %v1071, 4294901760
    %1073 = vmatpush1.msra.mxu0 %v1072
    %1074 = vmatprep.subr.mxu0 0.0
    %v1075 = vand.u32 %v55, 4294901760
    %v1076 = vsub.f32 %v55, %v1075
    %v1077 = vand.u32 %v1076, 4294901760
    %1078 = vmatpush1.msra.mxu0 %v1077
    %1079 = vmatprep.subr.mxu0 0.0
    %v1080 = vand.u32 %v56, 4294901760
    %v1081 = vsub.f32 %v56, %v1080
    %v1082 = vand.u32 %v1081, 4294901760
    %1083 = vmatpush1.msra.mxu0 %v1082
    %1084 = vmatprep.subr.mxu0 0.0
    %v1085 = vand.u32 %v57, 4294901760
    %v1086 = vsub.f32 %v57, %v1085
    %v1087 = vand.u32 %v1086, 4294901760
    %1088 = vmatpush1.msra.mxu0 %v1087
    %1089 = vmatprep.subr.mxu0 0.0
    %v1090 = vand.u32 %v58, 4294901760
    %v1091 = vsub.f32 %v58, %v1090
    %v1092 = vand.u32 %v1091, 4294901760
    %1093 = vmatpush1.msra.mxu0 %v1092
    %1094 = vmatprep.subr.mxu0 0.0
    %v1095 = vand.u32 %v59, 4294901760
    %v1096 = vsub.f32 %v59, %v1095
    %v1097 = vand.u32 %v1096, 4294901760
    %1098 = vmatpush1.msra.mxu0 %v1097
    %1099 = vmatprep.subr.mxu0 0.0
    %v1100 = vand.u32 %v60, 4294901760
    %v1101 = vsub.f32 %v60, %v1100
    %v1102 = vand.u32 %v1101, 4294901760
    %1103 = vmatpush1.msra.mxu0 %v1102
    %1104 = vmatprep.subr.mxu0 0.0
    %v1105 = vand.u32 %v61, 4294901760
    %v1106 = vsub.f32 %v61, %v1105
    %v1107 = vand.u32 %v1106, 4294901760
    %1108 = vmatpush1.msra.mxu0 %v1107
    %1109 = vmatprep.subr.mxu0 0.0
    %v1110 = vand.u32 %v62, 4294901760
    %v1111 = vsub.f32 %v62, %v1110
    %v1112 = vand.u32 %v1111, 4294901760
    %1113 = vmatpush1.msra.mxu0 %v1112
    %1114 = vmatprep.subr.mxu0 0.0
    %v1115 = vand.u32 %v63, 4294901760
    %v1116 = vsub.f32 %v63, %v1115
    %v1117 = vand.u32 %v1116, 4294901760
    %1118 = vmatpush1.msra.mxu0 %v1117
    %1119 = vmatprep.subr.mxu0 0.0
    %v1120 = vand.u32 %v64, 4294901760
    %v1121 = vsub.f32 %v64, %v1120
    %v1122 = vand.u32 %v1121, 4294901760
    %1123 = vmatpush1.msra.mxu0 %v1122
    %1124 = vmatprep.subr.mxu0 0.0
    %v1125 = vand.u32 %v65, 4294901760
    %v1126 = vsub.f32 %v65, %v1125
    %v1127 = vand.u32 %v1126, 4294901760
    %1128 = vmatpush1.msra.mxu0 %v1127
    %1129 = vmatprep.subr.mxu0 0.0
    %v1130 = vand.u32 %v66, 4294901760
    %v1131 = vsub.f32 %v66, %v1130
    %v1132 = vand.u32 %v1131, 4294901760
    %1133 = vmatpush1.msra.mxu0 %v1132
    %1134 = vmatprep.subr.mxu0 0.0
    %1135 = vmatpush1.msra.mxu0 0.0
    %1136 = vmatprep.subr.mxu0 0.0
    %1137 = vmatpush1.msra.mxu0 0.0
    %1138 = vmatprep.subr.mxu0 0.0
    %1139 = vmatpush1.msra.mxu0 0.0
    %1140 = vmatprep.subr.mxu0 0.0
    %1141 = vmatpush1.msra.mxu0 0.0
    %1142 = vmatprep.subr.mxu0 0.0
    %1143 = vmatpush1.msra.mxu0 0.0
    %1144 = vmatprep.subr.mxu0 0.0
    %1145 = vmatpush1.msra.mxu0 0.0
    %1146 = vmatprep.subr.mxu0 0.0
    %1147 = vmatpush1.msra.mxu0 0.0
    %1148 = vmatprep.subr.mxu0 0.0
    %1149 = vmatpush1.msra.mxu0 0.0
    %1150 = vmatprep.subr.mxu0 0.0
    %1151 = vmatpush1.msra.mxu0 0.0
    %1152 = vmatprep.subr.mxu0 0.0
    %1153 = vmatpush1.msra.mxu0 0.0
    %1154 = vmatprep.subr.mxu0 0.0
    %1155 = vmatpush1.msra.mxu0 0.0
    %1156 = vmatprep.subr.mxu0 0.0
    %1157 = vmatpush1.msra.mxu0 0.0
    %1158 = vmatprep.subr.mxu0 0.0
    %1159 = vmatpush1.msra.mxu0 0.0
    %1160 = vmatprep.subr.mxu0 0.0
    %1161 = vmatpush1.msra.mxu0 0.0
    %1162 = vmatprep.subr.mxu0 0.0
    %1163 = vmatpush1.msra.mxu0 0.0
    %1164 = vmatprep.subr.mxu0 0.0
    %1165 = vmatpush1.msra.mxu0 0.0
    %1166 = vmatprep.mubr.f32.mxu0 0.0
    %v1167 = vand.u32 %v76, 4294901760
    %1168 = vmatmul.mubr.f32.gmra.mrb[0].mxu0 %v1167
    %v1169 = vpop.f32.mrb[0].mxu0
    %v1170 = vadd.f32 %v1051, %v1169
    %v1171 = vpop.f32.mrb[0].mxu0
    %1172 = vdwg.mxu0
    %1173 = vmatprep.subr.mxu0 0.0
    %v1174 = vand.u32 %v51, 4294901760
    %1175 = vmatpush1.msra.mxu0 %v1174
    %1176 = vmatprep.subr.mxu0 0.0
    %v1177 = vand.u32 %v52, 4294901760
    %1178 = vmatpush1.msra.mxu0 %v1177
    %1179 = vmatprep.subr.mxu0 0.0
    %v1180 = vand.u32 %v53, 4294901760
    %1181 = vmatpush1.msra.mxu0 %v1180
    %1182 = vmatprep.subr.mxu0 0.0
    %v1183 = vand.u32 %v54, 4294901760
    %1184 = vmatpush1.msra.mxu0 %v1183
    %1185 = vmatprep.subr.mxu0 0.0
    %v1186 = vand.u32 %v55, 4294901760
    %1187 = vmatpush1.msra.mxu0 %v1186
    %1188 = vmatprep.subr.mxu0 0.0
    %v1189 = vand.u32 %v56, 4294901760
    %1190 = vmatpush1.msra.mxu0 %v1189
    %1191 = vmatprep.subr.mxu0 0.0
    %v1192 = vand.u32 %v57, 4294901760
    %1193 = vmatpush1.msra.mxu0 %v1192
    %1194 = vmatprep.subr.mxu0 0.0
    %v1195 = vand.u32 %v58, 4294901760
    %1196 = vmatpush1.msra.mxu0 %v1195
    %1197 = vmatprep.subr.mxu0 0.0
    %v1198 = vand.u32 %v59, 4294901760
    %1199 = vmatpush1.msra.mxu0 %v1198
    %1200 = vmatprep.subr.mxu0 0.0
    %v1201 = vand.u32 %v60, 4294901760
    %1202 = vmatpush1.msra.mxu0 %v1201
    %1203 = vmatprep.subr.mxu0 0.0
    %v1204 = vand.u32 %v61, 4294901760
    %1205 = vmatpush1.msra.mxu0 %v1204
    %1206 = vmatprep.subr.mxu0 0.0
    %v1207 = vand.u32 %v62, 4294901760
    %1208 = vmatpush1.msra.mxu0 %v1207
    %1209 = vmatprep.subr.mxu0 0.0
    %v1210 = vand.u32 %v63, 4294901760
    %1211 = vmatpush1.msra.mxu0 %v1210
    %1212 = vmatprep.subr.mxu0 0.0
    %v1213 = vand.u32 %v64, 4294901760
    %1214 = vmatpush1.msra.mxu0 %v1213
    %1215 = vmatprep.subr.mxu0 0.0
    %v1216 = vand.u32 %v65, 4294901760
    %1217 = vmatpush1.msra.mxu0 %v1216
    %1218 = vmatprep.subr.mxu0 0.0
    %v1219 = vand.u32 %v66, 4294901760
    %1220 = vmatpush1.msra.mxu0 %v1219
    %1221 = vmatprep.subr.mxu0 0.0
    %1222 = vmatpush1.msra.mxu0 0.0
    %1223 = vmatprep.subr.mxu0 0.0
    %1224 = vmatpush1.msra.mxu0 0.0
    %1225 = vmatprep.subr.mxu0 0.0
    %1226 = vmatpush1.msra.mxu0 0.0
    %1227 = vmatprep.subr.mxu0 0.0
    %1228 = vmatpush1.msra.mxu0 0.0
    %1229 = vmatprep.subr.mxu0 0.0
    %1230 = vmatpush1.msra.mxu0 0.0
    %1231 = vmatprep.subr.mxu0 0.0
    %1232 = vmatpush1.msra.mxu0 0.0
    %1233 = vmatprep.subr.mxu0 0.0
    %1234 = vmatpush1.msra.mxu0 0.0
    %1235 = vmatprep.subr.mxu0 0.0
    %1236 = vmatpush1.msra.mxu0 0.0
    %1237 = vmatprep.subr.mxu0 0.0
    %1238 = vmatpush1.msra.mxu0 0.0
    %1239 = vmatprep.subr.mxu0 0.0
    %1240 = vmatpush1.msra.mxu0 0.0
    %1241 = vmatprep.subr.mxu0 0.0
    %1242 = vmatpush1.msra.mxu0 0.0
    %1243 = vmatprep.subr.mxu0 0.0
    %1244 = vmatpush1.msra.mxu0 0.0
    %1245 = vmatprep.subr.mxu0 0.0
    %1246 = vmatpush1.msra.mxu0 0.0
    %1247 = vmatprep.subr.mxu0 0.0
    %1248 = vmatpush1.msra.mxu0 0.0
    %1249 = vmatprep.subr.mxu0 0.0
    %1250 = vmatpush1.msra.mxu0 0.0
    %1251 = vmatprep.subr.mxu0 0.0
    %1252 = vmatpush1.msra.mxu0 0.0
    %1253 = vmatprep.mubr.f32.mxu0 0.0
    %v1254 = vand.u32 %v76, 4294901760
    %1255 = vmatmul.mubr.f32.gmra.mrb[0].mxu0 %v1254
    %v1256 = vpop.f32.mrb[0].mxu0
    %v1257 = vadd.f32 %v1170, %v1256
    %v1258 = vpop.f32.mrb[0].mxu0
    %1259 = vdwg.mxu0
    %v1260 = vlaneseq
    %v1261 = vshrl.u32 %v1260, 7
    %v1262 = vsub.s32 0, %v1261
    %v1263 = vrot.slane %v75, %v1262
    %v1264 = vadd.f32 %v1257, %v1263
    %v1265 = vmax.f32 %v1264, 0.0
    %v1266 = vld [vmem:[#allocation6 + $0xc8] sm:$0xff]
    %v1267 = vld [vmem:[#allocation6 + $0xd0] sm:$0xff]
    %v1268 = vld [vmem:[#allocation6 + $0xd8] sm:$0xff]
    %v1269 = vld [vmem:[#allocation6 + $0xe0] sm:$0xff]
    %v1270 = vld [vmem:[#allocation6 + $0xe8] sm:$0xff]
    %v1271 = vld [vmem:[#allocation6 + $0xf0] sm:$0xff]
    %v1272 = vld [vmem:[#allocation6 + $0xf8] sm:$0xff]
    %v1273 = vld [vmem:[#allocation6 + $0x100] sm:$0xff]
    %v1274 = vld [vmem:[#allocation6 + $0x108] sm:$0xff]
    %v1275 = vld [vmem:[#allocation6 + $0x110] sm:$0xff]
    %v1276 = vld [vmem:[#allocation6 + $0x118] sm:$0xff]
    %v1277 = vld [vmem:[#allocation6 + $0x120] sm:$0xff]
    %v1278 = vld [vmem:[#allocation6 + $0x128] sm:$0xff]
    %v1279 = vld [vmem:[#allocation6 + $0x130] sm:$0xff]
    %v1280 = vld [vmem:[#allocation6 + $0x138] sm:$0xff]
    %v1281 = vld [vmem:[#allocation6 + $0x140] sm:$0xff]
    %v1282 = vld [vmem:[#allocation6 + $0x1c8] sm:$0x1]
    %v1283 = vlaneseq
    %v1284 = vshrl.u32 %v1283, 7
    %v1285 = vsub.s32 0, %v1284
    %v1286 = vrot.slane %v1282, %v1285
    %1287 = vmatprep.subr.mxu0 0.0
    %v1288 = vand.u32 %v1266, 4294901760
    %1289 = vmatpush1.msra.mxu0 %v1288
    %1290 = vmatprep.subr.mxu0 0.0
    %v1291 = vand.u32 %v1267, 4294901760
    %1292 = vmatpush1.msra.mxu0 %v1291
    %1293 = vmatprep.subr.mxu0 0.0
    %v1294 = vand.u32 %v1268, 4294901760
    %1295 = vmatpush1.msra.mxu0 %v1294
    %1296 = vmatprep.subr.mxu0 0.0
    %v1297 = vand.u32 %v1269, 4294901760
    %1298 = vmatpush1.msra.mxu0 %v1297
    %1299 = vmatprep.subr.mxu0 0.0
    %v1300 = vand.u32 %v1270, 4294901760
    %1301 = vmatpush1.msra.mxu0 %v1300
    %1302 = vmatprep.subr.mxu0 0.0
    %v1303 = vand.u32 %v1271, 4294901760
    %1304 = vmatpush1.msra.mxu0 %v1303
    %1305 = vmatprep.subr.mxu0 0.0
    %v1306 = vand.u32 %v1272, 4294901760
    %1307 = vmatpush1.msra.mxu0 %v1306
    %1308 = vmatprep.subr.mxu0 0.0
    %v1309 = vand.u32 %v1273, 4294901760
    %1310 = vmatpush1.msra.mxu0 %v1309
    %1311 = vmatprep.subr.mxu0 0.0
    %v1312 = vand.u32 %v1274, 4294901760
    %1313 = vmatpush1.msra.mxu0 %v1312
    %1314 = vmatprep.subr.mxu0 0.0
    %v1315 = vand.u32 %v1275, 4294901760
    %1316 = vmatpush1.msra.mxu0 %v1315
    %1317 = vmatprep.subr.mxu0 0.0
    %v1318 = vand.u32 %v1276, 4294901760
    %1319 = vmatpush1.msra.mxu0 %v1318
    %1320 = vmatprep.subr.mxu0 0.0
    %v1321 = vand.u32 %v1277, 4294901760
    %1322 = vmatpush1.msra.mxu0 %v1321
    %1323 = vmatprep.subr.mxu0 0.0
    %v1324 = vand.u32 %v1278, 4294901760
    %1325 = vmatpush1.msra.mxu0 %v1324
    %1326 = vmatprep.subr.mxu0 0.0
    %v1327 = vand.u32 %v1279, 4294901760
    %1328 = vmatpush1.msra.mxu0 %v1327
    %1329 = vmatprep.subr.mxu0 0.0
    %v1330 = vand.u32 %v1280, 4294901760
    %1331 = vmatpush1.msra.mxu0 %v1330
    %1332 = vmatprep.subr.mxu0 0.0
    %v1333 = vand.u32 %v1281, 4294901760
    %1334 = vmatpush1.msra.mxu0 %v1333
    %1335 = vmatprep.subr.mxu0 0.0
    %1336 = vmatpush1.msra.mxu0 0.0
    %1337 = vmatprep.subr.mxu0 0.0
    %1338 = vmatpush1.msra.mxu0 0.0
    %1339 = vmatprep.subr.mxu0 0.0
    %1340 = vmatpush1.msra.mxu0 0.0
    %1341 = vmatprep.subr.mxu0 0.0
    %1342 = vmatpush1.msra.mxu0 0.0
    %1343 = vmatprep.subr.mxu0 0.0
    %1344 = vmatpush1.msra.mxu0 0.0
    %1345 = vmatprep.subr.mxu0 0.0
    %1346 = vmatpush1.msra.mxu0 0.0
    %1347 = vmatprep.subr.mxu0 0.0
    %1348 = vmatpush1.msra.mxu0 0.0
    %1349 = vmatprep.subr.mxu0 0.0
    %1350 = vmatpush1.msra.mxu0 0.0
    %1351 = vmatprep.subr.mxu0 0.0
    %1352 = vmatpush1.msra.mxu0 0.0
    %1353 = vmatprep.subr.mxu0 0.0
    %1354 = vmatpush1.msra.mxu0 0.0
    %1355 = vmatprep.subr.mxu0 0.0
    %1356 = vmatpush1.msra.mxu0 0.0
    %1357 = vmatprep.subr.mxu0 0.0
    %1358 = vmatpush1.msra.mxu0 0.0
    %1359 = vmatprep.subr.mxu0 0.0
    %1360 = vmatpush1.msra.mxu0 0.0
    %1361 = vmatprep.subr.mxu0 0.0
    %1362 = vmatpush1.msra.mxu0 0.0
    %1363 = vmatprep.subr.mxu0 0.0
    %1364 = vmatpush1.msra.mxu0 0.0
    %1365 = vmatprep.subr.mxu0 0.0
    %1366 = vmatpush1.msra.mxu0 0.0
    %1367 = vmatprep.mubr.f32.mxu0 0.0
    %v1368 = vand.u32 %v1265, 4294901760
    %v1369 = vsub.f32 %v1265, %v1368
    %v1370 = vand.u32 %v1369, 4294901760
    %v1371 = vsub.f32 %v1369, %v1370
    %v1372 = vand.u32 %v1371, 4294901760
    %1373 = vmatmul.mubr.f32.gmra.mrb[0].mxu0 %v1372
    %v1374 = vpop.f32.mrb[0].mxu0
    %v1375 = vadd.f32 %v1286, %v1374
    %v1376 = vpop.f32.mrb[0].mxu0
    %1377 = vdwg.mxu0
    %1378 = vmatprep.subr.mxu0 0.0
    %v1379 = vand.u32 %v1266, 4294901760
    %v1380 = vsub.f32 %v1266, %v1379
    %v1381 = vand.u32 %v1380, 4294901760
    %v1382 = vsub.f32 %v1380, %v1381
    %v1383 = vand.u32 %v1382, 4294901760
    %1384 = vmatpush1.msra.mxu0 %v1383
    %1385 = vmatprep.subr.mxu0 0.0
    %v1386 = vand.u32 %v1267, 4294901760
    %v1387 = vsub.f32 %v1267, %v1386
    %v1388 = vand.u32 %v1387, 4294901760
    %v1389 = vsub.f32 %v1387, %v1388
    %v1390 = vand.u32 %v1389, 4294901760
    %1391 = vmatpush1.msra.mxu0 %v1390
    %1392 = vmatprep.subr.mxu0 0.0
    %v1393 = vand.u32 %v1268, 4294901760
    %v1394 = vsub.f32 %v1268, %v1393
    %v1395 = vand.u32 %v1394, 4294901760
    %v1396 = vsub.f32 %v1394, %v1395
    %v1397 = vand.u32 %v1396, 4294901760
    %1398 = vmatpush1.msra.mxu0 %v1397
    %1399 = vmatprep.subr.mxu0 0.0
    %v1400 = vand.u32 %v1269, 4294901760
    %v1401 = vsub.f32 %v1269, %v1400
    %v1402 = vand.u32 %v1401, 4294901760
    %v1403 = vsub.f32 %v1401, %v1402
    %v1404 = vand.u32 %v1403, 4294901760
    %1405 = vmatpush1.msra.mxu0 %v1404
    %1406 = vmatprep.subr.mxu0 0.0
    %v1407 = vand.u32 %v1270, 4294901760
    %v1408 = vsub.f32 %v1270, %v1407
    %v1409 = vand.u32 %v1408, 4294901760
    %v1410 = vsub.f32 %v1408, %v1409
    %v1411 = vand.u32 %v1410, 4294901760
    %1412 = vmatpush1.msra.mxu0 %v1411
    %1413 = vmatprep.subr.mxu0 0.0
    %v1414 = vand.u32 %v1271, 4294901760
    %v1415 = vsub.f32 %v1271, %v1414
    %v1416 = vand.u32 %v1415, 4294901760
    %v1417 = vsub.f32 %v1415, %v1416
    %v1418 = vand.u32 %v1417, 4294901760
    %1419 = vmatpush1.msra.mxu0 %v1418
    %1420 = vmatprep.subr.mxu0 0.0
    %v1421 = vand.u32 %v1272, 4294901760
    %v1422 = vsub.f32 %v1272, %v1421
    %v1423 = vand.u32 %v1422, 4294901760
    %v1424 = vsub.f32 %v1422, %v1423
    %v1425 = vand.u32 %v1424, 4294901760
    %1426 = vmatpush1.msra.mxu0 %v1425
    %1427 = vmatprep.subr.mxu0 0.0
    %v1428 = vand.u32 %v1273, 4294901760
    %v1429 = vsub.f32 %v1273, %v1428
    %v1430 = vand.u32 %v1429, 4294901760
    %v1431 = vsub.f32 %v1429, %v1430
    %v1432 = vand.u32 %v1431, 4294901760
    %1433 = vmatpush1.msra.mxu0 %v1432
    %1434 = vmatprep.subr.mxu0 0.0
    %v1435 = vand.u32 %v1274, 4294901760
    %v1436 = vsub.f32 %v1274, %v1435
    %v1437 = vand.u32 %v1436, 4294901760
    %v1438 = vsub.f32 %v1436, %v1437
    %v1439 = vand.u32 %v1438, 4294901760
    %1440 = vmatpush1.msra.mxu0 %v1439
    %1441 = vmatprep.subr.mxu0 0.0
    %v1442 = vand.u32 %v1275, 4294901760
    %v1443 = vsub.f32 %v1275, %v1442
    %v1444 = vand.u32 %v1443, 4294901760
    %v1445 = vsub.f32 %v1443, %v1444
    %v1446 = vand.u32 %v1445, 4294901760
    %1447 = vmatpush1.msra.mxu0 %v1446
    %1448 = vmatprep.subr.mxu0 0.0
    %v1449 = vand.u32 %v1276, 4294901760
    %v1450 = vsub.f32 %v1276, %v1449
    %v1451 = vand.u32 %v1450, 4294901760
    %v1452 = vsub.f32 %v1450, %v1451
    %v1453 = vand.u32 %v1452, 4294901760
    %1454 = vmatpush1.msra.mxu0 %v1453
    %1455 = vmatprep.subr.mxu0 0.0
    %v1456 = vand.u32 %v1277, 4294901760
    %v1457 = vsub.f32 %v1277, %v1456
    %v1458 = vand.u32 %v1457, 4294901760
    %v1459 = vsub.f32 %v1457, %v1458
    %v1460 = vand.u32 %v1459, 4294901760
    %1461 = vmatpush1.msra.mxu0 %v1460
    %1462 = vmatprep.subr.mxu0 0.0
    %v1463 = vand.u32 %v1278, 4294901760
    %v1464 = vsub.f32 %v1278, %v1463
    %v1465 = vand.u32 %v1464, 4294901760
    %v1466 = vsub.f32 %v1464, %v1465
    %v1467 = vand.u32 %v1466, 4294901760
    %1468 = vmatpush1.msra.mxu0 %v1467
    %1469 = vmatprep.subr.mxu0 0.0
    %v1470 = vand.u32 %v1279, 4294901760
    %v1471 = vsub.f32 %v1279, %v1470
    %v1472 = vand.u32 %v1471, 4294901760
    %v1473 = vsub.f32 %v1471, %v1472
    %v1474 = vand.u32 %v1473, 4294901760
    %1475 = vmatpush1.msra.mxu0 %v1474
    %1476 = vmatprep.subr.mxu0 0.0
    %v1477 = vand.u32 %v1280, 4294901760
    %v1478 = vsub.f32 %v1280, %v1477
    %v1479 = vand.u32 %v1478, 4294901760
    %v1480 = vsub.f32 %v1478, %v1479
    %v1481 = vand.u32 %v1480, 4294901760
    %1482 = vmatpush1.msra.mxu0 %v1481
    %1483 = vmatprep.subr.mxu0 0.0
    %v1484 = vand.u32 %v1281, 4294901760
    %v1485 = vsub.f32 %v1281, %v1484
    %v1486 = vand.u32 %v1485, 4294901760
    %v1487 = vsub.f32 %v1485, %v1486
    %v1488 = vand.u32 %v1487, 4294901760
    %1489 = vmatpush1.msra.mxu0 %v1488
    %1490 = vmatprep.subr.mxu0 0.0
    %1491 = vmatpush1.msra.mxu0 0.0
    %1492 = vmatprep.subr.mxu0 0.0
    %1493 = vmatpush1.msra.mxu0 0.0
    %1494 = vmatprep.subr.mxu0 0.0
    %1495 = vmatpush1.msra.mxu0 0.0
    %1496 = vmatprep.subr.mxu0 0.0
    %1497 = vmatpush1.msra.mxu0 0.0
    %1498 = vmatprep.subr.mxu0 0.0
    %1499 = vmatpush1.msra.mxu0 0.0
    %1500 = vmatprep.subr.mxu0 0.0
    %1501 = vmatpush1.msra.mxu0 0.0
    %1502 = vmatprep.subr.mxu0 0.0
    %1503 = vmatpush1.msra.mxu0 0.0
    %1504 = vmatprep.subr.mxu0 0.0
    %1505 = vmatpush1.msra.mxu0 0.0
    %1506 = vmatprep.subr.mxu0 0.0
    %1507 = vmatpush1.msra.mxu0 0.0
    %1508 = vmatprep.subr.mxu0 0.0
    %1509 = vmatpush1.msra.mxu0 0.0
    %1510 = vmatprep.subr.mxu0 0.0
    %1511 = vmatpush1.msra.mxu0 0.0
    %1512 = vmatprep.subr.mxu0 0.0
    %1513 = vmatpush1.msra.mxu0 0.0
    %1514 = vmatprep.subr.mxu0 0.0
    %1515 = vmatpush1.msra.mxu0 0.0
    %1516 = vmatprep.subr.mxu0 0.0
    %1517 = vmatpush1.msra.mxu0 0.0
    %1518 = vmatprep.subr.mxu0 0.0
    %1519 = vmatpush1.msra.mxu0 0.0
    %1520 = vmatprep.subr.mxu0 0.0
    %1521 = vmatpush1.msra.mxu0 0.0
    %1522 = vmatprep.mubr.f32.mxu0 0.0
    %v1523 = vand.u32 %v1265, 4294901760
    %1524 = vmatmul.mubr.f32.gmra.mrb[0].mxu0 %v1523
    %v1525 = vpop.f32.mrb[0].mxu0
    %v1526 = vadd.f32 %v1375, %v1525
    %v1527 = vpop.f32.mrb[0].mxu0
    %1528 = vdwg.mxu0
    %1529 = vmatprep.subr.mxu0 0.0
    %v1530 = vand.u32 %v1266, 4294901760
    %v1531 = vsub.f32 %v1266, %v1530
    %1532 = vmatpush1.msra.mxu0 %v1531
    %1533 = vmatprep.subr.mxu0 0.0
    %v1534 = vand.u32 %v1267, 4294901760
    %v1535 = vsub.f32 %v1267, %v1534
    %1536 = vmatpush1.msra.mxu0 %v1535
    %1537 = vmatprep.subr.mxu0 0.0
    %v1538 = vand.u32 %v1268, 4294901760
    %v1539 = vsub.f32 %v1268, %v1538
    %1540 = vmatpush1.msra.mxu0 %v1539
    %1541 = vmatprep.subr.mxu0 0.0
    %v1542 = vand.u32 %v1269, 4294901760
    %v1543 = vsub.f32 %v1269, %v1542
    %1544 = vmatpush1.msra.mxu0 %v1543
    %1545 = vmatprep.subr.mxu0 0.0
    %v1546 = vand.u32 %v1270, 4294901760
    %v1547 = vsub.f32 %v1270, %v1546
    %1548 = vmatpush1.msra.mxu0 %v1547
    %1549 = vmatprep.subr.mxu0 0.0
    %v1550 = vand.u32 %v1271, 4294901760
    %v1551 = vsub.f32 %v1271, %v1550
    %1552 = vmatpush1.msra.mxu0 %v1551
    %1553 = vmatprep.subr.mxu0 0.0
    %v1554 = vand.u32 %v1272, 4294901760
    %v1555 = vsub.f32 %v1272, %v1554
    %1556 = vmatpush1.msra.mxu0 %v1555
    %1557 = vmatprep.subr.mxu0 0.0
    %v1558 = vand.u32 %v1273, 4294901760
    %v1559 = vsub.f32 %v1273, %v1558
    %1560 = vmatpush1.msra.mxu0 %v1559
    %1561 = vmatprep.subr.mxu0 0.0
    %v1562 = vand.u32 %v1274, 4294901760
    %v1563 = vsub.f32 %v1274, %v1562
    %1564 = vmatpush1.msra.mxu0 %v1563
    %1565 = vmatprep.subr.mxu0 0.0
    %v1566 = vand.u32 %v1275, 4294901760
    %v1567 = vsub.f32 %v1275, %v1566
    %1568 = vmatpush1.msra.mxu0 %v1567
    %1569 = vmatprep.subr.mxu0 0.0
    %v1570 = vand.u32 %v1276, 4294901760
    %v1571 = vsub.f32 %v1276, %v1570
    %1572 = vmatpush1.msra.mxu0 %v1571
    %1573 = vmatprep.subr.mxu0 0.0
    %v1574 = vand.u32 %v1277, 4294901760
    %v1575 = vsub.f32 %v1277, %v1574
    %1576 = vmatpush1.msra.mxu0 %v1575
    %1577 = vmatprep.subr.mxu0 0.0
    %v1578 = vand.u32 %v1278, 4294901760
    %v1579 = vsub.f32 %v1278, %v1578
    %1580 = vmatpush1.msra.mxu0 %v1579
    %1581 = vmatprep.subr.mxu0 0.0
    %v1582 = vand.u32 %v1279, 4294901760
    %v1583 = vsub.f32 %v1279, %v1582
    %1584 = vmatpush1.msra.mxu0 %v1583
    %1585 = vmatprep.subr.mxu0 0.0
    %v1586 = vand.u32 %v1280, 4294901760
    %v1587 = vsub.f32 %v1280, %v1586
    %1588 = vmatpush1.msra.mxu0 %v1587
    %1589 = vmatprep.subr.mxu0 0.0
    %v1590 = vand.u32 %v1281, 4294901760
    %v1591 = vsub.f32 %v1281, %v1590
    %1592 = vmatpush1.msra.mxu0 %v1591
    %1593 = vmatprep.subr.mxu0 0.0
    %1594 = vmatpush1.msra.mxu0 0.0
    %1595 = vmatprep.subr.mxu0 0.0
    %1596 = vmatpush1.msra.mxu0 0.0
    %1597 = vmatprep.subr.mxu0 0.0
    %1598 = vmatpush1.msra.mxu0 0.0
    %1599 = vmatprep.subr.mxu0 0.0
    %1600 = vmatpush1.msra.mxu0 0.0
    %1601 = vmatprep.subr.mxu0 0.0
    %1602 = vmatpush1.msra.mxu0 0.0
    %1603 = vmatprep.subr.mxu0 0.0
    %1604 = vmatpush1.msra.mxu0 0.0
    %1605 = vmatprep.subr.mxu0 0.0
    %1606 = vmatpush1.msra.mxu0 0.0
    %1607 = vmatprep.subr.mxu0 0.0
    %1608 = vmatpush1.msra.mxu0 0.0
    %1609 = vmatprep.subr.mxu0 0.0
    %1610 = vmatpush1.msra.mxu0 0.0
    %1611 = vmatprep.subr.mxu0 0.0
    %1612 = vmatpush1.msra.mxu0 0.0
    %1613 = vmatprep.subr.mxu0 0.0
    %1614 = vmatpush1.msra.mxu0 0.0
    %1615 = vmatprep.subr.mxu0 0.0
    %1616 = vmatpush1.msra.mxu0 0.0
    %1617 = vmatprep.subr.mxu0 0.0
    %1618 = vmatpush1.msra.mxu0 0.0
    %1619 = vmatprep.subr.mxu0 0.0
    %1620 = vmatpush1.msra.mxu0 0.0
    %1621 = vmatprep.subr.mxu0 0.0
    %1622 = vmatpush1.msra.mxu0 0.0
    %1623 = vmatprep.subr.mxu0 0.0
    %1624 = vmatpush1.msra.mxu0 0.0
    %1625 = vmatprep.mubr.f32.mxu0 0.0
    %v1626 = vand.u32 %v1265, 4294901760
    %v1627 = vsub.f32 %v1265, %v1626
    %1628 = vmatmul.mubr.f32.gmra.mrb[0].mxu0 %v1627
    %v1629 = vpop.f32.mrb[0].mxu0
    %v1630 = vadd.f32 %v1526, %v1629
    %v1631 = vpop.f32.mrb[0].mxu0
    %1632 = vdwg.mxu0
    %1633 = vmatprep.subr.mxu0 0.0
    %v1634 = vand.u32 %v1266, 4294901760
    %1635 = vmatpush1.msra.mxu0 %v1634
    %1636 = vmatprep.subr.mxu0 0.0
    %v1637 = vand.u32 %v1267, 4294901760
    %1638 = vmatpush1.msra.mxu0 %v1637
    %1639 = vmatprep.subr.mxu0 0.0
    %v1640 = vand.u32 %v1268, 4294901760
    %1641 = vmatpush1.msra.mxu0 %v1640
    %1642 = vmatprep.subr.mxu0 0.0
    %v1643 = vand.u32 %v1269, 4294901760
    %1644 = vmatpush1.msra.mxu0 %v1643
    %1645 = vmatprep.subr.mxu0 0.0
    %v1646 = vand.u32 %v1270, 4294901760
    %1647 = vmatpush1.msra.mxu0 %v1646
    %1648 = vmatprep.subr.mxu0 0.0
    %v1649 = vand.u32 %v1271, 4294901760
    %1650 = vmatpush1.msra.mxu0 %v1649
    %1651 = vmatprep.subr.mxu0 0.0
    %v1652 = vand.u32 %v1272, 4294901760
    %1653 = vmatpush1.msra.mxu0 %v1652
    %1654 = vmatprep.subr.mxu0 0.0
    %v1655 = vand.u32 %v1273, 4294901760
    %1656 = vmatpush1.msra.mxu0 %v1655
    %1657 = vmatprep.subr.mxu0 0.0
    %v1658 = vand.u32 %v1274, 4294901760
    %1659 = vmatpush1.msra.mxu0 %v1658
    %1660 = vmatprep.subr.mxu0 0.0
    %v1661 = vand.u32 %v1275, 4294901760
    %1662 = vmatpush1.msra.mxu0 %v1661
    %1663 = vmatprep.subr.mxu0 0.0
    %v1664 = vand.u32 %v1276, 4294901760
    %1665 = vmatpush1.msra.mxu0 %v1664
    %1666 = vmatprep.subr.mxu0 0.0
    %v1667 = vand.u32 %v1277, 4294901760
    %1668 = vmatpush1.msra.mxu0 %v1667
    %1669 = vmatprep.subr.mxu0 0.0
    %v1670 = vand.u32 %v1278, 4294901760
    %1671 = vmatpush1.msra.mxu0 %v1670
    %1672 = vmatprep.subr.mxu0 0.0
    %v1673 = vand.u32 %v1279, 4294901760
    %1674 = vmatpush1.msra.mxu0 %v1673
    %1675 = vmatprep.subr.mxu0 0.0
    %v1676 = vand.u32 %v1280, 4294901760
    %1677 = vmatpush1.msra.mxu0 %v1676
    %1678 = vmatprep.subr.mxu0 0.0
    %v1679 = vand.u32 %v1281, 4294901760
    %1680 = vmatpush1.msra.mxu0 %v1679
    %1681 = vmatprep.subr.mxu0 0.0
    %1682 = vmatpush1.msra.mxu0 0.0
    %1683 = vmatprep.subr.mxu0 0.0
    %1684 = vmatpush1.msra.mxu0 0.0
    %1685 = vmatprep.subr.mxu0 0.0
    %1686 = vmatpush1.msra.mxu0 0.0
    %1687 = vmatprep.subr.mxu0 0.0
    %1688 = vmatpush1.msra.mxu0 0.0
    %1689 = vmatprep.subr.mxu0 0.0
    %1690 = vmatpush1.msra.mxu0 0.0
    %1691 = vmatprep.subr.mxu0 0.0
    %1692 = vmatpush1.msra.mxu0 0.0
    %1693 = vmatprep.subr.mxu0 0.0
    %1694 = vmatpush1.msra.mxu0 0.0
    %1695 = vmatprep.subr.mxu0 0.0
    %1696 = vmatpush1.msra.mxu0 0.0
    %1697 = vmatprep.subr.mxu0 0.0
    %1698 = vmatpush1.msra.mxu0 0.0
    %1699 = vmatprep.subr.mxu0 0.0
    %1700 = vmatpush1.msra.mxu0 0.0
    %1701 = vmatprep.subr.mxu0 0.0
    %1702 = vmatpush1.msra.mxu0 0.0
    %1703 = vmatprep.subr.mxu0 0.0
    %1704 = vmatpush1.msra.mxu0 0.0
    %1705 = vmatprep.subr.mxu0 0.0
    %1706 = vmatpush1.msra.mxu0 0.0
    %1707 = vmatprep.subr.mxu0 0.0
    %1708 = vmatpush1.msra.mxu0 0.0
    %1709 = vmatprep.subr.mxu0 0.0
    %1710 = vmatpush1.msra.mxu0 0.0
    %1711 = vmatprep.subr.mxu0 0.0
    %1712 = vmatpush1.msra.mxu0 0.0
    %1713 = vmatprep.mubr.f32.mxu0 0.0
    %v1714 = vand.u32 %v1265, 4294901760
    %v1715 = vsub.f32 %v1265, %v1714
    %v1716 = vand.u32 %v1715, 4294901760
    %1717 = vmatmul.mubr.f32.gmra.mrb[0].mxu0 %v1716
    %v1718 = vpop.f32.mrb[0].mxu0
    %v1719 = vadd.f32 %v1630, %v1718
    %v1720 = vpop.f32.mrb[0].mxu0
    %1721 = vdwg.mxu0
    %1722 = vmatprep.subr.mxu0 0.0
    %v1723 = vand.u32 %v1266, 4294901760
    %v1724 = vsub.f32 %v1266, %v1723
    %v1725 = vand.u32 %v1724, 4294901760
    %1726 = vmatpush1.msra.mxu0 %v1725
    %1727 = vmatprep.subr.mxu0 0.0
    %v1728 = vand.u32 %v1267, 4294901760
    %v1729 = vsub.f32 %v1267, %v1728
    %v1730 = vand.u32 %v1729, 4294901760
    %1731 = vmatpush1.msra.mxu0 %v1730
    %1732 = vmatprep.subr.mxu0 0.0
    %v1733 = vand.u32 %v1268, 4294901760
    %v1734 = vsub.f32 %v1268, %v1733
    %v1735 = vand.u32 %v1734, 4294901760
    %1736 = vmatpush1.msra.mxu0 %v1735
    %1737 = vmatprep.subr.mxu0 0.0
    %v1738 = vand.u32 %v1269, 4294901760
    %v1739 = vsub.f32 %v1269, %v1738
    %v1740 = vand.u32 %v1739, 4294901760
    %1741 = vmatpush1.msra.mxu0 %v1740
    %1742 = vmatprep.subr.mxu0 0.0
    %v1743 = vand.u32 %v1270, 4294901760
    %v1744 = vsub.f32 %v1270, %v1743
    %v1745 = vand.u32 %v1744, 4294901760
    %1746 = vmatpush1.msra.mxu0 %v1745
    %1747 = vmatprep.subr.mxu0 0.0
    %v1748 = vand.u32 %v1271, 4294901760
    %v1749 = vsub.f32 %v1271, %v1748
    %v1750 = vand.u32 %v1749, 4294901760
    %1751 = vmatpush1.msra.mxu0 %v1750
    %1752 = vmatprep.subr.mxu0 0.0
    %v1753 = vand.u32 %v1272, 4294901760
    %v1754 = vsub.f32 %v1272, %v1753
    %v1755 = vand.u32 %v1754, 4294901760
    %1756 = vmatpush1.msra.mxu0 %v1755
    %1757 = vmatprep.subr.mxu0 0.0
    %v1758 = vand.u32 %v1273, 4294901760
    %v1759 = vsub.f32 %v1273, %v1758
    %v1760 = vand.u32 %v1759, 4294901760
    %1761 = vmatpush1.msra.mxu0 %v1760
    %1762 = vmatprep.subr.mxu0 0.0
    %v1763 = vand.u32 %v1274, 4294901760
    %v1764 = vsub.f32 %v1274, %v1763
    %v1765 = vand.u32 %v1764, 4294901760
    %1766 = vmatpush1.msra.mxu0 %v1765
    %1767 = vmatprep.subr.mxu0 0.0
    %v1768 = vand.u32 %v1275, 4294901760
    %v1769 = vsub.f32 %v1275, %v1768
    %v1770 = vand.u32 %v1769, 4294901760
    %1771 = vmatpush1.msra.mxu0 %v1770
    %1772 = vmatprep.subr.mxu0 0.0
    %v1773 = vand.u32 %v1276, 4294901760
    %v1774 = vsub.f32 %v1276, %v1773
    %v1775 = vand.u32 %v1774, 4294901760
    %1776 = vmatpush1.msra.mxu0 %v1775
    %1777 = vmatprep.subr.mxu0 0.0
    %v1778 = vand.u32 %v1277, 4294901760
    %v1779 = vsub.f32 %v1277, %v1778
    %v1780 = vand.u32 %v1779, 4294901760
    %1781 = vmatpush1.msra.mxu0 %v1780
    %1782 = vmatprep.subr.mxu0 0.0
    %v1783 = vand.u32 %v1278, 4294901760
    %v1784 = vsub.f32 %v1278, %v1783
    %v1785 = vand.u32 %v1784, 4294901760
    %1786 = vmatpush1.msra.mxu0 %v1785
    %1787 = vmatprep.subr.mxu0 0.0
    %v1788 = vand.u32 %v1279, 4294901760
    %v1789 = vsub.f32 %v1279, %v1788
    %v1790 = vand.u32 %v1789, 4294901760
    %1791 = vmatpush1.msra.mxu0 %v1790
    %1792 = vmatprep.subr.mxu0 0.0
    %v1793 = vand.u32 %v1280, 4294901760
    %v1794 = vsub.f32 %v1280, %v1793
    %v1795 = vand.u32 %v1794, 4294901760
    %1796 = vmatpush1.msra.mxu0 %v1795
    %1797 = vmatprep.subr.mxu0 0.0
    %v1798 = vand.u32 %v1281, 4294901760
    %v1799 = vsub.f32 %v1281, %v1798
    %v1800 = vand.u32 %v1799, 4294901760
    %1801 = vmatpush1.msra.mxu0 %v1800
    %1802 = vmatprep.subr.mxu0 0.0
    %1803 = vmatpush1.msra.mxu0 0.0
    %1804 = vmatprep.subr.mxu0 0.0
    %1805 = vmatpush1.msra.mxu0 0.0
    %1806 = vmatprep.subr.mxu0 0.0
    %1807 = vmatpush1.msra.mxu0 0.0
    %1808 = vmatprep.subr.mxu0 0.0
    %1809 = vmatpush1.msra.mxu0 0.0
    %1810 = vmatprep.subr.mxu0 0.0
    %1811 = vmatpush1.msra.mxu0 0.0
    %1812 = vmatprep.subr.mxu0 0.0
    %1813 = vmatpush1.msra.mxu0 0.0
    %1814 = vmatprep.subr.mxu0 0.0
    %1815 = vmatpush1.msra.mxu0 0.0
    %1816 = vmatprep.subr.mxu0 0.0
    %1817 = vmatpush1.msra.mxu0 0.0
    %1818 = vmatprep.subr.mxu0 0.0
    %1819 = vmatpush1.msra.mxu0 0.0
    %1820 = vmatprep.subr.mxu0 0.0
    %1821 = vmatpush1.msra.mxu0 0.0
    %1822 = vmatprep.subr.mxu0 0.0
    %1823 = vmatpush1.msra.mxu0 0.0
    %1824 = vmatprep.subr.mxu0 0.0
    %1825 = vmatpush1.msra.mxu0 0.0
    %1826 = vmatprep.subr.mxu0 0.0
    %1827 = vmatpush1.msra.mxu0 0.0
    %1828 = vmatprep.subr.mxu0 0.0
    %1829 = vmatpush1.msra.mxu0 0.0
    %1830 = vmatprep.subr.mxu0 0.0
    %1831 = vmatpush1.msra.mxu0 0.0
    %1832 = vmatprep.subr.mxu0 0.0
    %1833 = vmatpush1.msra.mxu0 0.0
    %1834 = vmatprep.mubr.f32.mxu0 0.0
    %v1835 = vand.u32 %v1265, 4294901760
    %1836 = vmatmul.mubr.f32.gmra.mrb[0].mxu0 %v1835
    %v1837 = vpop.f32.mrb[0].mxu0
    %v1838 = vadd.f32 %v1719, %v1837
    %v1839 = vpop.f32.mrb[0].mxu0
    %1840 = vdwg.mxu0
    %1841 = vmatprep.subr.mxu0 0.0
    %v1842 = vand.u32 %v1266, 4294901760
    %1843 = vmatpush1.msra.mxu0 %v1842
    %1844 = vmatprep.subr.mxu0 0.0
    %v1845 = vand.u32 %v1267, 4294901760
    %1846 = vmatpush1.msra.mxu0 %v1845
    %1847 = vmatprep.subr.mxu0 0.0
    %v1848 = vand.u32 %v1268, 4294901760
    %1849 = vmatpush1.msra.mxu0 %v1848
    %1850 = vmatprep.subr.mxu0 0.0
    %v1851 = vand.u32 %v1269, 4294901760
    %1852 = vmatpush1.msra.mxu0 %v1851
    %1853 = vmatprep.subr.mxu0 0.0
    %v1854 = vand.u32 %v1270, 4294901760
    %1855 = vmatpush1.msra.mxu0 %v1854
    %1856 = vmatprep.subr.mxu0 0.0
    %v1857 = vand.u32 %v1271, 4294901760
    %1858 = vmatpush1.msra.mxu0 %v1857
    %1859 = vmatprep.subr.mxu0 0.0
    %v1860 = vand.u32 %v1272, 4294901760
    %1861 = vmatpush1.msra.mxu0 %v1860
    %1862 = vmatprep.subr.mxu0 0.0
    %v1863 = vand.u32 %v1273, 4294901760
    %1864 = vmatpush1.msra.mxu0 %v1863
    %1865 = vmatprep.subr.mxu0 0.0
    %v1866 = vand.u32 %v1274, 4294901760
    %1867 = vmatpush1.msra.mxu0 %v1866
    %1868 = vmatprep.subr.mxu0 0.0
    %v1869 = vand.u32 %v1275, 4294901760
    %1870 = vmatpush1.msra.mxu0 %v1869
    %1871 = vmatprep.subr.mxu0 0.0
    %v1872 = vand.u32 %v1276, 4294901760
    %1873 = vmatpush1.msra.mxu0 %v1872
    %1874 = vmatprep.subr.mxu0 0.0
    %v1875 = vand.u32 %v1277, 4294901760
    %1876 = vmatpush1.msra.mxu0 %v1875
    %1877 = vmatprep.subr.mxu0 0.0
    %v1878 = vand.u32 %v1278, 4294901760
    %1879 = vmatpush1.msra.mxu0 %v1878
    %1880 = vmatprep.subr.mxu0 0.0
    %v1881 = vand.u32 %v1279, 4294901760
    %1882 = vmatpush1.msra.mxu0 %v1881
    %1883 = vmatprep.subr.mxu0 0.0
    %v1884 = vand.u32 %v1280, 4294901760
    %1885 = vmatpush1.msra.mxu0 %v1884
    %1886 = vmatprep.subr.mxu0 0.0
    %v1887 = vand.u32 %v1281, 4294901760
    %1888 = vmatpush1.msra.mxu0 %v1887
    %1889 = vmatprep.subr.mxu0 0.0
    %1890 = vmatpush1.msra.mxu0 0.0
    %1891 = vmatprep.subr.mxu0 0.0
    %1892 = vmatpush1.msra.mxu0 0.0
    %1893 = vmatprep.subr.mxu0 0.0
    %1894 = vmatpush1.msra.mxu0 0.0
    %1895 = vmatprep.subr.mxu0 0.0
    %1896 = vmatpush1.msra.mxu0 0.0
    %1897 = vmatprep.subr.mxu0 0.0
    %1898 = vmatpush1.msra.mxu0 0.0
    %1899 = vmatprep.subr.mxu0 0.0
    %1900 = vmatpush1.msra.mxu0 0.0
    %1901 = vmatprep.subr.mxu0 0.0
    %1902 = vmatpush1.msra.mxu0 0.0
    %1903 = vmatprep.subr.mxu0 0.0
    %1904 = vmatpush1.msra.mxu0 0.0
    %1905 = vmatprep.subr.mxu0 0.0
    %1906 = vmatpush1.msra.mxu0 0.0
    %1907 = vmatprep.subr.mxu0 0.0
    %1908 = vmatpush1.msra.mxu0 0.0
    %1909 = vmatprep.subr.mxu0 0.0
    %1910 = vmatpush1.msra.mxu0 0.0
    %1911 = vmatprep.subr.mxu0 0.0
    %1912 = vmatpush1.msra.mxu0 0.0
    %1913 = vmatprep.subr.mxu0 0.0
    %1914 = vmatpush1.msra.mxu0 0.0
    %1915 = vmatprep.subr.mxu0 0.0
    %1916 = vmatpush1.msra.mxu0 0.0
    %1917 = vmatprep.subr.mxu0 0.0
    %1918 = vmatpush1.msra.mxu0 0.0
    %1919 = vmatprep.subr.mxu0 0.0
    %1920 = vmatpush1.msra.mxu0 0.0
    %1921 = vmatprep.mubr.f32.mxu0 0.0
    %v1922 = vand.u32 %v1265, 4294901760
    %1923 = vmatmul.mubr.f32.gmra.mrb[0].mxu0 %v1922
    %v1924 = vpop.f32.mrb[0].mxu0
    %v1925 = vadd.f32 %v1838, %v1924
    %v1926 = vpop.f32.mrb[0].mxu0
    %1927 = vdwg.mxu0
    %v1928 = vmax.f32 %v1925, 0.0
    %v1929 = vld [vmem:[#allocation6 + $0x148] sm:$0xff]
    %v1930 = vld [vmem:[#allocation6 + $0x150] sm:$0xff]
    %v1931 = vld [vmem:[#allocation6 + $0x158] sm:$0xff]
    %v1932 = vld [vmem:[#allocation6 + $0x160] sm:$0xff]
    %v1933 = vld [vmem:[#allocation6 + $0x168] sm:$0xff]
    %v1934 = vld [vmem:[#allocation6 + $0x170] sm:$0xff]
    %v1935 = vld [vmem:[#allocation6 + $0x178] sm:$0xff]
    %v1936 = vld [vmem:[#allocation6 + $0x180] sm:$0xff]
    %v1937 = vld [vmem:[#allocation6 + $0x188] sm:$0xff]
    %v1938 = vld [vmem:[#allocation6 + $0x190] sm:$0xff]
    %v1939 = vld [vmem:[#allocation6 + $0x198] sm:$0xff]
    %v1940 = vld [vmem:[#allocation6 + $0x1a0] sm:$0xff]
    %v1941 = vld [vmem:[#allocation6 + $0x1a8] sm:$0xff]
    %v1942 = vld [vmem:[#allocation6 + $0x1b0] sm:$0xff]
    %v1943 = vld [vmem:[#allocation6 + $0x1b8] sm:$0xff]
    %v1944 = vld [vmem:[#allocation6 + $0x1c0] sm:$0xff]
    %v1945 = vld [vmem:[#allocation6 + $0x1d0] sm:$0x1]
    %v1946 = vlaneseq
    %v1947 = vshrl.u32 %v1946, 7
    %v1948 = vsub.s32 0, %v1947
    %v1949 = vrot.slane %v1945, %v1948
    %1950 = vmatprep.subr.mxu0 0.0
    %v1951 = vand.u32 %v1929, 4294901760
    %1952 = vmatpush1.msra.mxu0 %v1951
    %1953 = vmatprep.subr.mxu0 0.0
    %v1954 = vand.u32 %v1930, 4294901760
    %1955 = vmatpush1.msra.mxu0 %v1954
    %1956 = vmatprep.subr.mxu0 0.0
    %v1957 = vand.u32 %v1931, 4294901760
    %1958 = vmatpush1.msra.mxu0 %v1957
    %1959 = vmatprep.subr.mxu0 0.0
    %v1960 = vand.u32 %v1932, 4294901760
    %1961 = vmatpush1.msra.mxu0 %v1960
    %1962 = vmatprep.subr.mxu0 0.0
    %v1963 = vand.u32 %v1933, 4294901760
    %1964 = vmatpush1.msra.mxu0 %v1963
    %1965 = vmatprep.subr.mxu0 0.0
    %v1966 = vand.u32 %v1934, 4294901760
    %1967 = vmatpush1.msra.mxu0 %v1966
    %1968 = vmatprep.subr.mxu0 0.0
    %v1969 = vand.u32 %v1935, 4294901760
    %1970 = vmatpush1.msra.mxu0 %v1969
    %1971 = vmatprep.subr.mxu0 0.0
    %v1972 = vand.u32 %v1936, 4294901760
    %1973 = vmatpush1.msra.mxu0 %v1972
    %1974 = vmatprep.subr.mxu0 0.0
    %v1975 = vand.u32 %v1937, 4294901760
    %1976 = vmatpush1.msra.mxu0 %v1975
    %1977 = vmatprep.subr.mxu0 0.0
    %v1978 = vand.u32 %v1938, 4294901760
    %1979 = vmatpush1.msra.mxu0 %v1978
    %1980 = vmatprep.subr.mxu0 0.0
    %v1981 = vand.u32 %v1939, 4294901760
    %1982 = vmatpush1.msra.mxu0 %v1981
    %1983 = vmatprep.subr.mxu0 0.0
    %v1984 = vand.u32 %v1940, 4294901760
    %1985 = vmatpush1.msra.mxu0 %v1984
    %1986 = vmatprep.subr.mxu0 0.0
    %v1987 = vand.u32 %v1941, 4294901760
    %1988 = vmatpush1.msra.mxu0 %v1987
    %1989 = vmatprep.subr.mxu0 0.0
    %v1990 = vand.u32 %v1942, 4294901760
    %1991 = vmatpush1.msra.mxu0 %v1990
    %1992 = vmatprep.subr.mxu0 0.0
    %v1993 = vand.u32 %v1943, 4294901760
    %1994 = vmatpush1.msra.mxu0 %v1993
    %1995 = vmatprep.subr.mxu0 0.0
    %v1996 = vand.u32 %v1944, 4294901760
    %1997 = vmatpush1.msra.mxu0 %v1996
    %1998 = vmatprep.subr.mxu0 0.0
    %1999 = vmatpush1.msra.mxu0 0.0
    %2000 = vmatprep.subr.mxu0 0.0
    %2001 = vmatpush1.msra.mxu0 0.0
    %2002 = vmatprep.subr.mxu0 0.0
    %2003 = vmatpush1.msra.mxu0 0.0
    %2004 = vmatprep.subr.mxu0 0.0
    %2005 = vmatpush1.msra.mxu0 0.0
    %2006 = vmatprep.subr.mxu0 0.0
    %2007 = vmatpush1.msra.mxu0 0.0
    %2008 = vmatprep.subr.mxu0 0.0
    %2009 = vmatpush1.msra.mxu0 0.0
    %2010 = vmatprep.subr.mxu0 0.0
    %2011 = vmatpush1.msra.mxu0 0.0
    %2012 = vmatprep.subr.mxu0 0.0
    %2013 = vmatpush1.msra.mxu0 0.0
    %2014 = vmatprep.subr.mxu0 0.0
    %2015 = vmatpush1.msra.mxu0 0.0
    %2016 = vmatprep.subr.mxu0 0.0
    %2017 = vmatpush1.msra.mxu0 0.0
    %2018 = vmatprep.subr.mxu0 0.0
    %2019 = vmatpush1.msra.mxu0 0.0
    %2020 = vmatprep.subr.mxu0 0.0
    %2021 = vmatpush1.msra.mxu0 0.0
    %2022 = vmatprep.subr.mxu0 0.0
    %2023 = vmatpush1.msra.mxu0 0.0
    %2024 = vmatprep.subr.mxu0 0.0
    %2025 = vmatpush1.msra.mxu0 0.0
    %2026 = vmatprep.subr.mxu0 0.0
    %2027 = vmatpush1.msra.mxu0 0.0
    %2028 = vmatprep.subr.mxu0 0.0
    %2029 = vmatpush1.msra.mxu0 0.0
    %2030 = vmatprep.mubr.f32.mxu0 0.0
    %v2031 = vand.u32 %v1928, 4294901760
    %v2032 = vsub.f32 %v1928, %v2031
    %v2033 = vand.u32 %v2032, 4294901760
    %v2034 = vsub.f32 %v2032, %v2033
    %v2035 = vand.u32 %v2034, 4294901760
    %2036 = vmatmul.mubr.f32.gmra.mrb[0].mxu0 %v2035
    %v2037 = vpop.f32.mrb[0].mxu0
    %v2038 = vadd.f32 %v1949, %v2037
    %v2039 = vpop.f32.mrb[0].mxu0
    %2040 = vdwg.mxu0
    %2041 = vmatprep.subr.mxu0 0.0
    %v2042 = vand.u32 %v1929, 4294901760
    %v2043 = vsub.f32 %v1929, %v2042
    %v2044 = vand.u32 %v2043, 4294901760
    %v2045 = vsub.f32 %v2043, %v2044
    %v2046 = vand.u32 %v2045, 4294901760
    %2047 = vmatpush1.msra.mxu0 %v2046
    %2048 = vmatprep.subr.mxu0 0.0
    %v2049 = vand.u32 %v1930, 4294901760
    %v2050 = vsub.f32 %v1930, %v2049
    %v2051 = vand.u32 %v2050, 4294901760
    %v2052 = vsub.f32 %v2050, %v2051
    %v2053 = vand.u32 %v2052, 4294901760
    %2054 = vmatpush1.msra.mxu0 %v2053
    %2055 = vmatprep.subr.mxu0 0.0
    %v2056 = vand.u32 %v1931, 4294901760
    %v2057 = vsub.f32 %v1931, %v2056
    %v2058 = vand.u32 %v2057, 4294901760
    %v2059 = vsub.f32 %v2057, %v2058
    %v2060 = vand.u32 %v2059, 4294901760
    %2061 = vmatpush1.msra.mxu0 %v2060
    %2062 = vmatprep.subr.mxu0 0.0
    %v2063 = vand.u32 %v1932, 4294901760
    %v2064 = vsub.f32 %v1932, %v2063
    %v2065 = vand.u32 %v2064, 4294901760
    %v2066 = vsub.f32 %v2064, %v2065
    %v2067 = vand.u32 %v2066, 4294901760
    %2068 = vmatpush1.msra.mxu0 %v2067
    %2069 = vmatprep.subr.mxu0 0.0
    %v2070 = vand.u32 %v1933, 4294901760
    %v2071 = vsub.f32 %v1933, %v2070
    %v2072 = vand.u32 %v2071, 4294901760
    %v2073 = vsub.f32 %v2071, %v2072
    %v2074 = vand.u32 %v2073, 4294901760
    %2075 = vmatpush1.msra.mxu0 %v2074
    %2076 = vmatprep.subr.mxu0 0.0
    %v2077 = vand.u32 %v1934, 4294901760
    %v2078 = vsub.f32 %v1934, %v2077
    %v2079 = vand.u32 %v2078, 4294901760
    %v2080 = vsub.f32 %v2078, %v2079
    %v2081 = vand.u32 %v2080, 4294901760
    %2082 = vmatpush1.msra.mxu0 %v2081
    %2083 = vmatprep.subr.mxu0 0.0
    %v2084 = vand.u32 %v1935, 4294901760
    %v2085 = vsub.f32 %v1935, %v2084
    %v2086 = vand.u32 %v2085, 4294901760
    %v2087 = vsub.f32 %v2085, %v2086
    %v2088 = vand.u32 %v2087, 4294901760
    %2089 = vmatpush1.msra.mxu0 %v2088
    %2090 = vmatprep.subr.mxu0 0.0
    %v2091 = vand.u32 %v1936, 4294901760
    %v2092 = vsub.f32 %v1936, %v2091
    %v2093 = vand.u32 %v2092, 4294901760
    %v2094 = vsub.f32 %v2092, %v2093
    %v2095 = vand.u32 %v2094, 4294901760
    %2096 = vmatpush1.msra.mxu0 %v2095
    %2097 = vmatprep.subr.mxu0 0.0
    %v2098 = vand.u32 %v1937, 4294901760
    %v2099 = vsub.f32 %v1937, %v2098
    %v2100 = vand.u32 %v2099, 4294901760
    %v2101 = vsub.f32 %v2099, %v2100
    %v2102 = vand.u32 %v2101, 4294901760
    %2103 = vmatpush1.msra.mxu0 %v2102
    %2104 = vmatprep.subr.mxu0 0.0
    %v2105 = vand.u32 %v1938, 4294901760
    %v2106 = vsub.f32 %v1938, %v2105
    %v2107 = vand.u32 %v2106, 4294901760
    %v2108 = vsub.f32 %v2106, %v2107
    %v2109 = vand.u32 %v2108, 4294901760
    %2110 = vmatpush1.msra.mxu0 %v2109
    %2111 = vmatprep.subr.mxu0 0.0
    %v2112 = vand.u32 %v1939, 4294901760
    %v2113 = vsub.f32 %v1939, %v2112
    %v2114 = vand.u32 %v2113, 4294901760
    %v2115 = vsub.f32 %v2113, %v2114
    %v2116 = vand.u32 %v2115, 4294901760
    %2117 = vmatpush1.msra.mxu0 %v2116
    %2118 = vmatprep.subr.mxu0 0.0
    %v2119 = vand.u32 %v1940, 4294901760
    %v2120 = vsub.f32 %v1940, %v2119
    %v2121 = vand.u32 %v2120, 4294901760
    %v2122 = vsub.f32 %v2120, %v2121
    %v2123 = vand.u32 %v2122, 4294901760
    %2124 = vmatpush1.msra.mxu0 %v2123
    %2125 = vmatprep.subr.mxu0 0.0
    %v2126 = vand.u32 %v1941, 4294901760
    %v2127 = vsub.f32 %v1941, %v2126
    %v2128 = vand.u32 %v2127, 4294901760
    %v2129 = vsub.f32 %v2127, %v2128
    %v2130 = vand.u32 %v2129, 4294901760
    %2131 = vmatpush1.msra.mxu0 %v2130
    %2132 = vmatprep.subr.mxu0 0.0
    %v2133 = vand.u32 %v1942, 4294901760
    %v2134 = vsub.f32 %v1942, %v2133
    %v2135 = vand.u32 %v2134, 4294901760
    %v2136 = vsub.f32 %v2134, %v2135
    %v2137 = vand.u32 %v2136, 4294901760
    %2138 = vmatpush1.msra.mxu0 %v2137
    %2139 = vmatprep.subr.mxu0 0.0
    %v2140 = vand.u32 %v1943, 4294901760
    %v2141 = vsub.f32 %v1943, %v2140
    %v2142 = vand.u32 %v2141, 4294901760
    %v2143 = vsub.f32 %v2141, %v2142
    %v2144 = vand.u32 %v2143, 4294901760
    %2145 = vmatpush1.msra.mxu0 %v2144
    %2146 = vmatprep.subr.mxu0 0.0
    %v2147 = vand.u32 %v1944, 4294901760
    %v2148 = vsub.f32 %v1944, %v2147
    %v2149 = vand.u32 %v2148, 4294901760
    %v2150 = vsub.f32 %v2148, %v2149
    %v2151 = vand.u32 %v2150, 4294901760
    %2152 = vmatpush1.msra.mxu0 %v2151
    %2153 = vmatprep.subr.mxu0 0.0
    %2154 = vmatpush1.msra.mxu0 0.0
    %2155 = vmatprep.subr.mxu0 0.0
    %2156 = vmatpush1.msra.mxu0 0.0
    %2157 = vmatprep.subr.mxu0 0.0
    %2158 = vmatpush1.msra.mxu0 0.0
    %2159 = vmatprep.subr.mxu0 0.0
    %2160 = vmatpush1.msra.mxu0 0.0
    %2161 = vmatprep.subr.mxu0 0.0
    %2162 = vmatpush1.msra.mxu0 0.0
    %2163 = vmatprep.subr.mxu0 0.0
    %2164 = vmatpush1.msra.mxu0 0.0
    %2165 = vmatprep.subr.mxu0 0.0
    %2166 = vmatpush1.msra.mxu0 0.0
    %2167 = vmatprep.subr.mxu0 0.0
    %2168 = vmatpush1.msra.mxu0 0.0
    %2169 = vmatprep.subr.mxu0 0.0
    %2170 = vmatpush1.msra.mxu0 0.0
    %2171 = vmatprep.subr.mxu0 0.0
    %2172 = vmatpush1.msra.mxu0 0.0
    %2173 = vmatprep.subr.mxu0 0.0
    %2174 = vmatpush1.msra.mxu0 0.0
    %2175 = vmatprep.subr.mxu0 0.0
    %2176 = vmatpush1.msra.mxu0 0.0
    %2177 = vmatprep.subr.mxu0 0.0
    %2178 = vmatpush1.msra.mxu0 0.0
    %2179 = vmatprep.subr.mxu0 0.0
    %2180 = vmatpush1.msra.mxu0 0.0
    %2181 = vmatprep.subr.mxu0 0.0
    %2182 = vmatpush1.msra.mxu0 0.0
    %2183 = vmatprep.subr.mxu0 0.0
    %2184 = vmatpush1.msra.mxu0 0.0
    %2185 = vmatprep.mubr.f32.mxu0 0.0
    %v2186 = vand.u32 %v1928, 4294901760
    %2187 = vmatmul.mubr.f32.gmra.mrb[0].mxu0 %v2186
    %v2188 = vpop.f32.mrb[0].mxu0
    %v2189 = vadd.f32 %v2038, %v2188
    %v2190 = vpop.f32.mrb[0].mxu0
    %2191 = vdwg.mxu0
    %2192 = vmatprep.subr.mxu0 0.0
    %v2193 = vand.u32 %v1929, 4294901760
    %v2194 = vsub.f32 %v1929, %v2193
    %2195 = vmatpush1.msra.mxu0 %v2194
    %2196 = vmatprep.subr.mxu0 0.0
    %v2197 = vand.u32 %v1930, 4294901760
    %v2198 = vsub.f32 %v1930, %v2197
    %2199 = vmatpush1.msra.mxu0 %v2198
    %2200 = vmatprep.subr.mxu0 0.0
    %v2201 = vand.u32 %v1931, 4294901760
    %v2202 = vsub.f32 %v1931, %v2201
    %2203 = vmatpush1.msra.mxu0 %v2202
    %2204 = vmatprep.subr.mxu0 0.0
    %v2205 = vand.u32 %v1932, 4294901760
    %v2206 = vsub.f32 %v1932, %v2205
    %2207 = vmatpush1.msra.mxu0 %v2206
    %2208 = vmatprep.subr.mxu0 0.0
    %v2209 = vand.u32 %v1933, 4294901760
    %v2210 = vsub.f32 %v1933, %v2209
    %2211 = vmatpush1.msra.mxu0 %v2210
    %2212 = vmatprep.subr.mxu0 0.0
    %v2213 = vand.u32 %v1934, 4294901760
    %v2214 = vsub.f32 %v1934, %v2213
    %2215 = vmatpush1.msra.mxu0 %v2214
    %2216 = vmatprep.subr.mxu0 0.0
    %v2217 = vand.u32 %v1935, 4294901760
    %v2218 = vsub.f32 %v1935, %v2217
    %2219 = vmatpush1.msra.mxu0 %v2218
    %2220 = vmatprep.subr.mxu0 0.0
    %v2221 = vand.u32 %v1936, 4294901760
    %v2222 = vsub.f32 %v1936, %v2221
    %2223 = vmatpush1.msra.mxu0 %v2222
    %2224 = vmatprep.subr.mxu0 0.0
    %v2225 = vand.u32 %v1937, 4294901760
    %v2226 = vsub.f32 %v1937, %v2225
    %2227 = vmatpush1.msra.mxu0 %v2226
    %2228 = vmatprep.subr.mxu0 0.0
    %v2229 = vand.u32 %v1938, 4294901760
    %v2230 = vsub.f32 %v1938, %v2229
    %2231 = vmatpush1.msra.mxu0 %v2230
    %2232 = vmatprep.subr.mxu0 0.0
    %v2233 = vand.u32 %v1939, 4294901760
    %v2234 = vsub.f32 %v1939, %v2233
    %2235 = vmatpush1.msra.mxu0 %v2234
    %2236 = vmatprep.subr.mxu0 0.0
    %v2237 = vand.u32 %v1940, 4294901760
    %v2238 = vsub.f32 %v1940, %v2237
    %2239 = vmatpush1.msra.mxu0 %v2238
    %2240 = vmatprep.subr.mxu0 0.0
    %v2241 = vand.u32 %v1941, 4294901760
    %v2242 = vsub.f32 %v1941, %v2241
    %2243 = vmatpush1.msra.mxu0 %v2242
    %2244 = vmatprep.subr.mxu0 0.0
    %v2245 = vand.u32 %v1942, 4294901760
    %v2246 = vsub.f32 %v1942, %v2245
    %2247 = vmatpush1.msra.mxu0 %v2246
    %2248 = vmatprep.subr.mxu0 0.0
    %v2249 = vand.u32 %v1943, 4294901760
    %v2250 = vsub.f32 %v1943, %v2249
    %2251 = vmatpush1.msra.mxu0 %v2250
    %2252 = vmatprep.subr.mxu0 0.0
    %v2253 = vand.u32 %v1944, 4294901760
    %v2254 = vsub.f32 %v1944, %v2253
    %2255 = vmatpush1.msra.mxu0 %v2254
    %2256 = vmatprep.subr.mxu0 0.0
    %2257 = vmatpush1.msra.mxu0 0.0
    %2258 = vmatprep.subr.mxu0 0.0
    %2259 = vmatpush1.msra.mxu0 0.0
    %2260 = vmatprep.subr.mxu0 0.0
    %2261 = vmatpush1.msra.mxu0 0.0
    %2262 = vmatprep.subr.mxu0 0.0
    %2263 = vmatpush1.msra.mxu0 0.0
    %2264 = vmatprep.subr.mxu0 0.0
    %2265 = vmatpush1.msra.mxu0 0.0
    %2266 = vmatprep.subr.mxu0 0.0
    %2267 = vmatpush1.msra.mxu0 0.0
    %2268 = vmatprep.subr.mxu0 0.0
    %2269 = vmatpush1.msra.mxu0 0.0
    %2270 = vmatprep.subr.mxu0 0.0
    %2271 = vmatpush1.msra.mxu0 0.0
    %2272 = vmatprep.subr.mxu0 0.0
    %2273 = vmatpush1.msra.mxu0 0.0
    %2274 = vmatprep.subr.mxu0 0.0
    %2275 = vmatpush1.msra.mxu0 0.0
    %2276 = vmatprep.subr.mxu0 0.0
    %2277 = vmatpush1.msra.mxu0 0.0
    %2278 = vmatprep.subr.mxu0 0.0
    %2279 = vmatpush1.msra.mxu0 0.0
    %2280 = vmatprep.subr.mxu0 0.0
    %2281 = vmatpush1.msra.mxu0 0.0
    %2282 = vmatprep.subr.mxu0 0.0
    %2283 = vmatpush1.msra.mxu0 0.0
    %2284 = vmatprep.subr.mxu0 0.0
    %2285 = vmatpush1.msra.mxu0 0.0
    %2286 = vmatprep.subr.mxu0 0.0
    %2287 = vmatpush1.msra.mxu0 0.0
    %2288 = vmatprep.mubr.f32.mxu0 0.0
    %v2289 = vand.u32 %v1928, 4294901760
    %v2290 = vsub.f32 %v1928, %v2289
    %2291 = vmatmul.mubr.f32.gmra.mrb[0].mxu0 %v2290
    %v2292 = vpop.f32.mrb[0].mxu0
    %v2293 = vadd.f32 %v2189, %v2292
    %v2294 = vpop.f32.mrb[0].mxu0
    %2295 = vdwg.mxu0
    %2296 = vmatprep.subr.mxu0 0.0
    %v2297 = vand.u32 %v1929, 4294901760
    %2298 = vmatpush1.msra.mxu0 %v2297
    %2299 = vmatprep.subr.mxu0 0.0
    %v2300 = vand.u32 %v1930, 4294901760
    %2301 = vmatpush1.msra.mxu0 %v2300
    %2302 = vmatprep.subr.mxu0 0.0
    %v2303 = vand.u32 %v1931, 4294901760
    %2304 = vmatpush1.msra.mxu0 %v2303
    %2305 = vmatprep.subr.mxu0 0.0
    %v2306 = vand.u32 %v1932, 4294901760
    %2307 = vmatpush1.msra.mxu0 %v2306
    %2308 = vmatprep.subr.mxu0 0.0
    %v2309 = vand.u32 %v1933, 4294901760
    %2310 = vmatpush1.msra.mxu0 %v2309
    %2311 = vmatprep.subr.mxu0 0.0
    %v2312 = vand.u32 %v1934, 4294901760
    %2313 = vmatpush1.msra.mxu0 %v2312
    %2314 = vmatprep.subr.mxu0 0.0
    %v2315 = vand.u32 %v1935, 4294901760
    %2316 = vmatpush1.msra.mxu0 %v2315
    %2317 = vmatprep.subr.mxu0 0.0
    %v2318 = vand.u32 %v1936, 4294901760
    %2319 = vmatpush1.msra.mxu0 %v2318
    %2320 = vmatprep.subr.mxu0 0.0
    %v2321 = vand.u32 %v1937, 4294901760
    %2322 = vmatpush1.msra.mxu0 %v2321
    %2323 = vmatprep.subr.mxu0 0.0
    %v2324 = vand.u32 %v1938, 4294901760
    %2325 = vmatpush1.msra.mxu0 %v2324
    %2326 = vmatprep.subr.mxu0 0.0
    %v2327 = vand.u32 %v1939, 4294901760
    %2328 = vmatpush1.msra.mxu0 %v2327
    %2329 = vmatprep.subr.mxu0 0.0
    %v2330 = vand.u32 %v1940, 4294901760
    %2331 = vmatpush1.msra.mxu0 %v2330
    %2332 = vmatprep.subr.mxu0 0.0
    %v2333 = vand.u32 %v1941, 4294901760
    %2334 = vmatpush1.msra.mxu0 %v2333
    %2335 = vmatprep.subr.mxu0 0.0
    %v2336 = vand.u32 %v1942, 4294901760
    %2337 = vmatpush1.msra.mxu0 %v2336
    %2338 = vmatprep.subr.mxu0 0.0
    %v2339 = vand.u32 %v1943, 4294901760
    %2340 = vmatpush1.msra.mxu0 %v2339
    %2341 = vmatprep.subr.mxu0 0.0
    %v2342 = vand.u32 %v1944, 4294901760
    %2343 = vmatpush1.msra.mxu0 %v2342
    %2344 = vmatprep.subr.mxu0 0.0
    %2345 = vmatpush1.msra.mxu0 0.0
    %2346 = vmatprep.subr.mxu0 0.0
    %2347 = vmatpush1.msra.mxu0 0.0
    %2348 = vmatprep.subr.mxu0 0.0
    %2349 = vmatpush1.msra.mxu0 0.0
    %2350 = vmatprep.subr.mxu0 0.0
    %2351 = vmatpush1.msra.mxu0 0.0
    %2352 = vmatprep.subr.mxu0 0.0
    %2353 = vmatpush1.msra.mxu0 0.0
    %2354 = vmatprep.subr.mxu0 0.0
    %2355 = vmatpush1.msra.mxu0 0.0
    %2356 = vmatprep.subr.mxu0 0.0
    %2357 = vmatpush1.msra.mxu0 0.0
    %2358 = vmatprep.subr.mxu0 0.0
    %2359 = vmatpush1.msra.mxu0 0.0
    %2360 = vmatprep.subr.mxu0 0.0
    %2361 = vmatpush1.msra.mxu0 0.0
    %2362 = vmatprep.subr.mxu0 0.0
    %2363 = vmatpush1.msra.mxu0 0.0
    %2364 = vmatprep.subr.mxu0 0.0
    %2365 = vmatpush1.msra.mxu0 0.0
    %2366 = vmatprep.subr.mxu0 0.0
    %2367 = vmatpush1.msra.mxu0 0.0
    %2368 = vmatprep.subr.mxu0 0.0
    %2369 = vmatpush1.msra.mxu0 0.0
    %2370 = vmatprep.subr.mxu0 0.0
    %2371 = vmatpush1.msra.mxu0 0.0
    %2372 = vmatprep.subr.mxu0 0.0
    %2373 = vmatpush1.msra.mxu0 0.0
    %2374 = vmatprep.subr.mxu0 0.0
    %2375 = vmatpush1.msra.mxu0 0.0
    %2376 = vmatprep.mubr.f32.mxu0 0.0
    %v2377 = vand.u32 %v1928, 4294901760
    %v2378 = vsub.f32 %v1928, %v2377
    %v2379 = vand.u32 %v2378, 4294901760
    %2380 = vmatmul.mubr.f32.gmra.mrb[0].mxu0 %v2379
    %v2381 = vpop.f32.mrb[0].mxu0
    %v2382 = vadd.f32 %v2293, %v2381
    %v2383 = vpop.f32.mrb[0].mxu0
    %2384 = vdwg.mxu0
    %2385 = vmatprep.subr.mxu0 0.0
    %v2386 = vand.u32 %v1929, 4294901760
    %v2387 = vsub.f32 %v1929, %v2386
    %v2388 = vand.u32 %v2387, 4294901760
    %2389 = vmatpush1.msra.mxu0 %v2388
    %2390 = vmatprep.subr.mxu0 0.0
    %v2391 = vand.u32 %v1930, 4294901760
    %v2392 = vsub.f32 %v1930, %v2391
    %v2393 = vand.u32 %v2392, 4294901760
    %2394 = vmatpush1.msra.mxu0 %v2393
    %2395 = vmatprep.subr.mxu0 0.0
    %v2396 = vand.u32 %v1931, 4294901760
    %v2397 = vsub.f32 %v1931, %v2396
    %v2398 = vand.u32 %v2397, 4294901760
    %2399 = vmatpush1.msra.mxu0 %v2398
    %2400 = vmatprep.subr.mxu0 0.0
    %v2401 = vand.u32 %v1932, 4294901760
    %v2402 = vsub.f32 %v1932, %v2401
    %v2403 = vand.u32 %v2402, 4294901760
    %2404 = vmatpush1.msra.mxu0 %v2403
    %2405 = vmatprep.subr.mxu0 0.0
    %v2406 = vand.u32 %v1933, 4294901760
    %v2407 = vsub.f32 %v1933, %v2406
    %v2408 = vand.u32 %v2407, 4294901760
    %2409 = vmatpush1.msra.mxu0 %v2408
    %2410 = vmatprep.subr.mxu0 0.0
    %v2411 = vand.u32 %v1934, 4294901760
    %v2412 = vsub.f32 %v1934, %v2411
    %v2413 = vand.u32 %v2412, 4294901760
    %2414 = vmatpush1.msra.mxu0 %v2413
    %2415 = vmatprep.subr.mxu0 0.0
    %v2416 = vand.u32 %v1935, 4294901760
    %v2417 = vsub.f32 %v1935, %v2416
    %v2418 = vand.u32 %v2417, 4294901760
    %2419 = vmatpush1.msra.mxu0 %v2418
    %2420 = vmatprep.subr.mxu0 0.0
    %v2421 = vand.u32 %v1936, 4294901760
    %v2422 = vsub.f32 %v1936, %v2421
    %v2423 = vand.u32 %v2422, 4294901760
    %2424 = vmatpush1.msra.mxu0 %v2423
    %2425 = vmatprep.subr.mxu0 0.0
    %v2426 = vand.u32 %v1937, 4294901760
    %v2427 = vsub.f32 %v1937, %v2426
    %v2428 = vand.u32 %v2427, 4294901760
    %2429 = vmatpush1.msra.mxu0 %v2428
    %2430 = vmatprep.subr.mxu0 0.0
    %v2431 = vand.u32 %v1938, 4294901760
    %v2432 = vsub.f32 %v1938, %v2431
    %v2433 = vand.u32 %v2432, 4294901760
    %2434 = vmatpush1.msra.mxu0 %v2433
    %2435 = vmatprep.subr.mxu0 0.0
    %v2436 = vand.u32 %v1939, 4294901760
    %v2437 = vsub.f32 %v1939, %v2436
    %v2438 = vand.u32 %v2437, 4294901760
    %2439 = vmatpush1.msra.mxu0 %v2438
    %2440 = vmatprep.subr.mxu0 0.0
    %v2441 = vand.u32 %v1940, 4294901760
    %v2442 = vsub.f32 %v1940, %v2441
    %v2443 = vand.u32 %v2442, 4294901760
    %2444 = vmatpush1.msra.mxu0 %v2443
    %2445 = vmatprep.subr.mxu0 0.0
    %v2446 = vand.u32 %v1941, 4294901760
    %v2447 = vsub.f32 %v1941, %v2446
    %v2448 = vand.u32 %v2447, 4294901760
    %2449 = vmatpush1.msra.mxu0 %v2448
    %2450 = vmatprep.subr.mxu0 0.0
    %v2451 = vand.u32 %v1942, 4294901760
    %v2452 = vsub.f32 %v1942, %v2451
    %v2453 = vand.u32 %v2452, 4294901760
    %2454 = vmatpush1.msra.mxu0 %v2453
    %2455 = vmatprep.subr.mxu0 0.0
    %v2456 = vand.u32 %v1943, 4294901760
    %v2457 = vsub.f32 %v1943, %v2456
    %v2458 = vand.u32 %v2457, 4294901760
    %2459 = vmatpush1.msra.mxu0 %v2458
    %2460 = vmatprep.subr.mxu0 0.0
    %v2461 = vand.u32 %v1944, 4294901760
    %v2462 = vsub.f32 %v1944, %v2461
    %v2463 = vand.u32 %v2462, 4294901760
    %2464 = vmatpush1.msra.mxu0 %v2463
    %2465 = vmatprep.subr.mxu0 0.0
    %2466 = vmatpush1.msra.mxu0 0.0
    %2467 = vmatprep.subr.mxu0 0.0
    %2468 = vmatpush1.msra.mxu0 0.0
    %2469 = vmatprep.subr.mxu0 0.0
    %2470 = vmatpush1.msra.mxu0 0.0
    %2471 = vmatprep.subr.mxu0 0.0
    %2472 = vmatpush1.msra.mxu0 0.0
    %2473 = vmatprep.subr.mxu0 0.0
    %2474 = vmatpush1.msra.mxu0 0.0
    %2475 = vmatprep.subr.mxu0 0.0
    %2476 = vmatpush1.msra.mxu0 0.0
    %2477 = vmatprep.subr.mxu0 0.0
    %2478 = vmatpush1.msra.mxu0 0.0
    %2479 = vmatprep.subr.mxu0 0.0
    %2480 = vmatpush1.msra.mxu0 0.0
    %2481 = vmatprep.subr.mxu0 0.0
    %2482 = vmatpush1.msra.mxu0 0.0
    %2483 = vmatprep.subr.mxu0 0.0
    %2484 = vmatpush1.msra.mxu0 0.0
    %2485 = vmatprep.subr.mxu0 0.0
    %2486 = vmatpush1.msra.mxu0 0.0
    %2487 = vmatprep.subr.mxu0 0.0
    %2488 = vmatpush1.msra.mxu0 0.0
    %2489 = vmatprep.subr.mxu0 0.0
    %2490 = vmatpush1.msra.mxu0 0.0
    %2491 = vmatprep.subr.mxu0 0.0
    %2492 = vmatpush1.msra.mxu0 0.0
    %2493 = vmatprep.subr.mxu0 0.0
    %2494 = vmatpush1.msra.mxu0 0.0
    %2495 = vmatprep.subr.mxu0 0.0
    %2496 = vmatpush1.msra.mxu0 0.0
    %2497 = vmatprep.mubr.f32.mxu0 0.0
    %v2498 = vand.u32 %v1928, 4294901760
    %2499 = vmatmul.mubr.f32.gmra.mrb[0].mxu0 %v2498
    %v2500 = vpop.f32.mrb[0].mxu0
    %v2501 = vadd.f32 %v2382, %v2500
    %v2502 = vpop.f32.mrb[0].mxu0
    %2503 = vdwg.mxu0
    %2504 = vmatprep.subr.mxu0 0.0
    %v2505 = vand.u32 %v1929, 4294901760
    %2506 = vmatpush1.msra.mxu0 %v2505
    %2507 = vmatprep.subr.mxu0 0.0
    %v2508 = vand.u32 %v1930, 4294901760
    %2509 = vmatpush1.msra.mxu0 %v2508
    %2510 = vmatprep.subr.mxu0 0.0
    %v2511 = vand.u32 %v1931, 4294901760
    %2512 = vmatpush1.msra.mxu0 %v2511
    %2513 = vmatprep.subr.mxu0 0.0
    %v2514 = vand.u32 %v1932, 4294901760
    %2515 = vmatpush1.msra.mxu0 %v2514
    %2516 = vmatprep.subr.mxu0 0.0
    %v2517 = vand.u32 %v1933, 4294901760
    %2518 = vmatpush1.msra.mxu0 %v2517
    %2519 = vmatprep.subr.mxu0 0.0
    %v2520 = vand.u32 %v1934, 4294901760
    %2521 = vmatpush1.msra.mxu0 %v2520
    %2522 = vmatprep.subr.mxu0 0.0
    %v2523 = vand.u32 %v1935, 4294901760
    %2524 = vmatpush1.msra.mxu0 %v2523
    %2525 = vmatprep.subr.mxu0 0.0
    %v2526 = vand.u32 %v1936, 4294901760
    %2527 = vmatpush1.msra.mxu0 %v2526
    %2528 = vmatprep.subr.mxu0 0.0
    %v2529 = vand.u32 %v1937, 4294901760
    %2530 = vmatpush1.msra.mxu0 %v2529
    %2531 = vmatprep.subr.mxu0 0.0
    %v2532 = vand.u32 %v1938, 4294901760
    %2533 = vmatpush1.msra.mxu0 %v2532
    %2534 = vmatprep.subr.mxu0 0.0
    %v2535 = vand.u32 %v1939, 4294901760
    %2536 = vmatpush1.msra.mxu0 %v2535
    %2537 = vmatprep.subr.mxu0 0.0
    %v2538 = vand.u32 %v1940, 4294901760
    %2539 = vmatpush1.msra.mxu0 %v2538
    %2540 = vmatprep.subr.mxu0 0.0
    %v2541 = vand.u32 %v1941, 4294901760
    %2542 = vmatpush1.msra.mxu0 %v2541
    %2543 = vmatprep.subr.mxu0 0.0
    %v2544 = vand.u32 %v1942, 4294901760
    %2545 = vmatpush1.msra.mxu0 %v2544
    %2546 = vmatprep.subr.mxu0 0.0
    %v2547 = vand.u32 %v1943, 4294901760
    %2548 = vmatpush1.msra.mxu0 %v2547
    %2549 = vmatprep.subr.mxu0 0.0
    %v2550 = vand.u32 %v1944, 4294901760
    %2551 = vmatpush1.msra.mxu0 %v2550
    %2552 = vmatprep.subr.mxu0 0.0
    %2553 = vmatpush1.msra.mxu0 0.0
    %2554 = vmatprep.subr.mxu0 0.0
    %2555 = vmatpush1.msra.mxu0 0.0
    %2556 = vmatprep.subr.mxu0 0.0
    %2557 = vmatpush1.msra.mxu0 0.0
    %2558 = vmatprep.subr.mxu0 0.0
    %2559 = vmatpush1.msra.mxu0 0.0
    %2560 = vmatprep.subr.mxu0 0.0
    %2561 = vmatpush1.msra.mxu0 0.0
    %2562 = vmatprep.subr.mxu0 0.0
    %2563 = vmatpush1.msra.mxu0 0.0
    %2564 = vmatprep.subr.mxu0 0.0
    %2565 = vmatpush1.msra.mxu0 0.0
    %2566 = vmatprep.subr.mxu0 0.0
    %2567 = vmatpush1.msra.mxu0 0.0
    %2568 = vmatprep.subr.mxu0 0.0
    %2569 = vmatpush1.msra.mxu0 0.0
    %2570 = vmatprep.subr.mxu0 0.0
    %2571 = vmatpush1.msra.mxu0 0.0
    %2572 = vmatprep.subr.mxu0 0.0
    %2573 = vmatpush1.msra.mxu0 0.0
    %2574 = vmatprep.subr.mxu0 0.0
    %2575 = vmatpush1.msra.mxu0 0.0
    %2576 = vmatprep.subr.mxu0 0.0
    %2577 = vmatpush1.msra.mxu0 0.0
    %2578 = vmatprep.subr.mxu0 0.0
    %2579 = vmatpush1.msra.mxu0 0.0
    %2580 = vmatprep.subr.mxu0 0.0
    %2581 = vmatpush1.msra.mxu0 0.0
    %2582 = vmatprep.subr.mxu0 0.0
    %2583 = vmatpush1.msra.mxu0 0.0
    %2584 = vmatprep.mubr.f32.mxu0 0.0
    %v2585 = vand.u32 %v1928, 4294901760
    %2586 = vmatmul.mubr.f32.gmra.mrb[0].mxu0 %v2585
    %v2587 = vpop.f32.mrb[0].mxu0
    %v2588 = vadd.f32 %v2501, %v2587
    %v2589 = vpop.f32.mrb[0].mxu0
    %2590 = vdwg.mxu0
    %v2591 = vmax.f32 %v2588, 0.0
    %v2592 = vld [vmem:[#allocation6 + $0x1d8] sm:$0xff]
    %v2593 = vld [vmem:[#allocation6 + $0x1e0] sm:$0xff]
    %v2594 = vld [vmem:[#allocation6 + $0x1e8] sm:$0xff]
    %v2595 = vld [vmem:[#allocation6 + $0x1f0] sm:$0xff]
    %v2596 = vld [vmem:[#allocation6 + $0x1f8] sm:$0xff]
    %v2597 = vld [vmem:[#allocation6 + $0x200] sm:$0xff]
    %v2598 = vld [vmem:[#allocation6 + $0x208] sm:$0xff]
    %v2599 = vld [vmem:[#allocation6 + $0x210] sm:$0xff]
    %v2600 = vld [vmem:[#allocation6 + $0x218] sm:$0xff]
    %v2601 = vld [vmem:[#allocation6 + $0x220] sm:$0xff]
    %v2602 = vld [vmem:[#allocation6 + $0x228] sm:$0xff]
    %v2603 = vld [vmem:[#allocation6 + $0x230] sm:$0xff]
    %v2604 = vld [vmem:[#allocation6 + $0x238] sm:$0xff]
    %v2605 = vld [vmem:[#allocation6 + $0x240] sm:$0xff]
    %v2606 = vld [vmem:[#allocation6 + $0x248] sm:$0xff]
    %v2607 = vld [vmem:[#allocation6 + $0x250] sm:$0xff]
    %v2608 = vld [vmem:[#allocation6 + $0x258] sm:$0x1]
    %2609 = vmatprep.subr.mxu0 0.0
    %v2610 = vand.u32 %v2592, 4294901760
    %2611 = vmatpush1.msra.mxu0 %v2610
    %2612 = vmatprep.subr.mxu0 0.0
    %v2613 = vand.u32 %v2593, 4294901760
    %2614 = vmatpush1.msra.mxu0 %v2613
    %2615 = vmatprep.subr.mxu0 0.0
    %v2616 = vand.u32 %v2594, 4294901760
    %2617 = vmatpush1.msra.mxu0 %v2616
    %2618 = vmatprep.subr.mxu0 0.0
    %v2619 = vand.u32 %v2595, 4294901760
    %2620 = vmatpush1.msra.mxu0 %v2619
    %2621 = vmatprep.subr.mxu0 0.0
    %v2622 = vand.u32 %v2596, 4294901760
    %2623 = vmatpush1.msra.mxu0 %v2622
    %2624 = vmatprep.subr.mxu0 0.0
    %v2625 = vand.u32 %v2597, 4294901760
    %2626 = vmatpush1.msra.mxu0 %v2625
    %2627 = vmatprep.subr.mxu0 0.0
    %v2628 = vand.u32 %v2598, 4294901760
    %2629 = vmatpush1.msra.mxu0 %v2628
    %2630 = vmatprep.subr.mxu0 0.0
    %v2631 = vand.u32 %v2599, 4294901760
    %2632 = vmatpush1.msra.mxu0 %v2631
    %2633 = vmatprep.subr.mxu0 0.0
    %v2634 = vand.u32 %v2600, 4294901760
    %2635 = vmatpush1.msra.mxu0 %v2634
    %2636 = vmatprep.subr.mxu0 0.0
    %v2637 = vand.u32 %v2601, 4294901760
    %2638 = vmatpush1.msra.mxu0 %v2637
    %2639 = vmatprep.subr.mxu0 0.0
    %v2640 = vand.u32 %v2602, 4294901760
    %2641 = vmatpush1.msra.mxu0 %v2640
    %2642 = vmatprep.subr.mxu0 0.0
    %v2643 = vand.u32 %v2603, 4294901760
    %2644 = vmatpush1.msra.mxu0 %v2643
    %2645 = vmatprep.subr.mxu0 0.0
    %v2646 = vand.u32 %v2604, 4294901760
    %2647 = vmatpush1.msra.mxu0 %v2646
    %2648 = vmatprep.subr.mxu0 0.0
    %v2649 = vand.u32 %v2605, 4294901760
    %2650 = vmatpush1.msra.mxu0 %v2649
    %2651 = vmatprep.subr.mxu0 0.0
    %v2652 = vand.u32 %v2606, 4294901760
    %2653 = vmatpush1.msra.mxu0 %v2652
    %2654 = vmatprep.subr.mxu0 0.0
    %v2655 = vand.u32 %v2607, 4294901760
    %2656 = vmatpush1.msra.mxu0 %v2655
    %2657 = vmatprep.subr.mxu0 0.0
    %2658 = vmatpush1.msra.mxu0 0.0
    %2659 = vmatprep.subr.mxu0 0.0
    %2660 = vmatpush1.msra.mxu0 0.0
    %2661 = vmatprep.subr.mxu0 0.0
    %2662 = vmatpush1.msra.mxu0 0.0
    %2663 = vmatprep.subr.mxu0 0.0
    %2664 = vmatpush1.msra.mxu0 0.0
    %2665 = vmatprep.subr.mxu0 0.0
    %2666 = vmatpush1.msra.mxu0 0.0
    %2667 = vmatprep.subr.mxu0 0.0
    %2668 = vmatpush1.msra.mxu0 0.0
    %2669 = vmatprep.subr.mxu0 0.0
    %2670 = vmatpush1.msra.mxu0 0.0
    %2671 = vmatprep.subr.mxu0 0.0
    %2672 = vmatpush1.msra.mxu0 0.0
    %2673 = vmatprep.subr.mxu0 0.0
    %2674 = vmatpush1.msra.mxu0 0.0
    %2675 = vmatprep.subr.mxu0 0.0
    %2676 = vmatpush1.msra.mxu0 0.0
    %2677 = vmatprep.subr.mxu0 0.0
    %2678 = vmatpush1.msra.mxu0 0.0
    %2679 = vmatprep.subr.mxu0 0.0
    %2680 = vmatpush1.msra.mxu0 0.0
    %2681 = vmatprep.subr.mxu0 0.0
    %2682 = vmatpush1.msra.mxu0 0.0
    %2683 = vmatprep.subr.mxu0 0.0
    %2684 = vmatpush1.msra.mxu0 0.0
    %2685 = vmatprep.subr.mxu0 0.0
    %2686 = vmatpush1.msra.mxu0 0.0
    %2687 = vmatprep.subr.mxu0 0.0
    %2688 = vmatpush1.msra.mxu0 0.0
    %2689 = vmatprep.mubr.f32.mxu0 0.0
    %v2690 = vand.u32 %v2591, 4294901760
    %v2691 = vsub.f32 %v2591, %v2690
    %v2692 = vand.u32 %v2691, 4294901760
    %v2693 = vsub.f32 %v2691, %v2692
    %v2694 = vand.u32 %v2693, 4294901760
    %2695 = vmatmul.mubr.f32.gmra.mrb[0].mxu0 %v2694
    %v2696 = vpop.f32.mrb[0].mxu0
    %v2697 = vadd.f32 0.0, %v2696
    %v2698 = vpop.f32.mrb[0].mxu0
    %2699 = vdwg.mxu0
    %2700 = vmatprep.subr.mxu0 0.0
    %v2701 = vand.u32 %v2592, 4294901760
    %v2702 = vsub.f32 %v2592, %v2701
    %v2703 = vand.u32 %v2702, 4294901760
    %v2704 = vsub.f32 %v2702, %v2703
    %v2705 = vand.u32 %v2704, 4294901760
    %2706 = vmatpush1.msra.mxu0 %v2705
    %2707 = vmatprep.subr.mxu0 0.0
    %v2708 = vand.u32 %v2593, 4294901760
    %v2709 = vsub.f32 %v2593, %v2708
    %v2710 = vand.u32 %v2709, 4294901760
    %v2711 = vsub.f32 %v2709, %v2710
    %v2712 = vand.u32 %v2711, 4294901760
    %2713 = vmatpush1.msra.mxu0 %v2712
    %2714 = vmatprep.subr.mxu0 0.0
    %v2715 = vand.u32 %v2594, 4294901760
    %v2716 = vsub.f32 %v2594, %v2715
    %v2717 = vand.u32 %v2716, 4294901760
    %v2718 = vsub.f32 %v2716, %v2717
    %v2719 = vand.u32 %v2718, 4294901760
    %2720 = vmatpush1.msra.mxu0 %v2719
    %2721 = vmatprep.subr.mxu0 0.0
    %v2722 = vand.u32 %v2595, 4294901760
    %v2723 = vsub.f32 %v2595, %v2722
    %v2724 = vand.u32 %v2723, 4294901760
    %v2725 = vsub.f32 %v2723, %v2724
    %v2726 = vand.u32 %v2725, 4294901760
    %2727 = vmatpush1.msra.mxu0 %v2726
    %2728 = vmatprep.subr.mxu0 0.0
    %v2729 = vand.u32 %v2596, 4294901760
    %v2730 = vsub.f32 %v2596, %v2729
    %v2731 = vand.u32 %v2730, 4294901760
    %v2732 = vsub.f32 %v2730, %v2731
    %v2733 = vand.u32 %v2732, 4294901760
    %2734 = vmatpush1.msra.mxu0 %v2733
    %2735 = vmatprep.subr.mxu0 0.0
    %v2736 = vand.u32 %v2597, 4294901760
    %v2737 = vsub.f32 %v2597, %v2736
    %v2738 = vand.u32 %v2737, 4294901760
    %v2739 = vsub.f32 %v2737, %v2738
    %v2740 = vand.u32 %v2739, 4294901760
    %2741 = vmatpush1.msra.mxu0 %v2740
    %2742 = vmatprep.subr.mxu0 0.0
    %v2743 = vand.u32 %v2598, 4294901760
    %v2744 = vsub.f32 %v2598, %v2743
    %v2745 = vand.u32 %v2744, 4294901760
    %v2746 = vsub.f32 %v2744, %v2745
    %v2747 = vand.u32 %v2746, 4294901760
    %2748 = vmatpush1.msra.mxu0 %v2747
    %2749 = vmatprep.subr.mxu0 0.0
    %v2750 = vand.u32 %v2599, 4294901760
    %v2751 = vsub.f32 %v2599, %v2750
    %v2752 = vand.u32 %v2751, 4294901760
    %v2753 = vsub.f32 %v2751, %v2752
    %v2754 = vand.u32 %v2753, 4294901760
    %2755 = vmatpush1.msra.mxu0 %v2754
    %2756 = vmatprep.subr.mxu0 0.0
    %v2757 = vand.u32 %v2600, 4294901760
    %v2758 = vsub.f32 %v2600, %v2757
    %v2759 = vand.u32 %v2758, 4294901760
    %v2760 = vsub.f32 %v2758, %v2759
    %v2761 = vand.u32 %v2760, 4294901760
    %2762 = vmatpush1.msra.mxu0 %v2761
    %2763 = vmatprep.subr.mxu0 0.0
    %v2764 = vand.u32 %v2601, 4294901760
    %v2765 = vsub.f32 %v2601, %v2764
    %v2766 = vand.u32 %v2765, 4294901760
    %v2767 = vsub.f32 %v2765, %v2766
    %v2768 = vand.u32 %v2767, 4294901760
    %2769 = vmatpush1.msra.mxu0 %v2768
    %2770 = vmatprep.subr.mxu0 0.0
    %v2771 = vand.u32 %v2602, 4294901760
    %v2772 = vsub.f32 %v2602, %v2771
    %v2773 = vand.u32 %v2772, 4294901760
    %v2774 = vsub.f32 %v2772, %v2773
    %v2775 = vand.u32 %v2774, 4294901760
    %2776 = vmatpush1.msra.mxu0 %v2775
    %2777 = vmatprep.subr.mxu0 0.0
    %v2778 = vand.u32 %v2603, 4294901760
    %v2779 = vsub.f32 %v2603, %v2778
    %v2780 = vand.u32 %v2779, 4294901760
    %v2781 = vsub.f32 %v2779, %v2780
    %v2782 = vand.u32 %v2781, 4294901760
    %2783 = vmatpush1.msra.mxu0 %v2782
    %2784 = vmatprep.subr.mxu0 0.0
    %v2785 = vand.u32 %v2604, 4294901760
    %v2786 = vsub.f32 %v2604, %v2785
    %v2787 = vand.u32 %v2786, 4294901760
    %v2788 = vsub.f32 %v2786, %v2787
    %v2789 = vand.u32 %v2788, 4294901760
    %2790 = vmatpush1.msra.mxu0 %v2789
    %2791 = vmatprep.subr.mxu0 0.0
    %v2792 = vand.u32 %v2605, 4294901760
    %v2793 = vsub.f32 %v2605, %v2792
    %v2794 = vand.u32 %v2793, 4294901760
    %v2795 = vsub.f32 %v2793, %v2794
    %v2796 = vand.u32 %v2795, 4294901760
    %2797 = vmatpush1.msra.mxu0 %v2796
    %2798 = vmatprep.subr.mxu0 0.0
    %v2799 = vand.u32 %v2606, 4294901760
    %v2800 = vsub.f32 %v2606, %v2799
    %v2801 = vand.u32 %v2800, 4294901760
    %v2802 = vsub.f32 %v2800, %v2801
    %v2803 = vand.u32 %v2802, 4294901760
    %2804 = vmatpush1.msra.mxu0 %v2803
    %2805 = vmatprep.subr.mxu0 0.0
    %v2806 = vand.u32 %v2607, 4294901760
    %v2807 = vsub.f32 %v2607, %v2806
    %v2808 = vand.u32 %v2807, 4294901760
    %v2809 = vsub.f32 %v2807, %v2808
    %v2810 = vand.u32 %v2809, 4294901760
    %2811 = vmatpush1.msra.mxu0 %v2810
    %2812 = vmatprep.subr.mxu0 0.0
    %2813 = vmatpush1.msra.mxu0 0.0
    %2814 = vmatprep.subr.mxu0 0.0
    %2815 = vmatpush1.msra.mxu0 0.0
    %2816 = vmatprep.subr.mxu0 0.0
    %2817 = vmatpush1.msra.mxu0 0.0
    %2818 = vmatprep.subr.mxu0 0.0
    %2819 = vmatpush1.msra.mxu0 0.0
    %2820 = vmatprep.subr.mxu0 0.0
    %2821 = vmatpush1.msra.mxu0 0.0
    %2822 = vmatprep.subr.mxu0 0.0
    %2823 = vmatpush1.msra.mxu0 0.0
    %2824 = vmatprep.subr.mxu0 0.0
    %2825 = vmatpush1.msra.mxu0 0.0
    %2826 = vmatprep.subr.mxu0 0.0
    %2827 = vmatpush1.msra.mxu0 0.0
    %2828 = vmatprep.subr.mxu0 0.0
    %2829 = vmatpush1.msra.mxu0 0.0
    %2830 = vmatprep.subr.mxu0 0.0
    %2831 = vmatpush1.msra.mxu0 0.0
    %2832 = vmatprep.subr.mxu0 0.0
    %2833 = vmatpush1.msra.mxu0 0.0
    %2834 = vmatprep.subr.mxu0 0.0
    %2835 = vmatpush1.msra.mxu0 0.0
    %2836 = vmatprep.subr.mxu0 0.0
    %2837 = vmatpush1.msra.mxu0 0.0
    %2838 = vmatprep.subr.mxu0 0.0
    %2839 = vmatpush1.msra.mxu0 0.0
    %2840 = vmatprep.subr.mxu0 0.0
    %2841 = vmatpush1.msra.mxu0 0.0
    %2842 = vmatprep.subr.mxu0 0.0
    %2843 = vmatpush1.msra.mxu0 0.0
    %2844 = vmatprep.mubr.f32.mxu0 0.0
    %v2845 = vand.u32 %v2591, 4294901760
    %2846 = vmatmul.mubr.f32.gmra.mrb[0].mxu0 %v2845
    %v2847 = vpop.f32.mrb[0].mxu0
    %v2848 = vadd.f32 %v2697, %v2847
    %v2849 = vpop.f32.mrb[0].mxu0
    %2850 = vdwg.mxu0
    %2851 = vmatprep.subr.mxu0 0.0
    %v2852 = vand.u32 %v2592, 4294901760
    %v2853 = vsub.f32 %v2592, %v2852
    %2854 = vmatpush1.msra.mxu0 %v2853
    %2855 = vmatprep.subr.mxu0 0.0
    %v2856 = vand.u32 %v2593, 4294901760
    %v2857 = vsub.f32 %v2593, %v2856
    %2858 = vmatpush1.msra.mxu0 %v2857
    %2859 = vmatprep.subr.mxu0 0.0
    %v2860 = vand.u32 %v2594, 4294901760
    %v2861 = vsub.f32 %v2594, %v2860
    %2862 = vmatpush1.msra.mxu0 %v2861
    %2863 = vmatprep.subr.mxu0 0.0
    %v2864 = vand.u32 %v2595, 4294901760
    %v2865 = vsub.f32 %v2595, %v2864
    %2866 = vmatpush1.msra.mxu0 %v2865
    %2867 = vmatprep.subr.mxu0 0.0
    %v2868 = vand.u32 %v2596, 4294901760
    %v2869 = vsub.f32 %v2596, %v2868
    %2870 = vmatpush1.msra.mxu0 %v2869
    %2871 = vmatprep.subr.mxu0 0.0
    %v2872 = vand.u32 %v2597, 4294901760
    %v2873 = vsub.f32 %v2597, %v2872
    %2874 = vmatpush1.msra.mxu0 %v2873
    %2875 = vmatprep.subr.mxu0 0.0
    %v2876 = vand.u32 %v2598, 4294901760
    %v2877 = vsub.f32 %v2598, %v2876
    %2878 = vmatpush1.msra.mxu0 %v2877
    %2879 = vmatprep.subr.mxu0 0.0
    %v2880 = vand.u32 %v2599, 4294901760
    %v2881 = vsub.f32 %v2599, %v2880
    %2882 = vmatpush1.msra.mxu0 %v2881
    %2883 = vmatprep.subr.mxu0 0.0
    %v2884 = vand.u32 %v2600, 4294901760
    %v2885 = vsub.f32 %v2600, %v2884
    %2886 = vmatpush1.msra.mxu0 %v2885
    %2887 = vmatprep.subr.mxu0 0.0
    %v2888 = vand.u32 %v2601, 4294901760
    %v2889 = vsub.f32 %v2601, %v2888
    %2890 = vmatpush1.msra.mxu0 %v2889
    %2891 = vmatprep.subr.mxu0 0.0
    %v2892 = vand.u32 %v2602, 4294901760
    %v2893 = vsub.f32 %v2602, %v2892
    %2894 = vmatpush1.msra.mxu0 %v2893
    %2895 = vmatprep.subr.mxu0 0.0
    %v2896 = vand.u32 %v2603, 4294901760
    %v2897 = vsub.f32 %v2603, %v2896
    %2898 = vmatpush1.msra.mxu0 %v2897
    %2899 = vmatprep.subr.mxu0 0.0
    %v2900 = vand.u32 %v2604, 4294901760
    %v2901 = vsub.f32 %v2604, %v2900
    %2902 = vmatpush1.msra.mxu0 %v2901
    %2903 = vmatprep.subr.mxu0 0.0
    %v2904 = vand.u32 %v2605, 4294901760
    %v2905 = vsub.f32 %v2605, %v2904
    %2906 = vmatpush1.msra.mxu0 %v2905
    %2907 = vmatprep.subr.mxu0 0.0
    %v2908 = vand.u32 %v2606, 4294901760
    %v2909 = vsub.f32 %v2606, %v2908
    %2910 = vmatpush1.msra.mxu0 %v2909
    %2911 = vmatprep.subr.mxu0 0.0
    %v2912 = vand.u32 %v2607, 4294901760
    %v2913 = vsub.f32 %v2607, %v2912
    %2914 = vmatpush1.msra.mxu0 %v2913
    %2915 = vmatprep.subr.mxu0 0.0
    %2916 = vmatpush1.msra.mxu0 0.0
    %2917 = vmatprep.subr.mxu0 0.0
    %2918 = vmatpush1.msra.mxu0 0.0
    %2919 = vmatprep.subr.mxu0 0.0
    %2920 = vmatpush1.msra.mxu0 0.0
    %2921 = vmatprep.subr.mxu0 0.0
    %2922 = vmatpush1.msra.mxu0 0.0
    %2923 = vmatprep.subr.mxu0 0.0
    %2924 = vmatpush1.msra.mxu0 0.0
    %2925 = vmatprep.subr.mxu0 0.0
    %2926 = vmatpush1.msra.mxu0 0.0
    %2927 = vmatprep.subr.mxu0 0.0
    %2928 = vmatpush1.msra.mxu0 0.0
    %2929 = vmatprep.subr.mxu0 0.0
    %2930 = vmatpush1.msra.mxu0 0.0
    %2931 = vmatprep.subr.mxu0 0.0
    %2932 = vmatpush1.msra.mxu0 0.0
    %2933 = vmatprep.subr.mxu0 0.0
    %2934 = vmatpush1.msra.mxu0 0.0
    %2935 = vmatprep.subr.mxu0 0.0
    %2936 = vmatpush1.msra.mxu0 0.0
    %2937 = vmatprep.subr.mxu0 0.0
    %2938 = vmatpush1.msra.mxu0 0.0
    %2939 = vmatprep.subr.mxu0 0.0
    %2940 = vmatpush1.msra.mxu0 0.0
    %2941 = vmatprep.subr.mxu0 0.0
    %2942 = vmatpush1.msra.mxu0 0.0
    %2943 = vmatprep.subr.mxu0 0.0
    %2944 = vmatpush1.msra.mxu0 0.0
    %2945 = vmatprep.subr.mxu0 0.0
    %2946 = vmatpush1.msra.mxu0 0.0
    %2947 = vmatprep.mubr.f32.mxu0 0.0
    %v2948 = vand.u32 %v2591, 4294901760
    %v2949 = vsub.f32 %v2591, %v2948
    %2950 = vmatmul.mubr.f32.gmra.mrb[0].mxu0 %v2949
    %v2951 = vpop.f32.mrb[0].mxu0
    %v2952 = vadd.f32 %v2848, %v2951
    %v2953 = vpop.f32.mrb[0].mxu0
    %2954 = vdwg.mxu0
    %2955 = vmatprep.subr.mxu0 0.0
    %v2956 = vand.u32 %v2592, 4294901760
    %2957 = vmatpush1.msra.mxu0 %v2956
    %2958 = vmatprep.subr.mxu0 0.0
    %v2959 = vand.u32 %v2593, 4294901760
    %2960 = vmatpush1.msra.mxu0 %v2959
    %2961 = vmatprep.subr.mxu0 0.0
    %v2962 = vand.u32 %v2594, 4294901760
    %2963 = vmatpush1.msra.mxu0 %v2962
    %2964 = vmatprep.subr.mxu0 0.0
    %v2965 = vand.u32 %v2595, 4294901760
    %2966 = vmatpush1.msra.mxu0 %v2965
    %2967 = vmatprep.subr.mxu0 0.0
    %v2968 = vand.u32 %v2596, 4294901760
    %2969 = vmatpush1.msra.mxu0 %v2968
    %2970 = vmatprep.subr.mxu0 0.0
    %v2971 = vand.u32 %v2597, 4294901760
    %2972 = vmatpush1.msra.mxu0 %v2971
    %2973 = vmatprep.subr.mxu0 0.0
    %v2974 = vand.u32 %v2598, 4294901760
    %2975 = vmatpush1.msra.mxu0 %v2974
    %2976 = vmatprep.subr.mxu0 0.0
    %v2977 = vand.u32 %v2599, 4294901760
    %2978 = vmatpush1.msra.mxu0 %v2977
    %2979 = vmatprep.subr.mxu0 0.0
    %v2980 = vand.u32 %v2600, 4294901760
    %2981 = vmatpush1.msra.mxu0 %v2980
    %2982 = vmatprep.subr.mxu0 0.0
    %v2983 = vand.u32 %v2601, 4294901760
    %2984 = vmatpush1.msra.mxu0 %v2983
    %2985 = vmatprep.subr.mxu0 0.0
    %v2986 = vand.u32 %v2602, 4294901760
    %2987 = vmatpush1.msra.mxu0 %v2986
    %2988 = vmatprep.subr.mxu0 0.0
    %v2989 = vand.u32 %v2603, 4294901760
    %2990 = vmatpush1.msra.mxu0 %v2989
    %2991 = vmatprep.subr.mxu0 0.0
    %v2992 = vand.u32 %v2604, 4294901760
    %2993 = vmatpush1.msra.mxu0 %v2992
    %2994 = vmatprep.subr.mxu0 0.0
    %v2995 = vand.u32 %v2605, 4294901760
    %2996 = vmatpush1.msra.mxu0 %v2995
    %2997 = vmatprep.subr.mxu0 0.0
    %v2998 = vand.u32 %v2606, 4294901760
    %2999 = vmatpush1.msra.mxu0 %v2998
    %3000 = vmatprep.subr.mxu0 0.0
    %v3001 = vand.u32 %v2607, 4294901760
    %3002 = vmatpush1.msra.mxu0 %v3001
    %3003 = vmatprep.subr.mxu0 0.0
    %3004 = vmatpush1.msra.mxu0 0.0
    %3005 = vmatprep.subr.mxu0 0.0
    %3006 = vmatpush1.msra.mxu0 0.0
    %3007 = vmatprep.subr.mxu0 0.0
    %3008 = vmatpush1.msra.mxu0 0.0
    %3009 = vmatprep.subr.mxu0 0.0
    %3010 = vmatpush1.msra.mxu0 0.0
    %3011 = vmatprep.subr.mxu0 0.0
    %3012 = vmatpush1.msra.mxu0 0.0
    %3013 = vmatprep.subr.mxu0 0.0
    %3014 = vmatpush1.msra.mxu0 0.0
    %3015 = vmatprep.subr.mxu0 0.0
    %3016 = vmatpush1.msra.mxu0 0.0
    %3017 = vmatprep.subr.mxu0 0.0
    %3018 = vmatpush1.msra.mxu0 0.0
    %3019 = vmatprep.subr.mxu0 0.0
    %3020 = vmatpush1.msra.mxu0 0.0
    %3021 = vmatprep.subr.mxu0 0.0
    %3022 = vmatpush1.msra.mxu0 0.0
    %3023 = vmatprep.subr.mxu0 0.0
    %3024 = vmatpush1.msra.mxu0 0.0
    %3025 = vmatprep.subr.mxu0 0.0
    %3026 = vmatpush1.msra.mxu0 0.0
    %3027 = vmatprep.subr.mxu0 0.0
    %3028 = vmatpush1.msra.mxu0 0.0
    %3029 = vmatprep.subr.mxu0 0.0
    %3030 = vmatpush1.msra.mxu0 0.0
    %3031 = vmatprep.subr.mxu0 0.0
    %3032 = vmatpush1.msra.mxu0 0.0
    %3033 = vmatprep.subr.mxu0 0.0
    %3034 = vmatpush1.msra.mxu0 0.0
    %3035 = vmatprep.mubr.f32.mxu0 0.0
    %v3036 = vand.u32 %v2591, 4294901760
    %v3037 = vsub.f32 %v2591, %v3036
    %v3038 = vand.u32 %v3037, 4294901760
    %3039 = vmatmul.mubr.f32.gmra.mrb[0].mxu0 %v3038
    %v3040 = vpop.f32.mrb[0].mxu0
    %v3041 = vadd.f32 %v2952, %v3040
    %v3042 = vpop.f32.mrb[0].mxu0
    %3043 = vdwg.mxu0
    %3044 = vmatprep.subr.mxu0 0.0
    %v3045 = vand.u32 %v2592, 4294901760
    %v3046 = vsub.f32 %v2592, %v3045
    %v3047 = vand.u32 %v3046, 4294901760
    %3048 = vmatpush1.msra.mxu0 %v3047
    %3049 = vmatprep.subr.mxu0 0.0
    %v3050 = vand.u32 %v2593, 4294901760
    %v3051 = vsub.f32 %v2593, %v3050
    %v3052 = vand.u32 %v3051, 4294901760
    %3053 = vmatpush1.msra.mxu0 %v3052
    %3054 = vmatprep.subr.mxu0 0.0
    %v3055 = vand.u32 %v2594, 4294901760
    %v3056 = vsub.f32 %v2594, %v3055
    %v3057 = vand.u32 %v3056, 4294901760
    %3058 = vmatpush1.msra.mxu0 %v3057
    %3059 = vmatprep.subr.mxu0 0.0
    %v3060 = vand.u32 %v2595, 4294901760
    %v3061 = vsub.f32 %v2595, %v3060
    %v3062 = vand.u32 %v3061, 4294901760
    %3063 = vmatpush1.msra.mxu0 %v3062
    %3064 = vmatprep.subr.mxu0 0.0
    %v3065 = vand.u32 %v2596, 4294901760
    %v3066 = vsub.f32 %v2596, %v3065
    %v3067 = vand.u32 %v3066, 4294901760
    %3068 = vmatpush1.msra.mxu0 %v3067
    %3069 = vmatprep.subr.mxu0 0.0
    %v3070 = vand.u32 %v2597, 4294901760
    %v3071 = vsub.f32 %v2597, %v3070
    %v3072 = vand.u32 %v3071, 4294901760
    %3073 = vmatpush1.msra.mxu0 %v3072
    %3074 = vmatprep.subr.mxu0 0.0
    %v3075 = vand.u32 %v2598, 4294901760
    %v3076 = vsub.f32 %v2598, %v3075
    %v3077 = vand.u32 %v3076, 4294901760
    %3078 = vmatpush1.msra.mxu0 %v3077
    %3079 = vmatprep.subr.mxu0 0.0
    %v3080 = vand.u32 %v2599, 4294901760
    %v3081 = vsub.f32 %v2599, %v3080
    %v3082 = vand.u32 %v3081, 4294901760
    %3083 = vmatpush1.msra.mxu0 %v3082
    %3084 = vmatprep.subr.mxu0 0.0
    %v3085 = vand.u32 %v2600, 4294901760
    %v3086 = vsub.f32 %v2600, %v3085
    %v3087 = vand.u32 %v3086, 4294901760
    %3088 = vmatpush1.msra.mxu0 %v3087
    %3089 = vmatprep.subr.mxu0 0.0
    %v3090 = vand.u32 %v2601, 4294901760
    %v3091 = vsub.f32 %v2601, %v3090
    %v3092 = vand.u32 %v3091, 4294901760
    %3093 = vmatpush1.msra.mxu0 %v3092
    %3094 = vmatprep.subr.mxu0 0.0
    %v3095 = vand.u32 %v2602, 4294901760
    %v3096 = vsub.f32 %v2602, %v3095
    %v3097 = vand.u32 %v3096, 4294901760
    %3098 = vmatpush1.msra.mxu0 %v3097
    %3099 = vmatprep.subr.mxu0 0.0
    %v3100 = vand.u32 %v2603, 4294901760
    %v3101 = vsub.f32 %v2603, %v3100
    %v3102 = vand.u32 %v3101, 4294901760
    %3103 = vmatpush1.msra.mxu0 %v3102
    %3104 = vmatprep.subr.mxu0 0.0
    %v3105 = vand.u32 %v2604, 4294901760
    %v3106 = vsub.f32 %v2604, %v3105
    %v3107 = vand.u32 %v3106, 4294901760
    %3108 = vmatpush1.msra.mxu0 %v3107
    %3109 = vmatprep.subr.mxu0 0.0
    %v3110 = vand.u32 %v2605, 4294901760
    %v3111 = vsub.f32 %v2605, %v3110
    %v3112 = vand.u32 %v3111, 4294901760
    %3113 = vmatpush1.msra.mxu0 %v3112
    %3114 = vmatprep.subr.mxu0 0.0
    %v3115 = vand.u32 %v2606, 4294901760
    %v3116 = vsub.f32 %v2606, %v3115
    %v3117 = vand.u32 %v3116, 4294901760
    %3118 = vmatpush1.msra.mxu0 %v3117
    %3119 = vmatprep.subr.mxu0 0.0
    %v3120 = vand.u32 %v2607, 4294901760
    %v3121 = vsub.f32 %v2607, %v3120
    %v3122 = vand.u32 %v3121, 4294901760
    %3123 = vmatpush1.msra.mxu0 %v3122
    %3124 = vmatprep.subr.mxu0 0.0
    %3125 = vmatpush1.msra.mxu0 0.0
    %3126 = vmatprep.subr.mxu0 0.0
    %3127 = vmatpush1.msra.mxu0 0.0
    %3128 = vmatprep.subr.mxu0 0.0
    %3129 = vmatpush1.msra.mxu0 0.0
    %3130 = vmatprep.subr.mxu0 0.0
    %3131 = vmatpush1.msra.mxu0 0.0
    %3132 = vmatprep.subr.mxu0 0.0
    %3133 = vmatpush1.msra.mxu0 0.0
    %3134 = vmatprep.subr.mxu0 0.0
    %3135 = vmatpush1.msra.mxu0 0.0
    %3136 = vmatprep.subr.mxu0 0.0
    %3137 = vmatpush1.msra.mxu0 0.0
    %3138 = vmatprep.subr.mxu0 0.0
    %3139 = vmatpush1.msra.mxu0 0.0
    %3140 = vmatprep.subr.mxu0 0.0
    %3141 = vmatpush1.msra.mxu0 0.0
    %3142 = vmatprep.subr.mxu0 0.0
    %3143 = vmatpush1.msra.mxu0 0.0
    %3144 = vmatprep.subr.mxu0 0.0
    %3145 = vmatpush1.msra.mxu0 0.0
    %3146 = vmatprep.subr.mxu0 0.0
    %3147 = vmatpush1.msra.mxu0 0.0
    %3148 = vmatprep.subr.mxu0 0.0
    %3149 = vmatpush1.msra.mxu0 0.0
    %3150 = vmatprep.subr.mxu0 0.0
    %3151 = vmatpush1.msra.mxu0 0.0
    %3152 = vmatprep.subr.mxu0 0.0
    %3153 = vmatpush1.msra.mxu0 0.0
    %3154 = vmatprep.subr.mxu0 0.0
    %3155 = vmatpush1.msra.mxu0 0.0
    %3156 = vmatprep.mubr.f32.mxu0 0.0
    %v3157 = vand.u32 %v2591, 4294901760
    %3158 = vmatmul.mubr.f32.gmra.mrb[0].mxu0 %v3157
    %v3159 = vpop.f32.mrb[0].mxu0
    %v3160 = vadd.f32 %v3041, %v3159
    %v3161 = vpop.f32.mrb[0].mxu0
    %3162 = vdwg.mxu0
    %3163 = vmatprep.subr.mxu0 0.0
    %v3164 = vand.u32 %v2592, 4294901760
    %3165 = vmatpush1.msra.mxu0 %v3164
    %3166 = vmatprep.subr.mxu0 0.0
    %v3167 = vand.u32 %v2593, 4294901760
    %3168 = vmatpush1.msra.mxu0 %v3167
    %3169 = vmatprep.subr.mxu0 0.0
    %v3170 = vand.u32 %v2594, 4294901760
    %3171 = vmatpush1.msra.mxu0 %v3170
    %3172 = vmatprep.subr.mxu0 0.0
    %v3173 = vand.u32 %v2595, 4294901760
    %3174 = vmatpush1.msra.mxu0 %v3173
    %3175 = vmatprep.subr.mxu0 0.0
    %v3176 = vand.u32 %v2596, 4294901760
    %3177 = vmatpush1.msra.mxu0 %v3176
    %3178 = vmatprep.subr.mxu0 0.0
    %v3179 = vand.u32 %v2597, 4294901760
    %3180 = vmatpush1.msra.mxu0 %v3179
    %3181 = vmatprep.subr.mxu0 0.0
    %v3182 = vand.u32 %v2598, 4294901760
    %3183 = vmatpush1.msra.mxu0 %v3182
    %3184 = vmatprep.subr.mxu0 0.0
    %v3185 = vand.u32 %v2599, 4294901760
    %3186 = vmatpush1.msra.mxu0 %v3185
    %3187 = vmatprep.subr.mxu0 0.0
    %v3188 = vand.u32 %v2600, 4294901760
    %3189 = vmatpush1.msra.mxu0 %v3188
    %3190 = vmatprep.subr.mxu0 0.0
    %v3191 = vand.u32 %v2601, 4294901760
    %3192 = vmatpush1.msra.mxu0 %v3191
    %3193 = vmatprep.subr.mxu0 0.0
    %v3194 = vand.u32 %v2602, 4294901760
    %3195 = vmatpush1.msra.mxu0 %v3194
    %3196 = vmatprep.subr.mxu0 0.0
    %v3197 = vand.u32 %v2603, 4294901760
    %3198 = vmatpush1.msra.mxu0 %v3197
    %3199 = vmatprep.subr.mxu0 0.0
    %v3200 = vand.u32 %v2604, 4294901760
    %3201 = vmatpush1.msra.mxu0 %v3200
    %3202 = vmatprep.subr.mxu0 0.0
    %v3203 = vand.u32 %v2605, 4294901760
    %3204 = vmatpush1.msra.mxu0 %v3203
    %3205 = vmatprep.subr.mxu0 0.0
    %v3206 = vand.u32 %v2606, 4294901760
    %3207 = vmatpush1.msra.mxu0 %v3206
    %3208 = vmatprep.subr.mxu0 0.0
    %v3209 = vand.u32 %v2607, 4294901760
    %3210 = vmatpush1.msra.mxu0 %v3209
    %3211 = vmatprep.subr.mxu0 0.0
    %3212 = vmatpush1.msra.mxu0 0.0
    %3213 = vmatprep.subr.mxu0 0.0
    %3214 = vmatpush1.msra.mxu0 0.0
    %3215 = vmatprep.subr.mxu0 0.0
    %3216 = vmatpush1.msra.mxu0 0.0
    %3217 = vmatprep.subr.mxu0 0.0
    %3218 = vmatpush1.msra.mxu0 0.0
    %3219 = vmatprep.subr.mxu0 0.0
    %3220 = vmatpush1.msra.mxu0 0.0
    %3221 = vmatprep.subr.mxu0 0.0
    %3222 = vmatpush1.msra.mxu0 0.0
    %3223 = vmatprep.subr.mxu0 0.0
    %3224 = vmatpush1.msra.mxu0 0.0
    %3225 = vmatprep.subr.mxu0 0.0
    %3226 = vmatpush1.msra.mxu0 0.0
    %3227 = vmatprep.subr.mxu0 0.0
    %3228 = vmatpush1.msra.mxu0 0.0
    %3229 = vmatprep.subr.mxu0 0.0
    %3230 = vmatpush1.msra.mxu0 0.0
    %3231 = vmatprep.subr.mxu0 0.0
    %3232 = vmatpush1.msra.mxu0 0.0
    %3233 = vmatprep.subr.mxu0 0.0
    %3234 = vmatpush1.msra.mxu0 0.0
    %3235 = vmatprep.subr.mxu0 0.0
    %3236 = vmatpush1.msra.mxu0 0.0
    %3237 = vmatprep.subr.mxu0 0.0
    %3238 = vmatpush1.msra.mxu0 0.0
    %3239 = vmatprep.subr.mxu0 0.0
    %3240 = vmatpush1.msra.mxu0 0.0
    %3241 = vmatprep.subr.mxu0 0.0
    %3242 = vmatpush1.msra.mxu0 0.0
    %3243 = vmatprep.mubr.f32.mxu0 0.0
    %v3244 = vand.u32 %v2591, 4294901760
    %3245 = vmatmul.mubr.f32.gmra.mrb[0].mxu0 %v3244
    %v3246 = vpop.f32.mrb[0].mxu0
    %v3247 = vadd.f32 %v3160, %v3246
    %v3248 = vpop.f32.mrb[0].mxu0
    %3249 = vdwg.mxu0
    %v3250 = vlaneseq
    %v3251 = vshrl.u32 %v3250, 7
    %v3252 = vsub.s32 0, %v3251
    %v3253 = vrot.slane %v2608, %v3252
    %v3254 = vadd.f32 %v3247, %v3253
    %vm3255 = vcmask 31744
    %3256 = vst.msk [vmem:[%s3] sm:$0xff] %vm3255, %v3254
    // Predicated region
    $region26: #{tpu_custom_call.1} parent=1 // pred_check
      _
    $region27: #{tpu_custom_call.1} parent=1 // pred_check_branch
      %3258 = sbr.rel (0) target = $region29
    $region28: #{tpu_custom_call.1} parent=1 // pred_region
      _
    $region29: #{tpu_custom_call.1} parent=1 // pred_fallthru
      _
    // Predicated region
    $region30: #{tpu_custom_call.1} parent=1 // pred_check
      _
    $region31: #{tpu_custom_call.1} parent=1 // pred_check_branch
      %3260 = sbr.rel (0) target = $region33
    $region32: #{tpu_custom_call.1} parent=1 // pred_region
      _
    $region33: #{tpu_custom_call.1} parent=1 // pred_fallthru
      _
    %3261 = vsyncpa [#allocation3], 1
    %3262 = vsyncpa [#allocation5], 1

</llo_original>
